<compile_context>
chip_gen: v7x
topology: tpu7x:2x2x1
jax: 0.10.0
libtpu: 0.0.40
codegen_flags: <defaults>
</compile_context>

<pallas_src>
import functools

import jax
import jax.numpy as jnp
from jax.experimental import pallas as pl
from jax.experimental.pallas import tpu as pltpu

EPS = 1e-5


# ---------------------------------------------------------------------------
# Kernel: 6 chained matmuls, bias adds, ReLUs.  BN already folded into weights.
# ---------------------------------------------------------------------------
def ffnn_kernel(
    x_ref,
    w1, b1, w2, b2, w3, b3, w4, b4, w5, b5, w6, b6,
    o_ref,
):
    def layer(h, w_ref, b_ref):
        y = jnp.dot(h, w_ref[...], preferred_element_type=jnp.float32) + b_ref[...]
        return jnp.maximum(y, 0.0).astype(jnp.bfloat16)

    h = layer(x_ref[...], w1, b1)        # fc1 -> relu   (BN1 folded into fc2)
    h = layer(h, w2, b2)                 # fc2' -> relu  (BN2 folded into fc3)
    h = layer(h, w3, b3)                 # fc3' -> relu  (BN3 folded into fc4)
    h = layer(h, w4, b4)                 # fc4' -> relu
    h = layer(h, w5, b5)                 # fc5 -> relu   (N padded to 128)
    # fc6 (no activation), N padded to 128 lanes; wrapper slices real columns.
    o_ref[...] = jnp.dot(h, w6[...], preferred_element_type=jnp.float32) + b6[...]


# ---------------------------------------------------------------------------
# Parameter preparation: BN folding, lane-dense padding, bf16 weight cast.
# ---------------------------------------------------------------------------
def _round_up(n, m):
    return (n + m - 1) // m * m


def prepare_params(params):
    """Fold eval-mode BNs into the next Linear, pad to lane-dense shapes, cast
    weights to bf16 (biases stay f32).  Returns (flat prepared tuple, k_pad, out_pad)."""
    (w1, b1, w2, b2, w3, b3, w4, b4, w5, b5, w6, b6,
     g1, be1, m1, v1, g2, be2, m2, v2, g3, be3, m3, v3) = params

    def fold(w_next, b_next, g, be, m, v):
        # BN(h) @ W + b  ==  h @ (diag(s) W) + ((be - m*s) @ W + b),  s = g*rsqrt(v+eps)
        s = g * jax.lax.rsqrt(v + EPS)                     # (1, C)
        w_f = w_next * s.reshape(-1, 1)                    # scale rows
        b_f = (be - m * s) @ w_next + b_next               # (1, N)
        return w_f, b_f

    w2f, b2f = fold(w2, b2, g1, be1, m1, v1)
    w3f, b3f = fold(w3, b3, g2, be2, m2, v2)
    w4f, b4f = fold(w4, b4, g3, be3, m3, v3)

    # Pad fc1 input dim (K) to a multiple of 128 with zero rows.
    in_size = w1.shape[0]
    k_pad = _round_up(in_size, 128)
    w1p = jnp.zeros((k_pad, w1.shape[1]), w1.dtype).at[:in_size, :].set(w1)

    # Pad fc5 output dim (64 -> 128) with zero columns; padded activations are
    # relu(0 + 0) = 0 and multiply zero rows of fc6, so results are exact.
    n5 = w5.shape[1]
    n5p = _round_up(n5, 128)
    w5p = jnp.zeros((w5.shape[0], n5p), w5.dtype).at[:, :n5].set(w5)
    b5p = jnp.zeros((1, n5p), b5.dtype).at[:, :n5].set(b5)

    # Pad fc6: rows to n5p (zeros), columns to a full 128-lane output slab.
    out_size = w6.shape[1]
    out_pad = _round_up(out_size, 128)
    w6p = jnp.zeros((n5p, out_pad), w6.dtype).at[:n5, :out_size].set(w6)
    b6p = jnp.zeros((1, out_pad), b6.dtype).at[:, :out_size].set(b6)

    weights = [w1p, w2f, w3f, w4f, w5p, w6p]
    biases = [b1, b2f, b3f, b4f, b5p, b6p]

    weights = [w.astype(jnp.bfloat16) for w in weights]
    biases = [b.astype(jnp.float32) for b in biases]

    flat = []
    for w, b in zip(weights, biases):
        flat.extend([w, b])
    return tuple(flat), k_pad, out_pad


# ---------------------------------------------------------------------------
# Wrapper
# ---------------------------------------------------------------------------
def ffnn_forward(x, params, *, batch_tile=128):
    """x: [B, input_size] f32.  params: flat tuple (see make_params)."""
    B, in_size = x.shape
    out_size = params[11].shape[1]  # b6 is (1, output_size)

    prepared, k_pad, out_pad = prepare_params(params)

    bt = min(batch_tile, B)
    assert B % bt == 0, f"batch {B} must be divisible by batch_tile {bt}"

    # Lane-dense, bf16 input block (zero-padded K columns hit zero weight rows).
    xp = jnp.zeros((B, k_pad), jnp.float32).at[:, :in_size].set(x).astype(jnp.bfloat16)

    # Full-array (untiled) spec for every weight / bias.
    def full_spec(arr):
        return pl.BlockSpec(arr.shape, lambda i: (0, 0))

    in_specs = [pl.BlockSpec((bt, k_pad), lambda i: (i, 0))]
    in_specs += [full_spec(p) for p in prepared]

    # Advisory cost estimate for XLA's scheduler.
    dims = [k_pad, 1024, 512, 256, 128]
    dims.append(prepared[8].shape[1])   # padded fc5 N
    dims.append(out_pad)                # padded fc6 N
    flops = 2 * B * sum(a * b for a, b in zip(dims[:-1], dims[1:]))
    param_bytes = sum(int(p.size) * p.dtype.itemsize for p in prepared)
    bytes_accessed = int(xp.size) * 2 + param_bytes + B * out_pad * 4
    cost = pl.CostEstimate(flops=flops, transcendentals=0,
                           bytes_accessed=bytes_accessed)

    y_pad = pl.pallas_call(
        ffnn_kernel,
        out_shape=jax.ShapeDtypeStruct((B, out_pad), jnp.float32),
        grid_spec=pltpu.PrefetchScalarGridSpec(
            num_scalar_prefetch=0,
            grid=(B // bt,),
            in_specs=in_specs,
            out_specs=pl.BlockSpec((bt, out_pad), lambda i: (i, 0)),
        ),
        compiler_params=pltpu.CompilerParams(
            dimension_semantics=("parallel",),
            vmem_limit_bytes=32 * 1024 * 1024,
        ),
        cost_estimate=cost,
    )(xp, *prepared)

    return y_pad[:, :out_size]


# ---------------------------------------------------------------------------
# Synthetic parameters + references
# ---------------------------------------------------------------------------
def make_params(key, input_size, output_size):
    """Deterministic synthetic parameters (shapes from FFNN.__init__)."""
    sizes = [input_size, 1024, 512, 256, 128, 64, output_size]
    keys = jax.random.split(key, 32)
    k = iter(keys)

    weights, biases = [], []
    for fan_in, fan_out in zip(sizes[:-1], sizes[1:]):
        bound = 1.0 / jnp.sqrt(fan_in)
        w = jax.random.uniform(next(k), (fan_in, fan_out), jnp.float32, -bound, bound)
        b = jax.random.uniform(next(k), (1, fan_out), jnp.float32, -bound, bound)
        weights.append(w)
        biases.append(b)

    bn_params = []
    for c in (1024, 512, 256):
        gamma = 1.0 + 0.1 * jax.random.normal(next(k), (1, c), jnp.float32)
        beta = 0.1 * jax.random.normal(next(k), (1, c), jnp.float32)
        rmean = 0.1 * jax.random.normal(next(k), (1, c), jnp.float32)
        rvar = jnp.abs(1.0 + 0.1 * jax.random.normal(next(k), (1, c), jnp.float32))
        bn_params.extend([gamma, beta, rmean, rvar])

    flat = []
    for w, b in zip(weights, biases):
        flat.extend([w, b])
    flat.extend(bn_params)
    return tuple(flat)


def ffnn_reference(x, params):
    """Full-precision f32 reference with explicit (unfolded) eval-mode BN."""
    (w1, b1, w2, b2, w3, b3, w4, b4, w5, b5, w6, b6,
     g1, be1, m1, v1, g2, be2, m2, v2, g3, be3, m3, v3) = params

    def bn(h, g, be, m, v):
        return (h - m) * jax.lax.rsqrt(v + EPS) * g + be

    h = jnp.maximum(x @ w1 + b1, 0.0)
    h = bn(h, g1, be1, m1, v1)
    h = jnp.maximum(h @ w2 + b2, 0.0)
    h = bn(h, g2, be2, m2, v2)
    h = jnp.maximum(h @ w3 + b3, 0.0)
    h = bn(h, g3, be3, m3, v3)
    h = jnp.maximum(h @ w4 + b4, 0.0)
    h = jnp.maximum(h @ w5 + b5, 0.0)
    return h @ w6 + b6


def ffnn_reference_prepared(x, params, out_size):
    """Plain-jnp mirror of the kernel math on the prepared (folded/padded/bf16)
    params — isolates kernel correctness from BN-fold / bf16 quantization."""
    prepared, k_pad, out_pad = prepare_params(params)
    B, in_size = x.shape
    h = jnp.zeros((B, k_pad), jnp.float32).at[:, :in_size].set(x).astype(jnp.bfloat16)
    (w1, b1, w2, b2, w3, b3, w4, b4, w5, b5, w6, b6) = prepared
    for w, b in ((w1, b1), (w2, b2), (w3, b3), (w4, b4), (w5, b5)):
        h = jnp.dot(h, w, preferred_element_type=jnp.float32) + b
        h = jnp.maximum(h, 0.0).astype(jnp.bfloat16)
    y = jnp.dot(h, w6, preferred_element_type=jnp.float32) + b6
    return y[:, :out_size]


if __name__ == "__main__":
    input_size = 32
    output_size = 8
    batch = 256            # 2 grid steps of 128 -> both TCs used on v7x

    key = jax.random.PRNGKey(0)
    kx, kp = jax.random.split(key)
    x = jax.random.normal(kx, (batch, input_size), jnp.float32)
    params = make_params(kp, input_size, output_size)

    fwd = jax.jit(functools.partial(ffnn_forward, batch_tile=128))
    y = fwd(x, params)
    y = jax.block_until_ready(y)
    assert y.shape == (batch, output_size)

    # Tight check: kernel vs. same-precision (folded/padded/bf16) jnp reference.
    y_prep = ffnn_reference_prepared(x, params, output_size)
    assert jnp.allclose(y, y_prep, atol=2e-3, rtol=2e-3), \
        "mismatch vs. same-precision reference"

    # Loose check: kernel vs. full-f32, unfolded reference (bf16 weight rounding).
    y_ref = ffnn_reference(x, params)
    assert jnp.allclose(y, y_ref, atol=3e-2, rtol=3e-2), \
        "mismatch vs. f32 reference"

    print("KERNEL_OK")
</pallas_src>

<mosaic_0001>
module attributes {stable_mosaic.version = 11 : i64} {
  func.func @ffnn_kernel(%arg0: i32, %arg1: memref<128x128xbf16, #tpu.memory_space<vmem>>, %arg2: memref<128x1024xbf16, #tpu.memory_space<vmem>>, %arg3: memref<1x1024xf32, #tpu.memory_space<vmem>>, %arg4: memref<1024x512xbf16, #tpu.memory_space<vmem>>, %arg5: memref<1x512xf32, #tpu.memory_space<vmem>>, %arg6: memref<512x256xbf16, #tpu.memory_space<vmem>>, %arg7: memref<1x256xf32, #tpu.memory_space<vmem>>, %arg8: memref<256x128xbf16, #tpu.memory_space<vmem>>, %arg9: memref<1x128xf32, #tpu.memory_space<vmem>>, %arg10: memref<128x128xbf16, #tpu.memory_space<vmem>>, %arg11: memref<1x128xf32, #tpu.memory_space<vmem>>, %arg12: memref<128x128xbf16, #tpu.memory_space<vmem>>, %arg13: memref<1x128xf32, #tpu.memory_space<vmem>>, %arg14: memref<128x128xf32, #tpu.memory_space<vmem>>) attributes {dimension_semantics = [#tpu.dimension_semantics<parallel>], iteration_bounds = array<i64: 2>, scalar_prefetch = 0 : i64, scratch_operands = 0 : i64, tpu.core_type = #tpu.core_type<tc>, window_params = [{transform_indices = @transform_0, window_bounds = array<i64: 128, 128>}, {pipeline_mode = #tpu.pipeline_mode<synchronous>, transform_indices = @transform_1, window_bounds = array<i64: 128, 1024>}, {pipeline_mode = #tpu.pipeline_mode<synchronous>, transform_indices = @transform_2, window_bounds = array<i64: 1, 1024>}, {pipeline_mode = #tpu.pipeline_mode<synchronous>, transform_indices = @transform_3, window_bounds = array<i64: 1024, 512>}, {pipeline_mode = #tpu.pipeline_mode<synchronous>, transform_indices = @transform_4, window_bounds = array<i64: 1, 512>}, {pipeline_mode = #tpu.pipeline_mode<synchronous>, transform_indices = @transform_5, window_bounds = array<i64: 512, 256>}, {pipeline_mode = #tpu.pipeline_mode<synchronous>, transform_indices = @transform_6, window_bounds = array<i64: 1, 256>}, {pipeline_mode = #tpu.pipeline_mode<synchronous>, transform_indices = @transform_7, window_bounds = array<i64: 256, 128>}, {pipeline_mode = #tpu.pipeline_mode<synchronous>, transform_indices = @transform_8, window_bounds = array<i64: 1, 128>}, {pipeline_mode = #tpu.pipeline_mode<synchronous>, transform_indices = @transform_9, window_bounds = array<i64: 128, 128>}, {pipeline_mode = #tpu.pipeline_mode<synchronous>, transform_indices = @transform_10, window_bounds = array<i64: 1, 128>}, {pipeline_mode = #tpu.pipeline_mode<synchronous>, transform_indices = @transform_11, window_bounds = array<i64: 128, 128>}, {pipeline_mode = #tpu.pipeline_mode<synchronous>, transform_indices = @transform_12, window_bounds = array<i64: 1, 128>}, {transform_indices = @transform_13, window_bounds = array<i64: 128, 128>}]} {
    %c0 = arith.constant 0 : index
    %c0_0 = arith.constant 0 : index
    %0 = vector.load %arg1[%c0, %c0_0] : memref<128x128xbf16, #tpu.memory_space<vmem>>, vector<128x128xbf16>
    %c0_1 = arith.constant 0 : index
    %c0_2 = arith.constant 0 : index
    %1 = vector.load %arg2[%c0_1, %c0_2] : memref<128x1024xbf16, #tpu.memory_space<vmem>>, vector<128x1024xbf16>
    %cst = arith.constant dense<0.000000e+00> : vector<128x1024xf32>
    %2 = tpu.matmul %0, %1, %cst {dimension_numbers = #tpu.dot_dimension_numbers<[1], [0], [0], [1], [0, 0, 1, 1], [], []>} : vector<128x128xbf16>, vector<128x1024xbf16>, vector<128x1024xf32> -> vector<128x1024xf32>
    %c0_3 = arith.constant 0 : index
    %c0_4 = arith.constant 0 : index
    %3 = vector.load %arg3[%c0_3, %c0_4] : memref<1x1024xf32, #tpu.memory_space<vmem>>, vector<1x1024xf32>
    %4 = vector.broadcast %3 : vector<1x1024xf32> to vector<128x1024xf32>
    %5 = arith.addf %2, %4 : vector<128x1024xf32>
    %cst_5 = arith.constant 0.000000e+00 : f32
    %6 = vector.broadcast %cst_5 : f32 to vector<128x1024xf32>
    %7 = arith.maximumf %5, %6 : vector<128x1024xf32>
    %8 = arith.truncf %7 : vector<128x1024xf32> to vector<128x1024xbf16>
    %c0_6 = arith.constant 0 : index
    %c0_7 = arith.constant 0 : index
    %9 = vector.load %arg4[%c0_6, %c0_7] : memref<1024x512xbf16, #tpu.memory_space<vmem>>, vector<1024x512xbf16>
    %cst_8 = arith.constant dense<0.000000e+00> : vector<128x512xf32>
    %10 = tpu.matmul %8, %9, %cst_8 {dimension_numbers = #tpu.dot_dimension_numbers<[1], [0], [0], [1], [0, 0, 1, 1], [], []>} : vector<128x1024xbf16>, vector<1024x512xbf16>, vector<128x512xf32> -> vector<128x512xf32>
    %c0_9 = arith.constant 0 : index
    %c0_10 = arith.constant 0 : index
    %11 = vector.load %arg5[%c0_9, %c0_10] : memref<1x512xf32, #tpu.memory_space<vmem>>, vector<1x512xf32>
    %12 = vector.broadcast %11 : vector<1x512xf32> to vector<128x512xf32>
    %13 = arith.addf %10, %12 : vector<128x512xf32>
    %cst_11 = arith.constant 0.000000e+00 : f32
    %14 = vector.broadcast %cst_11 : f32 to vector<128x512xf32>
    %15 = arith.maximumf %13, %14 : vector<128x512xf32>
    %16 = arith.truncf %15 : vector<128x512xf32> to vector<128x512xbf16>
    %c0_12 = arith.constant 0 : index
    %c0_13 = arith.constant 0 : index
    %17 = vector.load %arg6[%c0_12, %c0_13] : memref<512x256xbf16, #tpu.memory_space<vmem>>, vector<512x256xbf16>
    %cst_14 = arith.constant dense<0.000000e+00> : vector<128x256xf32>
    %18 = tpu.matmul %16, %17, %cst_14 {dimension_numbers = #tpu.dot_dimension_numbers<[1], [0], [0], [1], [0, 0, 1, 1], [], []>} : vector<128x512xbf16>, vector<512x256xbf16>, vector<128x256xf32> -> vector<128x256xf32>
    %c0_15 = arith.constant 0 : index
    %c0_16 = arith.constant 0 : index
    %19 = vector.load %arg7[%c0_15, %c0_16] : memref<1x256xf32, #tpu.memory_space<vmem>>, vector<1x256xf32>
    %20 = vector.broadcast %19 : vector<1x256xf32> to vector<128x256xf32>
    %21 = arith.addf %18, %20 : vector<128x256xf32>
    %cst_17 = arith.constant 0.000000e+00 : f32
    %22 = vector.broadcast %cst_17 : f32 to vector<128x256xf32>
    %23 = arith.maximumf %21, %22 : vector<128x256xf32>
    %24 = arith.truncf %23 : vector<128x256xf32> to vector<128x256xbf16>
    %c0_18 = arith.constant 0 : index
    %c0_19 = arith.constant 0 : index
    %25 = vector.load %arg8[%c0_18, %c0_19] : memref<256x128xbf16, #tpu.memory_space<vmem>>, vector<256x128xbf16>
    %cst_20 = arith.constant dense<0.000000e+00> : vector<128x128xf32>
    %26 = tpu.matmul %24, %25, %cst_20 {dimension_numbers = #tpu.dot_dimension_numbers<[1], [0], [0], [1], [0, 0, 1, 1], [], []>} : vector<128x256xbf16>, vector<256x128xbf16>, vector<128x128xf32> -> vector<128x128xf32>
    %c0_21 = arith.constant 0 : index
    %c0_22 = arith.constant 0 : index
    %27 = vector.load %arg9[%c0_21, %c0_22] : memref<1x128xf32, #tpu.memory_space<vmem>>, vector<1x128xf32>
    %28 = vector.broadcast %27 : vector<1x128xf32> to vector<128x128xf32>
    %29 = arith.addf %26, %28 : vector<128x128xf32>
    %cst_23 = arith.constant 0.000000e+00 : f32
    %30 = vector.broadcast %cst_23 : f32 to vector<128x128xf32>
    %31 = arith.maximumf %29, %30 : vector<128x128xf32>
    %32 = arith.truncf %31 : vector<128x128xf32> to vector<128x128xbf16>
    %c0_24 = arith.constant 0 : index
    %c0_25 = arith.constant 0 : index
    %33 = vector.load %arg10[%c0_24, %c0_25] : memref<128x128xbf16, #tpu.memory_space<vmem>>, vector<128x128xbf16>
    %cst_26 = arith.constant dense<0.000000e+00> : vector<128x128xf32>
    %34 = tpu.matmul %32, %33, %cst_26 {dimension_numbers = #tpu.dot_dimension_numbers<[1], [0], [0], [1], [0, 0, 1, 1], [], []>} : vector<128x128xbf16>, vector<128x128xbf16>, vector<128x128xf32> -> vector<128x128xf32>
    %c0_27 = arith.constant 0 : index
    %c0_28 = arith.constant 0 : index
    %35 = vector.load %arg11[%c0_27, %c0_28] : memref<1x128xf32, #tpu.memory_space<vmem>>, vector<1x128xf32>
    %36 = vector.broadcast %35 : vector<1x128xf32> to vector<128x128xf32>
    %37 = arith.addf %34, %36 : vector<128x128xf32>
    %cst_29 = arith.constant 0.000000e+00 : f32
    %38 = vector.broadcast %cst_29 : f32 to vector<128x128xf32>
    %39 = arith.maximumf %37, %38 : vector<128x128xf32>
    %40 = arith.truncf %39 : vector<128x128xf32> to vector<128x128xbf16>
    %c0_30 = arith.constant 0 : index
    %c0_31 = arith.constant 0 : index
    %41 = vector.load %arg12[%c0_30, %c0_31] : memref<128x128xbf16, #tpu.memory_space<vmem>>, vector<128x128xbf16>
    %cst_32 = arith.constant dense<0.000000e+00> : vector<128x128xf32>
    %42 = tpu.matmul %40, %41, %cst_32 {dimension_numbers = #tpu.dot_dimension_numbers<[1], [0], [0], [1], [0, 0, 1, 1], [], []>} : vector<128x128xbf16>, vector<128x128xbf16>, vector<128x128xf32> -> vector<128x128xf32>
    %c0_33 = arith.constant 0 : index
    %c0_34 = arith.constant 0 : index
    %43 = vector.load %arg13[%c0_33, %c0_34] : memref<1x128xf32, #tpu.memory_space<vmem>>, vector<1x128xf32>
    %44 = vector.broadcast %43 : vector<1x128xf32> to vector<128x128xf32>
    %45 = arith.addf %42, %44 : vector<128x128xf32>
    %c0_35 = arith.constant 0 : index
    %c0_36 = arith.constant 0 : index
    %46 = vector.load %arg14[%c0_35, %c0_36] : memref<128x128xf32, #tpu.memory_space<vmem>>, vector<128x128xf32>
    tpu.vector_store %arg14[%c0_35, %c0_36], %45 {strides = array<i32>} : memref<128x128xf32, #tpu.memory_space<vmem>>, vector<128x128xf32>,
    return
  }
  func.func @transform_0(%arg0: i32) -> (i32, i32) {
    %c0_i32 = arith.constant 0 : i32
    %c0_i32_0 = arith.constant 0 : i32
    return %arg0, %c0_i32 : i32, i32
  }
  func.func @transform_1(%arg0: i32) -> (i32, i32) {
    %c0_i32 = arith.constant 0 : i32
    %c0_i32_0 = arith.constant 0 : i32
    %c0_i32_1 = arith.constant 0 : i32
    return %c0_i32, %c0_i32_0 : i32, i32
  }
  func.func @transform_2(%arg0: i32) -> (i32, i32) {
    %c0_i32 = arith.constant 0 : i32
    %c0_i32_0 = arith.constant 0 : i32
    %c0_i32_1 = arith.constant 0 : i32
    return %c0_i32, %c0_i32_0 : i32, i32
  }
  func.func @transform_3(%arg0: i32) -> (i32, i32) {
    %c0_i32 = arith.constant 0 : i32
    %c0_i32_0 = arith.constant 0 : i32
    %c0_i32_1 = arith.constant 0 : i32
    return %c0_i32, %c0_i32_0 : i32, i32
  }
  func.func @transform_4(%arg0: i32) -> (i32, i32) {
    %c0_i32 = arith.constant 0 : i32
    %c0_i32_0 = arith.constant 0 : i32
    %c0_i32_1 = arith.constant 0 : i32
    return %c0_i32, %c0_i32_0 : i32, i32
  }
  func.func @transform_5(%arg0: i32) -> (i32, i32) {
    %c0_i32 = arith.constant 0 : i32
    %c0_i32_0 = arith.constant 0 : i32
    %c0_i32_1 = arith.constant 0 : i32
    return %c0_i32, %c0_i32_0 : i32, i32
  }
  func.func @transform_6(%arg0: i32) -> (i32, i32) {
    %c0_i32 = arith.constant 0 : i32
    %c0_i32_0 = arith.constant 0 : i32
    %c0_i32_1 = arith.constant 0 : i32
    return %c0_i32, %c0_i32_0 : i32, i32
  }
  func.func @transform_7(%arg0: i32) -> (i32, i32) {
    %c0_i32 = arith.constant 0 : i32
    %c0_i32_0 = arith.constant 0 : i32
    %c0_i32_1 = arith.constant 0 : i32
    return %c0_i32, %c0_i32_0 : i32, i32
  }
  func.func @transform_8(%arg0: i32) -> (i32, i32) {
    %c0_i32 = arith.constant 0 : i32
    %c0_i32_0 = arith.constant 0 : i32
    %c0_i32_1 = arith.constant 0 : i32
    return %c0_i32, %c0_i32_0 : i32, i32
  }
  func.func @transform_9(%arg0: i32) -> (i32, i32) {
    %c0_i32 = arith.constant 0 : i32
    %c0_i32_0 = arith.constant 0 : i32
    %c0_i32_1 = arith.constant 0 : i32
    return %c0_i32, %c0_i32_0 : i32, i32
  }
  func.func @transform_10(%arg0: i32) -> (i32, i32) {
    %c0_i32 = arith.constant 0 : i32
    %c0_i32_0 = arith.constant 0 : i32
    %c0_i32_1 = arith.constant 0 : i32
    return %c0_i32, %c0_i32_0 : i32, i32
  }
  func.func @transform_11(%arg0: i32) -> (i32, i32) {
    %c0_i32 = arith.constant 0 : i32
    %c0_i32_0 = arith.constant 0 : i32
    %c0_i32_1 = arith.constant 0 : i32
    return %c0_i32, %c0_i32_0 : i32, i32
  }
  func.func @transform_12(%arg0: i32) -> (i32, i32) {
    %c0_i32 = arith.constant 0 : i32
    %c0_i32_0 = arith.constant 0 : i32
    %c0_i32_1 = arith.constant 0 : i32
    return %c0_i32, %c0_i32_0 : i32, i32
  }
  func.func @transform_13(%arg0: i32) -> (i32, i32) {
    %c0_i32 = arith.constant 0 : i32
    %c0_i32_0 = arith.constant 0 : i32
    return %arg0, %c0_i32 : i32, i32
  }
}

</mosaic_0001>

<llo_original>
// kernel: ffnn_forward.1
$region0: #{ffnn_forward.1}
  #allocation0 [shape = 'u32[]', space=smem, size = 0x4, offset = 0x4, fixed_abs, tag = 'smem constant byte address 0x4 - core index']
  #allocation1 [shape = 'u32[144,128]{1,0:T(1,128)}', space=vmem, size = 0x12000, scoped, tag = 'internal scratch']
  %s0 = inlined_call_operand.vmem [shape: bf16[256,128], index: 0, kind: input, shape index: {}]
  %s1 = inlined_call_operand.vmem [shape: bf16[128,1024], index: 1, kind: input, shape index: {}]
  %s2 = inlined_call_operand.vmem [shape: f32[1,1024], index: 2, kind: input, shape index: {}]
  %s3 = inlined_call_operand.vmem [shape: bf16[1024,512], index: 3, kind: input, shape index: {}]
  %s4 = inlined_call_operand.vmem [shape: f32[1,512], index: 4, kind: input, shape index: {}]
  %s5 = inlined_call_operand.vmem [shape: bf16[512,256], index: 5, kind: input, shape index: {}]
  %s6 = inlined_call_operand.vmem [shape: f32[1,256], index: 6, kind: input, shape index: {}]
  %s7 = inlined_call_operand.vmem [shape: bf16[256,128], index: 7, kind: input, shape index: {}]
  %s8 = inlined_call_operand.vmem [shape: f32[1,128], index: 8, kind: input, shape index: {}]
  %s9 = inlined_call_operand.vmem [shape: bf16[128,128], index: 9, kind: input, shape index: {}]
  %s10 = inlined_call_operand.vmem [shape: f32[1,128], index: 10, kind: input, shape index: {}]
  %s11 = inlined_call_operand.vmem [shape: bf16[128,128], index: 11, kind: input, shape index: {}]
  %s12 = inlined_call_operand.vmem [shape: f32[1,128], index: 12, kind: input, shape index: {}]
  %s13 = inlined_call_operand.vmem [shape: f32[256,128], index: 13, kind: output, shape index: {}]
  %s14 = sld [smem:[#allocation0]]
  $region85: #{ffnn_forward.1} parent=0
    _
  %s16 = ssub.s32 1, %s14
  %s17 = scalar_select 0, %s16, %s14
  loop: start=0, step=1, limit=4
  $region2: #{ffnn_forward.1} parent=0 // loop_pre_header
    _
  $region3: #{ffnn_forward.1} parent=0 // loop_header
    %s19 = sphi 0, %s23
    %p20 = scmp.ge.s32.totalorder %s19, 4
    %s29 = sphi 0, %s31
    %s32 = sphi 0, %s29
    %s33 = sphi 0, %s32
    %s49 = sphi 0, %s33
    %s53 = sphi 0, %s53
    %s55 = sphi 0, %s53
    %s56 = sphi 0, %s55
    %s70 = sphi 0, %s56
    %s74 = sphi 0, %s74
    %s76 = sphi 0, %s74
    %s77 = sphi 0, %s76
    %s91 = sphi 0, %s77
    %s95 = sphi 0, %s95
    %s97 = sphi 0, %s95
    %s98 = sphi 0, %s97
    %s112 = sphi 0, %s98
    %s116 = sphi 0, %s116
    %s118 = sphi 0, %s116
    %s119 = sphi 0, %s118
    %s133 = sphi 0, %s119
    %s137 = sphi 0, %s137
    %s139 = sphi 0, %s137
    %s140 = sphi 0, %s139
    %s154 = sphi 0, %s140
    %s158 = sphi 0, %s158
    %s160 = sphi 0, %s158
    %s161 = sphi 0, %s160
    %s175 = sphi 0, %s161
    %s179 = sphi 0, %s179
    %s181 = sphi 0, %s179
    %s182 = sphi 0, %s181
    %s196 = sphi 0, %s182
    %s200 = sphi 0, %s200
    %s202 = sphi 0, %s200
    %s203 = sphi 0, %s202
    %s217 = sphi 0, %s203
    %s221 = sphi 0, %s221
    %s223 = sphi 0, %s221
    %s224 = sphi 0, %s223
    %s238 = sphi 0, %s224
    %s242 = sphi 0, %s242
    %s244 = sphi 0, %s242
    %s245 = sphi 0, %s244
    %s259 = sphi 0, %s245
    %s263 = sphi 0, %s263
    %s265 = sphi 0, %s263
    %s266 = sphi 0, %s265
    %s280 = sphi 0, %s266
    %s284 = sphi 0, %s284
    %s286 = sphi 0, %s284
    %s287 = sphi 0, %s286
    %s301 = sphi 0, %s287
    %s307 = sphi 0, %s309
    %s310 = sphi 0, %s307
    %s311 = sphi 0, %s310
    %s327 = sphi 0, %s311
  $region4: #{ffnn_forward.1} parent=0 // loop_header_branch
    %22 = sbr.rel (%p20) target = $region8
  $region5: #{ffnn_forward.1} parent=0 // loop_body
    %s24 = ssub.s32 %s19, 1
    %s25 = ssub.s32 %s19, 2
    %s26 = sadd.s32 %s19, 1
    %s27 = ssub.s32 %s19, %s26
    %p28 = scmp.eq.s32.totalorder %s27, 0
    %s30 = sadd.s32 %s29, 1
    %s31 = scalar_select %p28, %s29, %s30
    %p34 = pneg %p28
    %p35 = scmp.eq.s32.totalorder %s19, 1
    %p36 = por %p34, %p35
    %p37 = scmp.ne.s32.totalorder %s29, %s32
    %p38 = scmp.eq.s32.totalorder %s19, 0
    %p39 = por %p37, %p38
    %p40 = scmp.ne.s32.totalorder %s29, %s32
    %p41 = scmp.eq.s32.totalorder %s24, 1
    %p42 = por %p40, %p41
    %p43 = scmp.ne.s32.totalorder %s32, %s33
    %p44 = scmp.eq.s32.totalorder %s24, 0
    %p45 = por %p43, %p44
    %p46 = scmp.ne.s32.totalorder %s32, %s33
    %p47 = scmp.eq.s32.totalorder %s25, 1
    %p48 = por %p46, %p47
    %p50 = scmp.ne.s32.totalorder %s33, %s49
    %p51 = scmp.eq.s32.totalorder %s25, 0
    %p52 = por %p50, %p51
    %s54 = sadd.s32 %s53, 1
    %p57 = scmp.eq.s32.totalorder %s19, 1
    %p58 = scmp.ne.s32.totalorder %s53, %s55
    %p59 = scmp.eq.s32.totalorder %s19, 0
    %p60 = por %p58, %p59
    %p61 = scmp.ne.s32.totalorder %s53, %s55
    %p62 = scmp.eq.s32.totalorder %s24, 1
    %p63 = por %p61, %p62
    %p64 = scmp.ne.s32.totalorder %s55, %s56
    %p65 = scmp.eq.s32.totalorder %s24, 0
    %p66 = por %p64, %p65
    %p67 = scmp.ne.s32.totalorder %s55, %s56
    %p68 = scmp.eq.s32.totalorder %s25, 1
    %p69 = por %p67, %p68
    %p71 = scmp.ne.s32.totalorder %s56, %s70
    %p72 = scmp.eq.s32.totalorder %s25, 0
    %p73 = por %p71, %p72
    %s75 = sadd.s32 %s74, 1
    %p78 = scmp.eq.s32.totalorder %s19, 1
    %p79 = scmp.ne.s32.totalorder %s74, %s76
    %p80 = scmp.eq.s32.totalorder %s19, 0
    %p81 = por %p79, %p80
    %p82 = scmp.ne.s32.totalorder %s74, %s76
    %p83 = scmp.eq.s32.totalorder %s24, 1
    %p84 = por %p82, %p83
    %p85 = scmp.ne.s32.totalorder %s76, %s77
    %p86 = scmp.eq.s32.totalorder %s24, 0
    %p87 = por %p85, %p86
    %p88 = scmp.ne.s32.totalorder %s76, %s77
    %p89 = scmp.eq.s32.totalorder %s25, 1
    %p90 = por %p88, %p89
    %p92 = scmp.ne.s32.totalorder %s77, %s91
    %p93 = scmp.eq.s32.totalorder %s25, 0
    %p94 = por %p92, %p93
    %s96 = sadd.s32 %s95, 1
    %p99 = scmp.eq.s32.totalorder %s19, 1
    %p100 = scmp.ne.s32.totalorder %s95, %s97
    %p101 = scmp.eq.s32.totalorder %s19, 0
    %p102 = por %p100, %p101
    %p103 = scmp.ne.s32.totalorder %s95, %s97
    %p104 = scmp.eq.s32.totalorder %s24, 1
    %p105 = por %p103, %p104
    %p106 = scmp.ne.s32.totalorder %s97, %s98
    %p107 = scmp.eq.s32.totalorder %s24, 0
    %p108 = por %p106, %p107
    %p109 = scmp.ne.s32.totalorder %s97, %s98
    %p110 = scmp.eq.s32.totalorder %s25, 1
    %p111 = por %p109, %p110
    %p113 = scmp.ne.s32.totalorder %s98, %s112
    %p114 = scmp.eq.s32.totalorder %s25, 0
    %p115 = por %p113, %p114
    %s117 = sadd.s32 %s116, 1
    %p120 = scmp.eq.s32.totalorder %s19, 1
    %p121 = scmp.ne.s32.totalorder %s116, %s118
    %p122 = scmp.eq.s32.totalorder %s19, 0
    %p123 = por %p121, %p122
    %p124 = scmp.ne.s32.totalorder %s116, %s118
    %p125 = scmp.eq.s32.totalorder %s24, 1
    %p126 = por %p124, %p125
    %p127 = scmp.ne.s32.totalorder %s118, %s119
    %p128 = scmp.eq.s32.totalorder %s24, 0
    %p129 = por %p127, %p128
    %p130 = scmp.ne.s32.totalorder %s118, %s119
    %p131 = scmp.eq.s32.totalorder %s25, 1
    %p132 = por %p130, %p131
    %p134 = scmp.ne.s32.totalorder %s119, %s133
    %p135 = scmp.eq.s32.totalorder %s25, 0
    %p136 = por %p134, %p135
    %s138 = sadd.s32 %s137, 1
    %p141 = scmp.eq.s32.totalorder %s19, 1
    %p142 = scmp.ne.s32.totalorder %s137, %s139
    %p143 = scmp.eq.s32.totalorder %s19, 0
    %p144 = por %p142, %p143
    %p145 = scmp.ne.s32.totalorder %s137, %s139
    %p146 = scmp.eq.s32.totalorder %s24, 1
    %p147 = por %p145, %p146
    %p148 = scmp.ne.s32.totalorder %s139, %s140
    %p149 = scmp.eq.s32.totalorder %s24, 0
    %p150 = por %p148, %p149
    %p151 = scmp.ne.s32.totalorder %s139, %s140
    %p152 = scmp.eq.s32.totalorder %s25, 1
    %p153 = por %p151, %p152
    %p155 = scmp.ne.s32.totalorder %s140, %s154
    %p156 = scmp.eq.s32.totalorder %s25, 0
    %p157 = por %p155, %p156
    %s159 = sadd.s32 %s158, 1
    %p162 = scmp.eq.s32.totalorder %s19, 1
    %p163 = scmp.ne.s32.totalorder %s158, %s160
    %p164 = scmp.eq.s32.totalorder %s19, 0
    %p165 = por %p163, %p164
    %p166 = scmp.ne.s32.totalorder %s158, %s160
    %p167 = scmp.eq.s32.totalorder %s24, 1
    %p168 = por %p166, %p167
    %p169 = scmp.ne.s32.totalorder %s160, %s161
    %p170 = scmp.eq.s32.totalorder %s24, 0
    %p171 = por %p169, %p170
    %p172 = scmp.ne.s32.totalorder %s160, %s161
    %p173 = scmp.eq.s32.totalorder %s25, 1
    %p174 = por %p172, %p173
    %p176 = scmp.ne.s32.totalorder %s161, %s175
    %p177 = scmp.eq.s32.totalorder %s25, 0
    %p178 = por %p176, %p177
    %s180 = sadd.s32 %s179, 1
    %p183 = scmp.eq.s32.totalorder %s19, 1
    %p184 = scmp.ne.s32.totalorder %s179, %s181
    %p185 = scmp.eq.s32.totalorder %s19, 0
    %p186 = por %p184, %p185
    %p187 = scmp.ne.s32.totalorder %s179, %s181
    %p188 = scmp.eq.s32.totalorder %s24, 1
    %p189 = por %p187, %p188
    %p190 = scmp.ne.s32.totalorder %s181, %s182
    %p191 = scmp.eq.s32.totalorder %s24, 0
    %p192 = por %p190, %p191
    %p193 = scmp.ne.s32.totalorder %s181, %s182
    %p194 = scmp.eq.s32.totalorder %s25, 1
    %p195 = por %p193, %p194
    %p197 = scmp.ne.s32.totalorder %s182, %s196
    %p198 = scmp.eq.s32.totalorder %s25, 0
    %p199 = por %p197, %p198
    %s201 = sadd.s32 %s200, 1
    %p204 = scmp.eq.s32.totalorder %s19, 1
    %p205 = scmp.ne.s32.totalorder %s200, %s202
    %p206 = scmp.eq.s32.totalorder %s19, 0
    %p207 = por %p205, %p206
    %p208 = scmp.ne.s32.totalorder %s200, %s202
    %p209 = scmp.eq.s32.totalorder %s24, 1
    %p210 = por %p208, %p209
    %p211 = scmp.ne.s32.totalorder %s202, %s203
    %p212 = scmp.eq.s32.totalorder %s24, 0
    %p213 = por %p211, %p212
    %p214 = scmp.ne.s32.totalorder %s202, %s203
    %p215 = scmp.eq.s32.totalorder %s25, 1
    %p216 = por %p214, %p215
    %p218 = scmp.ne.s32.totalorder %s203, %s217
    %p219 = scmp.eq.s32.totalorder %s25, 0
    %p220 = por %p218, %p219
    %s222 = sadd.s32 %s221, 1
    %p225 = scmp.eq.s32.totalorder %s19, 1
    %p226 = scmp.ne.s32.totalorder %s221, %s223
    %p227 = scmp.eq.s32.totalorder %s19, 0
    %p228 = por %p226, %p227
    %p229 = scmp.ne.s32.totalorder %s221, %s223
    %p230 = scmp.eq.s32.totalorder %s24, 1
    %p231 = por %p229, %p230
    %p232 = scmp.ne.s32.totalorder %s223, %s224
    %p233 = scmp.eq.s32.totalorder %s24, 0
    %p234 = por %p232, %p233
    %p235 = scmp.ne.s32.totalorder %s223, %s224
    %p236 = scmp.eq.s32.totalorder %s25, 1
    %p237 = por %p235, %p236
    %p239 = scmp.ne.s32.totalorder %s224, %s238
    %p240 = scmp.eq.s32.totalorder %s25, 0
    %p241 = por %p239, %p240
    %s243 = sadd.s32 %s242, 1
    %p246 = scmp.eq.s32.totalorder %s19, 1
    %p247 = scmp.ne.s32.totalorder %s242, %s244
    %p248 = scmp.eq.s32.totalorder %s19, 0
    %p249 = por %p247, %p248
    %p250 = scmp.ne.s32.totalorder %s242, %s244
    %p251 = scmp.eq.s32.totalorder %s24, 1
    %p252 = por %p250, %p251
    %p253 = scmp.ne.s32.totalorder %s244, %s245
    %p254 = scmp.eq.s32.totalorder %s24, 0
    %p255 = por %p253, %p254
    %p256 = scmp.ne.s32.totalorder %s244, %s245
    %p257 = scmp.eq.s32.totalorder %s25, 1
    %p258 = por %p256, %p257
    %p260 = scmp.ne.s32.totalorder %s245, %s259
    %p261 = scmp.eq.s32.totalorder %s25, 0
    %p262 = por %p260, %p261
    %s264 = sadd.s32 %s263, 1
    %p267 = scmp.eq.s32.totalorder %s19, 1
    %p268 = scmp.ne.s32.totalorder %s263, %s265
    %p269 = scmp.eq.s32.totalorder %s19, 0
    %p270 = por %p268, %p269
    %p271 = scmp.ne.s32.totalorder %s263, %s265
    %p272 = scmp.eq.s32.totalorder %s24, 1
    %p273 = por %p271, %p272
    %p274 = scmp.ne.s32.totalorder %s265, %s266
    %p275 = scmp.eq.s32.totalorder %s24, 0
    %p276 = por %p274, %p275
    %p277 = scmp.ne.s32.totalorder %s265, %s266
    %p278 = scmp.eq.s32.totalorder %s25, 1
    %p279 = por %p277, %p278
    %p281 = scmp.ne.s32.totalorder %s266, %s280
    %p282 = scmp.eq.s32.totalorder %s25, 0
    %p283 = por %p281, %p282
    %s285 = sadd.s32 %s284, 1
    %p288 = scmp.eq.s32.totalorder %s19, 1
    %p289 = scmp.ne.s32.totalorder %s284, %s286
    %p290 = scmp.eq.s32.totalorder %s19, 0
    %p291 = por %p289, %p290
    %p292 = scmp.ne.s32.totalorder %s284, %s286
    %p293 = scmp.eq.s32.totalorder %s24, 1
    %p294 = por %p292, %p293
    %p295 = scmp.ne.s32.totalorder %s286, %s287
    %p296 = scmp.eq.s32.totalorder %s24, 0
    %p297 = por %p295, %p296
    %p298 = scmp.ne.s32.totalorder %s286, %s287
    %p299 = scmp.eq.s32.totalorder %s25, 1
    %p300 = por %p298, %p299
    %p302 = scmp.ne.s32.totalorder %s287, %s301
    %p303 = scmp.eq.s32.totalorder %s25, 0
    %p304 = por %p302, %p303
    %s305 = ssub.s32 %s19, %s26
    %p306 = scmp.eq.s32.totalorder %s305, 0
    %s308 = sadd.s32 %s307, 1
    %s309 = scalar_select %p306, %s307, %s308
    %p312 = pneg %p306
    %p313 = scmp.eq.s32.totalorder %s19, 1
    %p314 = por %p312, %p313
    %p315 = scmp.ne.s32.totalorder %s307, %s310
    %p316 = scmp.eq.s32.totalorder %s19, 0
    %p317 = por %p315, %p316
    %p318 = scmp.ne.s32.totalorder %s307, %s310
    %p319 = scmp.eq.s32.totalorder %s24, 1
    %p320 = por %p318, %p319
    %p321 = scmp.ne.s32.totalorder %s310, %s311
    %p322 = scmp.eq.s32.totalorder %s24, 0
    %p323 = por %p321, %p322
    %p324 = scmp.ne.s32.totalorder %s310, %s311
    %p325 = scmp.eq.s32.totalorder %s25, 1
    %p326 = por %p324, %p325
    %p328 = scmp.ne.s32.totalorder %s311, %s327
    %p329 = scmp.eq.s32.totalorder %s25, 0
    %p330 = por %p328, %p329
    %p331 = scmp.le.s32.totalorder 1, %s19
    %p332 = scmp.lt.s32.totalorder %s19, 3
    %p333 = pnand %p331, %p332
    %p334 = pneg %p333
    // Predicated region
    $region9: #{ffnn_forward.1} parent=5 // pred_check
      _
    $region10: #{ffnn_forward.1} parent=5 // pred_check_branch
      %336 = sbr.rel (%p333) target = $region12
    $region11: #{ffnn_forward.1} parent=5 // pred_region
      %s337 = ssub.s32 %s19, 1
      // Predicated region
      $region13: #{ffnn_forward.1} parent=11 // pred_check
        %p338 = pneg %p66
      $region14: #{ffnn_forward.1} parent=11 // pred_check_branch
        %340 = sbr.rel (%p338) target = $region16
      $region15: #{ffnn_forward.1} parent=11 // pred_region
        _
      $region16: #{ffnn_forward.1} parent=11 // pred_fallthru
        _
      // Predicated region
      $region17: #{ffnn_forward.1} parent=11 // pred_check
        %p341 = pneg %p87
      $region18: #{ffnn_forward.1} parent=11 // pred_check_branch
        %343 = sbr.rel (%p341) target = $region20
      $region19: #{ffnn_forward.1} parent=11 // pred_region
        _
      $region20: #{ffnn_forward.1} parent=11 // pred_fallthru
        _
      // Predicated region
      $region21: #{ffnn_forward.1} parent=11 // pred_check
        %p344 = pneg %p108
      $region22: #{ffnn_forward.1} parent=11 // pred_check_branch
        %346 = sbr.rel (%p344) target = $region24
      $region23: #{ffnn_forward.1} parent=11 // pred_region
        _
      $region24: #{ffnn_forward.1} parent=11 // pred_fallthru
        _
      // Predicated region
      $region25: #{ffnn_forward.1} parent=11 // pred_check
        %p347 = pneg %p129
      $region26: #{ffnn_forward.1} parent=11 // pred_check_branch
        %349 = sbr.rel (%p347) target = $region28
      $region27: #{ffnn_forward.1} parent=11 // pred_region
        _
      $region28: #{ffnn_forward.1} parent=11 // pred_fallthru
        _
      // Predicated region
      $region29: #{ffnn_forward.1} parent=11 // pred_check
        %p350 = pneg %p150
      $region30: #{ffnn_forward.1} parent=11 // pred_check_branch
        %352 = sbr.rel (%p350) target = $region32
      $region31: #{ffnn_forward.1} parent=11 // pred_region
        _
      $region32: #{ffnn_forward.1} parent=11 // pred_fallthru
        _
      // Predicated region
      $region33: #{ffnn_forward.1} parent=11 // pred_check
        %p353 = pneg %p171
      $region34: #{ffnn_forward.1} parent=11 // pred_check_branch
        %355 = sbr.rel (%p353) target = $region36
      $region35: #{ffnn_forward.1} parent=11 // pred_region
        _
      $region36: #{ffnn_forward.1} parent=11 // pred_fallthru
        _
      // Predicated region
      $region37: #{ffnn_forward.1} parent=11 // pred_check
        %p356 = pneg %p192
      $region38: #{ffnn_forward.1} parent=11 // pred_check_branch
        %358 = sbr.rel (%p356) target = $region40
      $region39: #{ffnn_forward.1} parent=11 // pred_region
        _
      $region40: #{ffnn_forward.1} parent=11 // pred_fallthru
        _
      // Predicated region
      $region41: #{ffnn_forward.1} parent=11 // pred_check
        %p359 = pneg %p213
      $region42: #{ffnn_forward.1} parent=11 // pred_check_branch
        %361 = sbr.rel (%p359) target = $region44
      $region43: #{ffnn_forward.1} parent=11 // pred_region
        _
      $region44: #{ffnn_forward.1} parent=11 // pred_fallthru
        _
      // Predicated region
      $region45: #{ffnn_forward.1} parent=11 // pred_check
        %p362 = pneg %p234
      $region46: #{ffnn_forward.1} parent=11 // pred_check_branch
        %364 = sbr.rel (%p362) target = $region48
      $region47: #{ffnn_forward.1} parent=11 // pred_region
        _
      $region48: #{ffnn_forward.1} parent=11 // pred_fallthru
        _
      // Predicated region
      $region49: #{ffnn_forward.1} parent=11 // pred_check
        %p365 = pneg %p255
      $region50: #{ffnn_forward.1} parent=11 // pred_check_branch
        %367 = sbr.rel (%p365) target = $region52
      $region51: #{ffnn_forward.1} parent=11 // pred_region
        _
      $region52: #{ffnn_forward.1} parent=11 // pred_fallthru
        _
      // Predicated region
      $region53: #{ffnn_forward.1} parent=11 // pred_check
        %p368 = pneg %p276
      $region54: #{ffnn_forward.1} parent=11 // pred_check_branch
        %370 = sbr.rel (%p368) target = $region56
      $region55: #{ffnn_forward.1} parent=11 // pred_region
        _
      $region56: #{ffnn_forward.1} parent=11 // pred_fallthru
        _
      // Predicated region
      $region57: #{ffnn_forward.1} parent=11 // pred_check
        %p371 = pneg %p297
      $region58: #{ffnn_forward.1} parent=11 // pred_check_branch
        %373 = sbr.rel (%p371) target = $region60
      $region59: #{ffnn_forward.1} parent=11 // pred_region
        _
      $region60: #{ffnn_forward.1} parent=11 // pred_fallthru
        _
    $region12: #{ffnn_forward.1} parent=5 // pred_fallthru
      _
    %p374 = scmp.lt.s32.totalorder %s19, 2
    // Predicated region
    $region61: #{ffnn_forward.1} parent=5 // pred_check
      %p375 = pneg %p374
    $region62: #{ffnn_forward.1} parent=5 // pred_check_branch
      %377 = sbr.rel (%p375) target = $region64
    $region63: #{ffnn_forward.1} parent=5 // pred_region
      // Predicated region
      $region65: #{ffnn_forward.1} parent=63 // pred_check
        %p378 = pneg %p39
      $region66: #{ffnn_forward.1} parent=63 // pred_check_branch
        %380 = sbr.rel (%p378) target = $region68
      $region67: #{ffnn_forward.1} parent=63 // pred_region
        %s381 = smul.u32 16, %s19
        %p382 = scmp.lt.s32.totalorder %s381, 31
        %s383 = scalar_select %p382, %s381, 31
        %s384 = smul.addr %s383, 4
        %s385 = scalar_lea.vmem %s0, %s384
        %s386 = smul.u32 16, %s19
      $region68: #{ffnn_forward.1} parent=63 // pred_fallthru
        _
    $region64: #{ffnn_forward.1} parent=5 // pred_fallthru
      _
    %p387 = scmp.le.s32.totalorder 1, %s19
    %p388 = scmp.lt.s32.totalorder %s19, 3
    %p389 = pnand %p387, %p388
    %p390 = pneg %p389
    // Predicated region
    $region69: #{ffnn_forward.1} parent=5 // pred_check
      _
    $region70: #{ffnn_forward.1} parent=5 // pred_check_branch
      %392 = sbr.rel (%p389) target = $region72
    $region71: #{ffnn_forward.1} parent=5 // pred_region
      %s393 = ssub.s32 %s19, 1
      %s394 = smul.u32 16, %s24
      %p395 = scmp.lt.s32.totalorder %s394, 31
      %s396 = scalar_select %p395, %s394, 31
      %s397 = smul.addr %s396, 4
      %s398 = scalar_lea.vmem %s0, %s397
      %p399 = pneg %p45
      %p400 = pneg %p42
      %p401 = pneg %p66
      %p402 = pneg %p63
      %p403 = pneg %p87
      %p404 = pneg %p84
      %p405 = pneg %p108
      %p406 = pneg %p105
      %p407 = pneg %p129
      %p408 = pneg %p126
      %p409 = pneg %p150
      %p410 = pneg %p147
      %p411 = pneg %p171
      %p412 = pneg %p168
      %p413 = pneg %p192
      %p414 = pneg %p189
      %p415 = pneg %p213
      %p416 = pneg %p210
      %p417 = pneg %p234
      %p418 = pneg %p231
      %p419 = pneg %p255
      %p420 = pneg %p252
      %p421 = pneg %p276
      %p422 = pneg %p273
      %p423 = pneg %p297
      %p424 = pneg %p294
      %p425 = pneg %p323
      %p426 = pneg %p320
      %s427 = smul.u32 16, %s24
      %p428 = scmp.lt.s32.totalorder %s427, 31
      %s429 = scalar_select %p428, %s427, 31
      %s430 = smul.addr %s429, 8
      %s431 = scalar_lea.vmem %s13, %s430
      %s432 = smul.u32 16, %s24
      %p433 = scmp.lt.s32.totalorder %s432, 31
      %s434 = scalar_select %p433, %s432, 31
      %s435 = smul.addr %s434, 4
      %s436 = scalar_lea.vmem %s0, %s435
      %s437 = smul.u32 16, %s24
      %s438 = smul.u32 16, %s24
      %p439 = scmp.lt.s32.totalorder %s438, 31
      %s440 = scalar_select %p439, %s438, 31
      %s441 = smul.addr %s440, 8
      %s442 = scalar_lea.vmem %s13, %s441
      %s443 = smul.u32 16, %s24
      %v445 = vld [vmem:[%s436] sm:$0xf]
      %v446 = vld [vmem:[%s436 + $0x4] sm:$0xf]
      %v447 = vld [vmem:[%s436 + $0x8] sm:$0xf]
      %v448 = vld [vmem:[%s436 + $0xc] sm:$0xf]
      %v449 = vld [vmem:[%s436 + $0x10] sm:$0xf]
      %v450 = vld [vmem:[%s436 + $0x14] sm:$0xf]
      %v451 = vld [vmem:[%s436 + $0x18] sm:$0xf]
      %v452 = vld [vmem:[%s436 + $0x1c] sm:$0xf]
      %v453 = vld [vmem:[%s436 + $0x20] sm:$0xf]
      %v454 = vld [vmem:[%s436 + $0x24] sm:$0xf]
      %v455 = vld [vmem:[%s436 + $0x28] sm:$0xf]
      %v456 = vld [vmem:[%s436 + $0x2c] sm:$0xf]
      %v457 = vld [vmem:[%s436 + $0x30] sm:$0xf]
      %v458 = vld [vmem:[%s436 + $0x34] sm:$0xf]
      %v459 = vld [vmem:[%s436 + $0x38] sm:$0xf]
      %v460 = vld [vmem:[%s436 + $0x3c] sm:$0xf]
      %v461 = vld [vmem:[%s1] sm:$0xff]
      %v462 = vld [vmem:[%s1 + $0x8] sm:$0xff]
      %v463 = vld [vmem:[%s1 + $0x10] sm:$0xff]
      %v464 = vld [vmem:[%s1 + $0x18] sm:$0xff]
      %v465 = vld [vmem:[%s1 + $0x20] sm:$0xff]
      %v466 = vld [vmem:[%s1 + $0x28] sm:$0xff]
      %v467 = vld [vmem:[%s1 + $0x30] sm:$0xff]
      %v468 = vld [vmem:[%s1 + $0x38] sm:$0xff]
      %v469 = vld [vmem:[%s1 + $0x40] sm:$0xff]
      %v470 = vld [vmem:[%s1 + $0x48] sm:$0xff]
      %v471 = vld [vmem:[%s1 + $0x50] sm:$0xff]
      %v472 = vld [vmem:[%s1 + $0x58] sm:$0xff]
      %v473 = vld [vmem:[%s1 + $0x60] sm:$0xff]
      %v474 = vld [vmem:[%s1 + $0x68] sm:$0xff]
      %v475 = vld [vmem:[%s1 + $0x70] sm:$0xff]
      %v476 = vld [vmem:[%s1 + $0x78] sm:$0xff]
      %v477 = vld [vmem:[%s1 + $0x80] sm:$0xff]
      %v478 = vld [vmem:[%s1 + $0x88] sm:$0xff]
      %v479 = vld [vmem:[%s1 + $0x90] sm:$0xff]
      %v480 = vld [vmem:[%s1 + $0x98] sm:$0xff]
      %v481 = vld [vmem:[%s1 + $0xa0] sm:$0xff]
      %v482 = vld [vmem:[%s1 + $0xa8] sm:$0xff]
      %v483 = vld [vmem:[%s1 + $0xb0] sm:$0xff]
      %v484 = vld [vmem:[%s1 + $0xb8] sm:$0xff]
      %v485 = vld [vmem:[%s1 + $0xc0] sm:$0xff]
      %v486 = vld [vmem:[%s1 + $0xc8] sm:$0xff]
      %v487 = vld [vmem:[%s1 + $0xd0] sm:$0xff]
      %v488 = vld [vmem:[%s1 + $0xd8] sm:$0xff]
      %v489 = vld [vmem:[%s1 + $0xe0] sm:$0xff]
      %v490 = vld [vmem:[%s1 + $0xe8] sm:$0xff]
      %v491 = vld [vmem:[%s1 + $0xf0] sm:$0xff]
      %v492 = vld [vmem:[%s1 + $0xf8] sm:$0xff]
      %v493 = vld [vmem:[%s1 + $0x100] sm:$0xff]
      %v494 = vld [vmem:[%s1 + $0x108] sm:$0xff]
      %v495 = vld [vmem:[%s1 + $0x110] sm:$0xff]
      %v496 = vld [vmem:[%s1 + $0x118] sm:$0xff]
      %v497 = vld [vmem:[%s1 + $0x120] sm:$0xff]
      %v498 = vld [vmem:[%s1 + $0x128] sm:$0xff]
      %v499 = vld [vmem:[%s1 + $0x130] sm:$0xff]
      %v500 = vld [vmem:[%s1 + $0x138] sm:$0xff]
      %v501 = vld [vmem:[%s1 + $0x140] sm:$0xff]
      %v502 = vld [vmem:[%s1 + $0x148] sm:$0xff]
      %v503 = vld [vmem:[%s1 + $0x150] sm:$0xff]
      %v504 = vld [vmem:[%s1 + $0x158] sm:$0xff]
      %v505 = vld [vmem:[%s1 + $0x160] sm:$0xff]
      %v506 = vld [vmem:[%s1 + $0x168] sm:$0xff]
      %v507 = vld [vmem:[%s1 + $0x170] sm:$0xff]
      %v508 = vld [vmem:[%s1 + $0x178] sm:$0xff]
      %v509 = vld [vmem:[%s1 + $0x180] sm:$0xff]
      %v510 = vld [vmem:[%s1 + $0x188] sm:$0xff]
      %v511 = vld [vmem:[%s1 + $0x190] sm:$0xff]
      %v512 = vld [vmem:[%s1 + $0x198] sm:$0xff]
      %v513 = vld [vmem:[%s1 + $0x1a0] sm:$0xff]
      %v514 = vld [vmem:[%s1 + $0x1a8] sm:$0xff]
      %v515 = vld [vmem:[%s1 + $0x1b0] sm:$0xff]
      %v516 = vld [vmem:[%s1 + $0x1b8] sm:$0xff]
      %v517 = vld [vmem:[%s1 + $0x1c0] sm:$0xff]
      %v518 = vld [vmem:[%s1 + $0x1c8] sm:$0xff]
      %v519 = vld [vmem:[%s1 + $0x1d0] sm:$0xff]
      %v520 = vld [vmem:[%s1 + $0x1d8] sm:$0xff]
      %v521 = vld [vmem:[%s1 + $0x1e0] sm:$0xff]
      %v522 = vld [vmem:[%s1 + $0x1e8] sm:$0xff]
      %v523 = vld [vmem:[%s1 + $0x1f0] sm:$0xff]
      %v524 = vld [vmem:[%s1 + $0x1f8] sm:$0xff]
      %v525 = vld [vmem:[%s2] sm:$0xff]
      %v527 = vlaneseq
      %v528 = vshrl.u32 %v527, 7
      %v529 = vsub.s32 0, %v528
      %v530 = vrot.slane %v525, %v529
      %v531 = vlaneseq
      %v532 = vshrl.u32 %v531, 7
      %v533 = vsub.s32 1, %v532
      %v534 = vrot.slane %v525, %v533
      %v535 = vlaneseq
      %v536 = vshrl.u32 %v535, 7
      %v537 = vsub.s32 2, %v536
      %v538 = vrot.slane %v525, %v537
      %v539 = vlaneseq
      %v540 = vshrl.u32 %v539, 7
      %v541 = vsub.s32 3, %v540
      %v542 = vrot.slane %v525, %v541
      %v543 = vlaneseq
      %v544 = vshrl.u32 %v543, 7
      %v545 = vsub.s32 4, %v544
      %v546 = vrot.slane %v525, %v545
      %v547 = vlaneseq
      %v548 = vshrl.u32 %v547, 7
      %v549 = vsub.s32 5, %v548
      %v550 = vrot.slane %v525, %v549
      %v551 = vlaneseq
      %v552 = vshrl.u32 %v551, 7
      %v553 = vsub.s32 6, %v552
      %v554 = vrot.slane %v525, %v553
      %v555 = vlaneseq
      %v556 = vshrl.u32 %v555, 7
      %v557 = vsub.s32 7, %v556
      %v558 = vrot.slane %v525, %v557
      %v583 = vunpack.c.l.b16 %v445
      %v584 = vunpack.c.l.b16 %v446
      %v585 = vunpack.c.l.b16 %v447
      %v586 = vunpack.c.l.b16 %v448
      %v587 = vunpack.c.l.b16 %v449
      %v588 = vunpack.c.l.b16 %v450
      %v589 = vunpack.c.l.b16 %v451
      %v590 = vunpack.c.l.b16 %v452
      %v591 = vunpack.c.l.b16 %v453
      %v592 = vunpack.c.l.b16 %v454
      %v593 = vunpack.c.l.b16 %v455
      %v594 = vunpack.c.l.b16 %v456
      %v595 = vunpack.c.l.b16 %v457
      %v596 = vunpack.c.l.b16 %v458
      %v597 = vunpack.c.l.b16 %v459
      %v598 = vunpack.c.l.b16 %v460
      %v599 = vpack.c.b16 %v584, %v583
      %v600 = vpack.c.b16 %v586, %v585
      %v601 = vpack.c.b16 %v588, %v587
      %v602 = vpack.c.b16 %v590, %v589
      %v603 = vpack.c.b16 %v592, %v591
      %v604 = vpack.c.b16 %v594, %v593
      %v605 = vpack.c.b16 %v596, %v595
      %v606 = vpack.c.b16 %v598, %v597
      %v679 = vunpack.c.l.b16 %v461
      %v680 = vunpack.c.h.b16 %v461
      %v681 = vunpack.c.l.b16 %v462
      %v682 = vunpack.c.h.b16 %v462
      %v683 = vunpack.c.l.b16 %v463
      %v684 = vunpack.c.h.b16 %v463
      %v685 = vunpack.c.l.b16 %v464
      %v686 = vunpack.c.h.b16 %v464
      %v687 = vunpack.c.l.b16 %v465
      %v688 = vunpack.c.h.b16 %v465
      %v689 = vunpack.c.l.b16 %v466
      %v690 = vunpack.c.h.b16 %v466
      %v691 = vunpack.c.l.b16 %v467
      %v692 = vunpack.c.h.b16 %v467
      %v693 = vunpack.c.l.b16 %v468
      %v694 = vunpack.c.h.b16 %v468
      %v695 = vunpack.c.l.b16 %v469
      %v696 = vunpack.c.h.b16 %v469
      %v697 = vunpack.c.l.b16 %v470
      %v698 = vunpack.c.h.b16 %v470
      %v699 = vunpack.c.l.b16 %v471
      %v700 = vunpack.c.h.b16 %v471
      %v701 = vunpack.c.l.b16 %v472
      %v702 = vunpack.c.h.b16 %v472
      %v703 = vunpack.c.l.b16 %v473
      %v704 = vunpack.c.h.b16 %v473
      %v705 = vunpack.c.l.b16 %v474
      %v706 = vunpack.c.h.b16 %v474
      %v707 = vunpack.c.l.b16 %v475
      %v708 = vunpack.c.h.b16 %v475
      %v709 = vunpack.c.l.b16 %v476
      %v710 = vunpack.c.h.b16 %v476
      %v711 = vunpack.c.l.b16 %v477
      %v712 = vunpack.c.h.b16 %v477
      %v713 = vunpack.c.l.b16 %v478
      %v714 = vunpack.c.h.b16 %v478
      %v715 = vunpack.c.l.b16 %v479
      %v716 = vunpack.c.h.b16 %v479
      %v717 = vunpack.c.l.b16 %v480
      %v718 = vunpack.c.h.b16 %v480
      %v719 = vunpack.c.l.b16 %v481
      %v720 = vunpack.c.h.b16 %v481
      %v721 = vunpack.c.l.b16 %v482
      %v722 = vunpack.c.h.b16 %v482
      %v723 = vunpack.c.l.b16 %v483
      %v724 = vunpack.c.h.b16 %v483
      %v725 = vunpack.c.l.b16 %v484
      %v726 = vunpack.c.h.b16 %v484
      %v727 = vunpack.c.l.b16 %v485
      %v728 = vunpack.c.h.b16 %v485
      %v729 = vunpack.c.l.b16 %v486
      %v730 = vunpack.c.h.b16 %v486
      %v731 = vunpack.c.l.b16 %v487
      %v732 = vunpack.c.h.b16 %v487
      %v733 = vunpack.c.l.b16 %v488
      %v734 = vunpack.c.h.b16 %v488
      %v735 = vunpack.c.l.b16 %v489
      %v736 = vunpack.c.h.b16 %v489
      %v737 = vunpack.c.l.b16 %v490
      %v738 = vunpack.c.h.b16 %v490
      %v739 = vunpack.c.l.b16 %v491
      %v740 = vunpack.c.h.b16 %v491
      %v741 = vunpack.c.l.b16 %v492
      %v742 = vunpack.c.h.b16 %v492
      %v743 = vunpack.c.l.b16 %v493
      %v744 = vunpack.c.h.b16 %v493
      %v745 = vunpack.c.l.b16 %v494
      %v746 = vunpack.c.h.b16 %v494
      %v747 = vunpack.c.l.b16 %v495
      %v748 = vunpack.c.h.b16 %v495
      %v749 = vunpack.c.l.b16 %v496
      %v750 = vunpack.c.h.b16 %v496
      %v751 = vunpack.c.l.b16 %v497
      %v752 = vunpack.c.h.b16 %v497
      %v753 = vunpack.c.l.b16 %v498
      %v754 = vunpack.c.h.b16 %v498
      %v755 = vunpack.c.l.b16 %v499
      %v756 = vunpack.c.h.b16 %v499
      %v757 = vunpack.c.l.b16 %v500
      %v758 = vunpack.c.h.b16 %v500
      %v759 = vunpack.c.l.b16 %v501
      %v760 = vunpack.c.h.b16 %v501
      %v761 = vunpack.c.l.b16 %v502
      %v762 = vunpack.c.h.b16 %v502
      %v763 = vunpack.c.l.b16 %v503
      %v764 = vunpack.c.h.b16 %v503
      %v765 = vunpack.c.l.b16 %v504
      %v766 = vunpack.c.h.b16 %v504
      %v767 = vunpack.c.l.b16 %v505
      %v768 = vunpack.c.h.b16 %v505
      %v769 = vunpack.c.l.b16 %v506
      %v770 = vunpack.c.h.b16 %v506
      %v771 = vunpack.c.l.b16 %v507
      %v772 = vunpack.c.h.b16 %v507
      %v773 = vunpack.c.l.b16 %v508
      %v774 = vunpack.c.h.b16 %v508
      %v775 = vunpack.c.l.b16 %v509
      %v776 = vunpack.c.h.b16 %v509
      %v777 = vunpack.c.l.b16 %v510
      %v778 = vunpack.c.h.b16 %v510
      %v779 = vunpack.c.l.b16 %v511
      %v780 = vunpack.c.h.b16 %v511
      %v781 = vunpack.c.l.b16 %v512
      %v782 = vunpack.c.h.b16 %v512
      %v783 = vunpack.c.l.b16 %v513
      %v784 = vunpack.c.h.b16 %v513
      %v785 = vunpack.c.l.b16 %v514
      %v786 = vunpack.c.h.b16 %v514
      %v787 = vunpack.c.l.b16 %v515
      %v788 = vunpack.c.h.b16 %v515
      %v789 = vunpack.c.l.b16 %v516
      %v790 = vunpack.c.h.b16 %v516
      %v791 = vunpack.c.l.b16 %v517
      %v792 = vunpack.c.h.b16 %v517
      %v793 = vunpack.c.l.b16 %v518
      %v794 = vunpack.c.h.b16 %v518
      %v795 = vunpack.c.l.b16 %v519
      %v796 = vunpack.c.h.b16 %v519
      %v797 = vunpack.c.l.b16 %v520
      %v798 = vunpack.c.h.b16 %v520
      %v799 = vunpack.c.l.b16 %v521
      %v800 = vunpack.c.h.b16 %v521
      %v801 = vunpack.c.l.b16 %v522
      %v802 = vunpack.c.h.b16 %v522
      %v803 = vunpack.c.l.b16 %v523
      %v804 = vunpack.c.h.b16 %v523
      %v805 = vunpack.c.l.b16 %v524
      %v806 = vunpack.c.h.b16 %v524
      %v807 = vpack.c.b16 %v687, %v679
      %v808 = vpack.c.b16 %v688, %v680
      %v809 = vpack.c.b16 %v689, %v681
      %v810 = vpack.c.b16 %v690, %v682
      %v811 = vpack.c.b16 %v691, %v683
      %v812 = vpack.c.b16 %v692, %v684
      %v813 = vpack.c.b16 %v693, %v685
      %v814 = vpack.c.b16 %v694, %v686
      %v815 = vpack.c.b16 %v703, %v695
      %v816 = vpack.c.b16 %v704, %v696
      %v817 = vpack.c.b16 %v705, %v697
      %v818 = vpack.c.b16 %v706, %v698
      %v819 = vpack.c.b16 %v707, %v699
      %v820 = vpack.c.b16 %v708, %v700
      %v821 = vpack.c.b16 %v709, %v701
      %v822 = vpack.c.b16 %v710, %v702
      %v823 = vpack.c.b16 %v719, %v711
      %v824 = vpack.c.b16 %v720, %v712
      %v825 = vpack.c.b16 %v721, %v713
      %v826 = vpack.c.b16 %v722, %v714
      %v827 = vpack.c.b16 %v723, %v715
      %v828 = vpack.c.b16 %v724, %v716
      %v829 = vpack.c.b16 %v725, %v717
      %v830 = vpack.c.b16 %v726, %v718
      %v831 = vpack.c.b16 %v735, %v727
      %v832 = vpack.c.b16 %v736, %v728
      %v833 = vpack.c.b16 %v737, %v729
      %v834 = vpack.c.b16 %v738, %v730
      %v835 = vpack.c.b16 %v739, %v731
      %v836 = vpack.c.b16 %v740, %v732
      %v837 = vpack.c.b16 %v741, %v733
      %v838 = vpack.c.b16 %v742, %v734
      %v839 = vpack.c.b16 %v751, %v743
      %v840 = vpack.c.b16 %v752, %v744
      %v841 = vpack.c.b16 %v753, %v745
      %v842 = vpack.c.b16 %v754, %v746
      %v843 = vpack.c.b16 %v755, %v747
      %v844 = vpack.c.b16 %v756, %v748
      %v845 = vpack.c.b16 %v757, %v749
      %v846 = vpack.c.b16 %v758, %v750
      %v847 = vpack.c.b16 %v767, %v759
      %v848 = vpack.c.b16 %v768, %v760
      %v849 = vpack.c.b16 %v769, %v761
      %v850 = vpack.c.b16 %v770, %v762
      %v851 = vpack.c.b16 %v771, %v763
      %v852 = vpack.c.b16 %v772, %v764
      %v853 = vpack.c.b16 %v773, %v765
      %v854 = vpack.c.b16 %v774, %v766
      %v855 = vpack.c.b16 %v783, %v775
      %v856 = vpack.c.b16 %v784, %v776
      %v857 = vpack.c.b16 %v785, %v777
      %v858 = vpack.c.b16 %v786, %v778
      %v859 = vpack.c.b16 %v787, %v779
      %v860 = vpack.c.b16 %v788, %v780
      %v861 = vpack.c.b16 %v789, %v781
      %v862 = vpack.c.b16 %v790, %v782
      %v863 = vpack.c.b16 %v799, %v791
      %v864 = vpack.c.b16 %v800, %v792
      %v865 = vpack.c.b16 %v801, %v793
      %v866 = vpack.c.b16 %v802, %v794
      %v867 = vpack.c.b16 %v803, %v795
      %v868 = vpack.c.b16 %v804, %v796
      %v869 = vpack.c.b16 %v805, %v797
      %v870 = vpack.c.b16 %v806, %v798
      %935 = vmatprep.subr.bf16.mxu0 %v808
      %936 = vmatpush1.bf16.msra.mxu0 %v807
      %937 = vmatprep.subr.bf16.mxu0 %v816
      %938 = vmatpush1.bf16.msra.mxu0 %v815
      %939 = vmatprep.subr.bf16.mxu0 %v824
      %940 = vmatpush1.bf16.msra.mxu0 %v823
      %941 = vmatprep.subr.bf16.mxu0 %v832
      %942 = vmatpush1.bf16.msra.mxu0 %v831
      %943 = vmatprep.subr.bf16.mxu0 %v840
      %944 = vmatpush1.bf16.msra.mxu0 %v839
      %945 = vmatprep.subr.bf16.mxu0 %v848
      %946 = vmatpush1.bf16.msra.mxu0 %v847
      %947 = vmatprep.subr.bf16.mxu0 %v856
      %948 = vmatpush1.bf16.msra.mxu0 %v855
      %949 = vmatprep.subr.bf16.mxu0 %v864
      %950 = vmatpush1.bf16.msra.mxu0 %v863
      %951 = vmatprep.subr.bf16.mxu0 0
      %952 = vmatpush1.bf16.msra.mxu0 0
      %953 = vmatprep.subr.bf16.mxu0 0
      %954 = vmatpush1.bf16.msra.mxu0 0
      %955 = vmatprep.subr.bf16.mxu0 0
      %956 = vmatpush1.bf16.msra.mxu0 0
      %957 = vmatprep.subr.bf16.mxu0 0
      %958 = vmatpush1.bf16.msra.mxu0 0
      %959 = vmatprep.subr.bf16.mxu0 0
      %960 = vmatpush1.bf16.msra.mxu0 0
      %961 = vmatprep.subr.bf16.mxu0 0
      %962 = vmatpush1.bf16.msra.mxu0 0
      %963 = vmatprep.subr.bf16.mxu0 0
      %964 = vmatpush1.bf16.msra.mxu0 0
      %965 = vmatprep.subr.bf16.mxu0 0
      %966 = vmatpush1.bf16.msra.mxu0 0
      %967 = vmatprep.mubr.bf16.mxu0 0
      %968 = vmatmul.mubr.bf16.gmra.mrb[0].mxu0 %v599
      %v969 = vpop.f32.mrb[0].mxu0
      %v970 = vadd.f32 %v530, %v969
      %v971 = vpop.f32.mrb[0].mxu0
      %v972 = vadd.f32 %v534, %v971
      %v973 = vpop.f32.mrb[0].mxu0
      %v974 = vadd.f32 %v530, %v973
      %v975 = vpop.f32.mrb[0].mxu0
      %v976 = vadd.f32 %v534, %v975
      %977 = vmatprep.mubr.bf16.mxu0 0
      %978 = vmatmul.mubr.bf16.gmra.mrb[0].mxu0 %v600
      %v979 = vpop.f32.mrb[0].mxu0
      %v980 = vadd.f32 %v530, %v979
      %v981 = vpop.f32.mrb[0].mxu0
      %v982 = vadd.f32 %v534, %v981
      %v983 = vpop.f32.mrb[0].mxu0
      %v984 = vadd.f32 %v530, %v983
      %v985 = vpop.f32.mrb[0].mxu0
      %v986 = vadd.f32 %v534, %v985
      %987 = vmatprep.mubr.bf16.mxu0 0
      %988 = vmatmul.mubr.bf16.gmra.mrb[0].mxu0 %v601
      %v989 = vpop.f32.mrb[0].mxu0
      %v990 = vadd.f32 %v530, %v989
      %v991 = vpop.f32.mrb[0].mxu0
      %v992 = vadd.f32 %v534, %v991
      %v993 = vpop.f32.mrb[0].mxu0
      %v994 = vadd.f32 %v530, %v993
      %v995 = vpop.f32.mrb[0].mxu0
      %v996 = vadd.f32 %v534, %v995
      %997 = vmatprep.mubr.bf16.mxu0 0
      %998 = vmatmul.mubr.bf16.gmra.mrb[0].mxu0 %v602
      %v999 = vpop.f32.mrb[0].mxu0
      %v1000 = vadd.f32 %v530, %v999
      %v1001 = vpop.f32.mrb[0].mxu0
      %v1002 = vadd.f32 %v534, %v1001
      %v1003 = vpop.f32.mrb[0].mxu0
      %v1004 = vadd.f32 %v530, %v1003
      %v1005 = vpop.f32.mrb[0].mxu0
      %v1006 = vadd.f32 %v534, %v1005
      %1007 = vmatprep.mubr.bf16.mxu0 0
      %1008 = vmatmul.mubr.bf16.gmra.mrb[0].mxu0 %v603
      %v1009 = vpop.f32.mrb[0].mxu0
      %v1010 = vadd.f32 %v530, %v1009
      %v1011 = vpop.f32.mrb[0].mxu0
      %v1012 = vadd.f32 %v534, %v1011
      %v1013 = vpop.f32.mrb[0].mxu0
      %v1014 = vadd.f32 %v530, %v1013
      %v1015 = vpop.f32.mrb[0].mxu0
      %v1016 = vadd.f32 %v534, %v1015
      %1017 = vmatprep.mubr.bf16.mxu0 0
      %1018 = vmatmul.mubr.bf16.gmra.mrb[0].mxu0 %v604
      %v1019 = vpop.f32.mrb[0].mxu0
      %v1020 = vadd.f32 %v530, %v1019
      %v1021 = vpop.f32.mrb[0].mxu0
      %v1022 = vadd.f32 %v534, %v1021
      %v1023 = vpop.f32.mrb[0].mxu0
      %v1024 = vadd.f32 %v530, %v1023
      %v1025 = vpop.f32.mrb[0].mxu0
      %v1026 = vadd.f32 %v534, %v1025
      %1027 = vmatprep.mubr.bf16.mxu0 0
      %1028 = vmatmul.mubr.bf16.gmra.mrb[0].mxu0 %v605
      %v1029 = vpop.f32.mrb[0].mxu0
      %v1030 = vadd.f32 %v530, %v1029
      %v1031 = vpop.f32.mrb[0].mxu0
      %v1032 = vadd.f32 %v534, %v1031
      %v1033 = vpop.f32.mrb[0].mxu0
      %v1034 = vadd.f32 %v530, %v1033
      %v1035 = vpop.f32.mrb[0].mxu0
      %v1036 = vadd.f32 %v534, %v1035
      %1037 = vmatprep.mubr.bf16.mxu0 0
      %1038 = vmatmul.mubr.bf16.gmra.mrb[0].mxu0 %v606
      %v1039 = vpop.f32.mrb[0].mxu0
      %v1040 = vadd.f32 %v530, %v1039
      %v1041 = vpop.f32.mrb[0].mxu0
      %v1042 = vadd.f32 %v534, %v1041
      %v1043 = vpop.f32.mrb[0].mxu0
      %v1044 = vadd.f32 %v530, %v1043
      %v1045 = vpop.f32.mrb[0].mxu0
      %v1046 = vadd.f32 %v534, %v1045
      %1047 = vdwg.mxu0
      %1048 = vmatprep.subr.bf16.mxu0 %v810
      %1049 = vmatpush1.bf16.msra.mxu0 %v809
      %1050 = vmatprep.subr.bf16.mxu0 %v818
      %1051 = vmatpush1.bf16.msra.mxu0 %v817
      %1052 = vmatprep.subr.bf16.mxu0 %v826
      %1053 = vmatpush1.bf16.msra.mxu0 %v825
      %1054 = vmatprep.subr.bf16.mxu0 %v834
      %1055 = vmatpush1.bf16.msra.mxu0 %v833
      %1056 = vmatprep.subr.bf16.mxu0 %v842
      %1057 = vmatpush1.bf16.msra.mxu0 %v841
      %1058 = vmatprep.subr.bf16.mxu0 %v850
      %1059 = vmatpush1.bf16.msra.mxu0 %v849
      %1060 = vmatprep.subr.bf16.mxu0 %v858
      %1061 = vmatpush1.bf16.msra.mxu0 %v857
      %1062 = vmatprep.subr.bf16.mxu0 %v866
      %1063 = vmatpush1.bf16.msra.mxu0 %v865
      %1064 = vmatprep.subr.bf16.mxu0 0
      %1065 = vmatpush1.bf16.msra.mxu0 0
      %1066 = vmatprep.subr.bf16.mxu0 0
      %1067 = vmatpush1.bf16.msra.mxu0 0
      %1068 = vmatprep.subr.bf16.mxu0 0
      %1069 = vmatpush1.bf16.msra.mxu0 0
      %1070 = vmatprep.subr.bf16.mxu0 0
      %1071 = vmatpush1.bf16.msra.mxu0 0
      %1072 = vmatprep.subr.bf16.mxu0 0
      %1073 = vmatpush1.bf16.msra.mxu0 0
      %1074 = vmatprep.subr.bf16.mxu0 0
      %1075 = vmatpush1.bf16.msra.mxu0 0
      %1076 = vmatprep.subr.bf16.mxu0 0
      %1077 = vmatpush1.bf16.msra.mxu0 0
      %1078 = vmatprep.subr.bf16.mxu0 0
      %1079 = vmatpush1.bf16.msra.mxu0 0
      %1080 = vmatprep.mubr.bf16.mxu0 0
      %1081 = vmatmul.mubr.bf16.gmra.mrb[0].mxu0 %v599
      %v1082 = vpop.f32.mrb[0].mxu0
      %v1083 = vadd.f32 %v538, %v1082
      %v1084 = vpop.f32.mrb[0].mxu0
      %v1085 = vadd.f32 %v542, %v1084
      %v1086 = vpop.f32.mrb[0].mxu0
      %v1087 = vadd.f32 %v538, %v1086
      %v1088 = vpop.f32.mrb[0].mxu0
      %v1089 = vadd.f32 %v542, %v1088
      %1090 = vmatprep.mubr.bf16.mxu0 0
      %1091 = vmatmul.mubr.bf16.gmra.mrb[0].mxu0 %v600
      %v1092 = vpop.f32.mrb[0].mxu0
      %v1093 = vadd.f32 %v538, %v1092
      %v1094 = vpop.f32.mrb[0].mxu0
      %v1095 = vadd.f32 %v542, %v1094
      %v1096 = vpop.f32.mrb[0].mxu0
      %v1097 = vadd.f32 %v538, %v1096
      %v1098 = vpop.f32.mrb[0].mxu0
      %v1099 = vadd.f32 %v542, %v1098
      %1100 = vmatprep.mubr.bf16.mxu0 0
      %1101 = vmatmul.mubr.bf16.gmra.mrb[0].mxu0 %v601
      %v1102 = vpop.f32.mrb[0].mxu0
      %v1103 = vadd.f32 %v538, %v1102
      %v1104 = vpop.f32.mrb[0].mxu0
      %v1105 = vadd.f32 %v542, %v1104
      %v1106 = vpop.f32.mrb[0].mxu0
      %v1107 = vadd.f32 %v538, %v1106
      %v1108 = vpop.f32.mrb[0].mxu0
      %v1109 = vadd.f32 %v542, %v1108
      %1110 = vmatprep.mubr.bf16.mxu0 0
      %1111 = vmatmul.mubr.bf16.gmra.mrb[0].mxu0 %v602
      %v1112 = vpop.f32.mrb[0].mxu0
      %v1113 = vadd.f32 %v538, %v1112
      %v1114 = vpop.f32.mrb[0].mxu0
      %v1115 = vadd.f32 %v542, %v1114
      %v1116 = vpop.f32.mrb[0].mxu0
      %v1117 = vadd.f32 %v538, %v1116
      %v1118 = vpop.f32.mrb[0].mxu0
      %v1119 = vadd.f32 %v542, %v1118
      %1120 = vmatprep.mubr.bf16.mxu0 0
      %1121 = vmatmul.mubr.bf16.gmra.mrb[0].mxu0 %v603
      %v1122 = vpop.f32.mrb[0].mxu0
      %v1123 = vadd.f32 %v538, %v1122
      %v1124 = vpop.f32.mrb[0].mxu0
      %v1125 = vadd.f32 %v542, %v1124
      %v1126 = vpop.f32.mrb[0].mxu0
      %v1127 = vadd.f32 %v538, %v1126
      %v1128 = vpop.f32.mrb[0].mxu0
      %v1129 = vadd.f32 %v542, %v1128
      %1130 = vmatprep.mubr.bf16.mxu0 0
      %1131 = vmatmul.mubr.bf16.gmra.mrb[0].mxu0 %v604
      %v1132 = vpop.f32.mrb[0].mxu0
      %v1133 = vadd.f32 %v538, %v1132
      %v1134 = vpop.f32.mrb[0].mxu0
      %v1135 = vadd.f32 %v542, %v1134
      %v1136 = vpop.f32.mrb[0].mxu0
      %v1137 = vadd.f32 %v538, %v1136
      %v1138 = vpop.f32.mrb[0].mxu0
      %v1139 = vadd.f32 %v542, %v1138
      %1140 = vmatprep.mubr.bf16.mxu0 0
      %1141 = vmatmul.mubr.bf16.gmra.mrb[0].mxu0 %v605
      %v1142 = vpop.f32.mrb[0].mxu0
      %v1143 = vadd.f32 %v538, %v1142
      %v1144 = vpop.f32.mrb[0].mxu0
      %v1145 = vadd.f32 %v542, %v1144
      %v1146 = vpop.f32.mrb[0].mxu0
      %v1147 = vadd.f32 %v538, %v1146
      %v1148 = vpop.f32.mrb[0].mxu0
      %v1149 = vadd.f32 %v542, %v1148
      %1150 = vmatprep.mubr.bf16.mxu0 0
      %1151 = vmatmul.mubr.bf16.gmra.mrb[0].mxu0 %v606
      %v1152 = vpop.f32.mrb[0].mxu0
      %v1153 = vadd.f32 %v538, %v1152
      %v1154 = vpop.f32.mrb[0].mxu0
      %v1155 = vadd.f32 %v542, %v1154
      %v1156 = vpop.f32.mrb[0].mxu0
      %v1157 = vadd.f32 %v538, %v1156
      %v1158 = vpop.f32.mrb[0].mxu0
      %v1159 = vadd.f32 %v542, %v1158
      %1160 = vdwg.mxu0
      %1161 = vmatprep.subr.bf16.mxu0 %v812
      %1162 = vmatpush1.bf16.msra.mxu0 %v811
      %1163 = vmatprep.subr.bf16.mxu0 %v820
      %1164 = vmatpush1.bf16.msra.mxu0 %v819
      %1165 = vmatprep.subr.bf16.mxu0 %v828
      %1166 = vmatpush1.bf16.msra.mxu0 %v827
      %1167 = vmatprep.subr.bf16.mxu0 %v836
      %1168 = vmatpush1.bf16.msra.mxu0 %v835
      %1169 = vmatprep.subr.bf16.mxu0 %v844
      %1170 = vmatpush1.bf16.msra.mxu0 %v843
      %1171 = vmatprep.subr.bf16.mxu0 %v852
      %1172 = vmatpush1.bf16.msra.mxu0 %v851
      %1173 = vmatprep.subr.bf16.mxu0 %v860
      %1174 = vmatpush1.bf16.msra.mxu0 %v859
      %1175 = vmatprep.subr.bf16.mxu0 %v868
      %1176 = vmatpush1.bf16.msra.mxu0 %v867
      %1177 = vmatprep.subr.bf16.mxu0 0
      %1178 = vmatpush1.bf16.msra.mxu0 0
      %1179 = vmatprep.subr.bf16.mxu0 0
      %1180 = vmatpush1.bf16.msra.mxu0 0
      %1181 = vmatprep.subr.bf16.mxu0 0
      %1182 = vmatpush1.bf16.msra.mxu0 0
      %1183 = vmatprep.subr.bf16.mxu0 0
      %1184 = vmatpush1.bf16.msra.mxu0 0
      %1185 = vmatprep.subr.bf16.mxu0 0
      %1186 = vmatpush1.bf16.msra.mxu0 0
      %1187 = vmatprep.subr.bf16.mxu0 0
      %1188 = vmatpush1.bf16.msra.mxu0 0
      %1189 = vmatprep.subr.bf16.mxu0 0
      %1190 = vmatpush1.bf16.msra.mxu0 0
      %1191 = vmatprep.subr.bf16.mxu0 0
      %1192 = vmatpush1.bf16.msra.mxu0 0
      %1193 = vmatprep.mubr.bf16.mxu0 0
      %1194 = vmatmul.mubr.bf16.gmra.mrb[0].mxu0 %v599
      %v1195 = vpop.f32.mrb[0].mxu0
      %v1196 = vadd.f32 %v546, %v1195
      %v1197 = vpop.f32.mrb[0].mxu0
      %v1198 = vadd.f32 %v550, %v1197
      %v1199 = vpop.f32.mrb[0].mxu0
      %v1200 = vadd.f32 %v546, %v1199
      %v1201 = vpop.f32.mrb[0].mxu0
      %v1202 = vadd.f32 %v550, %v1201
      %1203 = vmatprep.mubr.bf16.mxu0 0
      %1204 = vmatmul.mubr.bf16.gmra.mrb[0].mxu0 %v600
      %v1205 = vpop.f32.mrb[0].mxu0
      %v1206 = vadd.f32 %v546, %v1205
      %v1207 = vpop.f32.mrb[0].mxu0
      %v1208 = vadd.f32 %v550, %v1207
      %v1209 = vpop.f32.mrb[0].mxu0
      %v1210 = vadd.f32 %v546, %v1209
      %v1211 = vpop.f32.mrb[0].mxu0
      %v1212 = vadd.f32 %v550, %v1211
      %1213 = vmatprep.mubr.bf16.mxu0 0
      %1214 = vmatmul.mubr.bf16.gmra.mrb[0].mxu0 %v601
      %v1215 = vpop.f32.mrb[0].mxu0
      %v1216 = vadd.f32 %v546, %v1215
      %v1217 = vpop.f32.mrb[0].mxu0
      %v1218 = vadd.f32 %v550, %v1217
      %v1219 = vpop.f32.mrb[0].mxu0
      %v1220 = vadd.f32 %v546, %v1219
      %v1221 = vpop.f32.mrb[0].mxu0
      %v1222 = vadd.f32 %v550, %v1221
      %1223 = vmatprep.mubr.bf16.mxu0 0
      %1224 = vmatmul.mubr.bf16.gmra.mrb[0].mxu0 %v602
      %v1225 = vpop.f32.mrb[0].mxu0
      %v1226 = vadd.f32 %v546, %v1225
      %v1227 = vpop.f32.mrb[0].mxu0
      %v1228 = vadd.f32 %v550, %v1227
      %v1229 = vpop.f32.mrb[0].mxu0
      %v1230 = vadd.f32 %v546, %v1229
      %v1231 = vpop.f32.mrb[0].mxu0
      %v1232 = vadd.f32 %v550, %v1231
      %1233 = vmatprep.mubr.bf16.mxu0 0
      %1234 = vmatmul.mubr.bf16.gmra.mrb[0].mxu0 %v603
      %v1235 = vpop.f32.mrb[0].mxu0
      %v1236 = vadd.f32 %v546, %v1235
      %v1237 = vpop.f32.mrb[0].mxu0
      %v1238 = vadd.f32 %v550, %v1237
      %v1239 = vpop.f32.mrb[0].mxu0
      %v1240 = vadd.f32 %v546, %v1239
      %v1241 = vpop.f32.mrb[0].mxu0
      %v1242 = vadd.f32 %v550, %v1241
      %1243 = vmatprep.mubr.bf16.mxu0 0
      %1244 = vmatmul.mubr.bf16.gmra.mrb[0].mxu0 %v604
      %v1245 = vpop.f32.mrb[0].mxu0
      %v1246 = vadd.f32 %v546, %v1245
      %v1247 = vpop.f32.mrb[0].mxu0
      %v1248 = vadd.f32 %v550, %v1247
      %v1249 = vpop.f32.mrb[0].mxu0
      %v1250 = vadd.f32 %v546, %v1249
      %v1251 = vpop.f32.mrb[0].mxu0
      %v1252 = vadd.f32 %v550, %v1251
      %1253 = vmatprep.mubr.bf16.mxu0 0
      %1254 = vmatmul.mubr.bf16.gmra.mrb[0].mxu0 %v605
      %v1255 = vpop.f32.mrb[0].mxu0
      %v1256 = vadd.f32 %v546, %v1255
      %v1257 = vpop.f32.mrb[0].mxu0
      %v1258 = vadd.f32 %v550, %v1257
      %v1259 = vpop.f32.mrb[0].mxu0
      %v1260 = vadd.f32 %v546, %v1259
      %v1261 = vpop.f32.mrb[0].mxu0
      %v1262 = vadd.f32 %v550, %v1261
      %1263 = vmatprep.mubr.bf16.mxu0 0
      %1264 = vmatmul.mubr.bf16.gmra.mrb[0].mxu0 %v606
      %v1265 = vpop.f32.mrb[0].mxu0
      %v1266 = vadd.f32 %v546, %v1265
      %v1267 = vpop.f32.mrb[0].mxu0
      %v1268 = vadd.f32 %v550, %v1267
      %v1269 = vpop.f32.mrb[0].mxu0
      %v1270 = vadd.f32 %v546, %v1269
      %v1271 = vpop.f32.mrb[0].mxu0
      %v1272 = vadd.f32 %v550, %v1271
      %1273 = vdwg.mxu0
      %1274 = vmatprep.subr.bf16.mxu0 %v814
      %1275 = vmatpush1.bf16.msra.mxu0 %v813
      %1276 = vmatprep.subr.bf16.mxu0 %v822
      %1277 = vmatpush1.bf16.msra.mxu0 %v821
      %1278 = vmatprep.subr.bf16.mxu0 %v830
      %1279 = vmatpush1.bf16.msra.mxu0 %v829
      %1280 = vmatprep.subr.bf16.mxu0 %v838
      %1281 = vmatpush1.bf16.msra.mxu0 %v837
      %1282 = vmatprep.subr.bf16.mxu0 %v846
      %1283 = vmatpush1.bf16.msra.mxu0 %v845
      %1284 = vmatprep.subr.bf16.mxu0 %v854
      %1285 = vmatpush1.bf16.msra.mxu0 %v853
      %1286 = vmatprep.subr.bf16.mxu0 %v862
      %1287 = vmatpush1.bf16.msra.mxu0 %v861
      %1288 = vmatprep.subr.bf16.mxu0 %v870
      %1289 = vmatpush1.bf16.msra.mxu0 %v869
      %1290 = vmatprep.subr.bf16.mxu0 0
      %1291 = vmatpush1.bf16.msra.mxu0 0
      %1292 = vmatprep.subr.bf16.mxu0 0
      %1293 = vmatpush1.bf16.msra.mxu0 0
      %1294 = vmatprep.subr.bf16.mxu0 0
      %1295 = vmatpush1.bf16.msra.mxu0 0
      %1296 = vmatprep.subr.bf16.mxu0 0
      %1297 = vmatpush1.bf16.msra.mxu0 0
      %1298 = vmatprep.subr.bf16.mxu0 0
      %1299 = vmatpush1.bf16.msra.mxu0 0
      %1300 = vmatprep.subr.bf16.mxu0 0
      %1301 = vmatpush1.bf16.msra.mxu0 0
      %1302 = vmatprep.subr.bf16.mxu0 0
      %1303 = vmatpush1.bf16.msra.mxu0 0
      %1304 = vmatprep.subr.bf16.mxu0 0
      %1305 = vmatpush1.bf16.msra.mxu0 0
      %1306 = vmatprep.mubr.bf16.mxu0 0
      %1307 = vmatmul.mubr.bf16.gmra.mrb[0].mxu0 %v599
      %v1308 = vpop.f32.mrb[0].mxu0
      %v1309 = vadd.f32 %v554, %v1308
      %v1310 = vpop.f32.mrb[0].mxu0
      %v1311 = vadd.f32 %v558, %v1310
      %v1312 = vpop.f32.mrb[0].mxu0
      %v1313 = vadd.f32 %v554, %v1312
      %v1314 = vpop.f32.mrb[0].mxu0
      %v1315 = vadd.f32 %v558, %v1314
      %1316 = vmatprep.mubr.bf16.mxu0 0
      %1317 = vmatmul.mubr.bf16.gmra.mrb[0].mxu0 %v600
      %v1318 = vpop.f32.mrb[0].mxu0
      %v1319 = vadd.f32 %v554, %v1318
      %v1320 = vpop.f32.mrb[0].mxu0
      %v1321 = vadd.f32 %v558, %v1320
      %v1322 = vpop.f32.mrb[0].mxu0
      %v1323 = vadd.f32 %v554, %v1322
      %v1324 = vpop.f32.mrb[0].mxu0
      %v1325 = vadd.f32 %v558, %v1324
      %1326 = vmatprep.mubr.bf16.mxu0 0
      %1327 = vmatmul.mubr.bf16.gmra.mrb[0].mxu0 %v601
      %v1328 = vpop.f32.mrb[0].mxu0
      %v1329 = vadd.f32 %v554, %v1328
      %v1330 = vpop.f32.mrb[0].mxu0
      %v1331 = vadd.f32 %v558, %v1330
      %v1332 = vpop.f32.mrb[0].mxu0
      %v1333 = vadd.f32 %v554, %v1332
      %v1334 = vpop.f32.mrb[0].mxu0
      %v1335 = vadd.f32 %v558, %v1334
      %1336 = vmatprep.mubr.bf16.mxu0 0
      %1337 = vmatmul.mubr.bf16.gmra.mrb[0].mxu0 %v602
      %v1338 = vpop.f32.mrb[0].mxu0
      %v1339 = vadd.f32 %v554, %v1338
      %v1340 = vpop.f32.mrb[0].mxu0
      %v1341 = vadd.f32 %v558, %v1340
      %v1342 = vpop.f32.mrb[0].mxu0
      %v1343 = vadd.f32 %v554, %v1342
      %v1344 = vpop.f32.mrb[0].mxu0
      %v1345 = vadd.f32 %v558, %v1344
      %1346 = vmatprep.mubr.bf16.mxu0 0
      %1347 = vmatmul.mubr.bf16.gmra.mrb[0].mxu0 %v603
      %v1348 = vpop.f32.mrb[0].mxu0
      %v1349 = vadd.f32 %v554, %v1348
      %v1350 = vpop.f32.mrb[0].mxu0
      %v1351 = vadd.f32 %v558, %v1350
      %v1352 = vpop.f32.mrb[0].mxu0
      %v1353 = vadd.f32 %v554, %v1352
      %v1354 = vpop.f32.mrb[0].mxu0
      %v1355 = vadd.f32 %v558, %v1354
      %1356 = vmatprep.mubr.bf16.mxu0 0
      %1357 = vmatmul.mubr.bf16.gmra.mrb[0].mxu0 %v604
      %v1358 = vpop.f32.mrb[0].mxu0
      %v1359 = vadd.f32 %v554, %v1358
      %v1360 = vpop.f32.mrb[0].mxu0
      %v1361 = vadd.f32 %v558, %v1360
      %v1362 = vpop.f32.mrb[0].mxu0
      %v1363 = vadd.f32 %v554, %v1362
      %v1364 = vpop.f32.mrb[0].mxu0
      %v1365 = vadd.f32 %v558, %v1364
      %1366 = vmatprep.mubr.bf16.mxu0 0
      %1367 = vmatmul.mubr.bf16.gmra.mrb[0].mxu0 %v605
      %v1368 = vpop.f32.mrb[0].mxu0
      %v1369 = vadd.f32 %v554, %v1368
      %v1370 = vpop.f32.mrb[0].mxu0
      %v1371 = vadd.f32 %v558, %v1370
      %v1372 = vpop.f32.mrb[0].mxu0
      %v1373 = vadd.f32 %v554, %v1372
      %v1374 = vpop.f32.mrb[0].mxu0
      %v1375 = vadd.f32 %v558, %v1374
      %1376 = vmatprep.mubr.bf16.mxu0 0
      %1377 = vmatmul.mubr.bf16.gmra.mrb[0].mxu0 %v606
      %v1378 = vpop.f32.mrb[0].mxu0
      %v1379 = vadd.f32 %v554, %v1378
      %v1380 = vpop.f32.mrb[0].mxu0
      %v1381 = vadd.f32 %v558, %v1380
      %v1382 = vpop.f32.mrb[0].mxu0
      %v1383 = vadd.f32 %v554, %v1382
      %v1384 = vpop.f32.mrb[0].mxu0
      %v1385 = vadd.f32 %v558, %v1384
      %1386 = vdwg.mxu0
      %v1387 = vmax.f32 %v970, 0.0
      %v1388 = vmax.f32 %v972, 0.0
      %v1389 = vmax.f32 %v1083, 0.0
      %v1390 = vmax.f32 %v1085, 0.0
      %v1391 = vmax.f32 %v1196, 0.0
      %v1392 = vmax.f32 %v1198, 0.0
      %v1393 = vmax.f32 %v1309, 0.0
      %v1394 = vmax.f32 %v1311, 0.0
      %v1395 = vmax.f32 %v974, 0.0
      %v1396 = vmax.f32 %v976, 0.0
      %v1397 = vmax.f32 %v1087, 0.0
      %v1398 = vmax.f32 %v1089, 0.0
      %v1399 = vmax.f32 %v1200, 0.0
      %v1400 = vmax.f32 %v1202, 0.0
      %v1401 = vmax.f32 %v1313, 0.0
      %v1402 = vmax.f32 %v1315, 0.0
      %v1403 = vmax.f32 %v980, 0.0
      %v1404 = vmax.f32 %v982, 0.0
      %v1405 = vmax.f32 %v1093, 0.0
      %v1406 = vmax.f32 %v1095, 0.0
      %v1407 = vmax.f32 %v1206, 0.0
      %v1408 = vmax.f32 %v1208, 0.0
      %v1409 = vmax.f32 %v1319, 0.0
      %v1410 = vmax.f32 %v1321, 0.0
      %v1411 = vmax.f32 %v984, 0.0
      %v1412 = vmax.f32 %v986, 0.0
      %v1413 = vmax.f32 %v1097, 0.0
      %v1414 = vmax.f32 %v1099, 0.0
      %v1415 = vmax.f32 %v1210, 0.0
      %v1416 = vmax.f32 %v1212, 0.0
      %v1417 = vmax.f32 %v1323, 0.0
      %v1418 = vmax.f32 %v1325, 0.0
      %v1419 = vmax.f32 %v990, 0.0
      %v1420 = vmax.f32 %v992, 0.0
      %v1421 = vmax.f32 %v1103, 0.0
      %v1422 = vmax.f32 %v1105, 0.0
      %v1423 = vmax.f32 %v1216, 0.0
      %v1424 = vmax.f32 %v1218, 0.0
      %v1425 = vmax.f32 %v1329, 0.0
      %v1426 = vmax.f32 %v1331, 0.0
      %v1427 = vmax.f32 %v994, 0.0
      %v1428 = vmax.f32 %v996, 0.0
      %v1429 = vmax.f32 %v1107, 0.0
      %v1430 = vmax.f32 %v1109, 0.0
      %v1431 = vmax.f32 %v1220, 0.0
      %v1432 = vmax.f32 %v1222, 0.0
      %v1433 = vmax.f32 %v1333, 0.0
      %v1434 = vmax.f32 %v1335, 0.0
      %v1435 = vmax.f32 %v1000, 0.0
      %v1436 = vmax.f32 %v1002, 0.0
      %v1437 = vmax.f32 %v1113, 0.0
      %v1438 = vmax.f32 %v1115, 0.0
      %v1439 = vmax.f32 %v1226, 0.0
      %v1440 = vmax.f32 %v1228, 0.0
      %v1441 = vmax.f32 %v1339, 0.0
      %v1442 = vmax.f32 %v1341, 0.0
      %v1443 = vmax.f32 %v1004, 0.0
      %v1444 = vmax.f32 %v1006, 0.0
      %v1445 = vmax.f32 %v1117, 0.0
      %v1446 = vmax.f32 %v1119, 0.0
      %v1447 = vmax.f32 %v1230, 0.0
      %v1448 = vmax.f32 %v1232, 0.0
      %v1449 = vmax.f32 %v1343, 0.0
      %v1450 = vmax.f32 %v1345, 0.0
      %v1451 = vmax.f32 %v1010, 0.0
      %v1452 = vmax.f32 %v1012, 0.0
      %v1453 = vmax.f32 %v1123, 0.0
      %v1454 = vmax.f32 %v1125, 0.0
      %v1455 = vmax.f32 %v1236, 0.0
      %v1456 = vmax.f32 %v1238, 0.0
      %v1457 = vmax.f32 %v1349, 0.0
      %v1458 = vmax.f32 %v1351, 0.0
      %v1459 = vmax.f32 %v1014, 0.0
      %v1460 = vmax.f32 %v1016, 0.0
      %v1461 = vmax.f32 %v1127, 0.0
      %v1462 = vmax.f32 %v1129, 0.0
      %v1463 = vmax.f32 %v1240, 0.0
      %v1464 = vmax.f32 %v1242, 0.0
      %v1465 = vmax.f32 %v1353, 0.0
      %v1466 = vmax.f32 %v1355, 0.0
      %v1467 = vmax.f32 %v1020, 0.0
      %v1468 = vmax.f32 %v1022, 0.0
      %v1469 = vmax.f32 %v1133, 0.0
      %v1470 = vmax.f32 %v1135, 0.0
      %v1471 = vmax.f32 %v1246, 0.0
      %v1472 = vmax.f32 %v1248, 0.0
      %v1473 = vmax.f32 %v1359, 0.0
      %v1474 = vmax.f32 %v1361, 0.0
      %v1475 = vmax.f32 %v1024, 0.0
      %v1476 = vmax.f32 %v1026, 0.0
      %v1477 = vmax.f32 %v1137, 0.0
      %v1478 = vmax.f32 %v1139, 0.0
      %v1479 = vmax.f32 %v1250, 0.0
      %v1480 = vmax.f32 %v1252, 0.0
      %v1481 = vmax.f32 %v1363, 0.0
      %v1482 = vmax.f32 %v1365, 0.0
      %v1483 = vmax.f32 %v1030, 0.0
      %v1484 = vmax.f32 %v1032, 0.0
      %v1485 = vmax.f32 %v1143, 0.0
      %v1486 = vmax.f32 %v1145, 0.0
      %v1487 = vmax.f32 %v1256, 0.0
      %v1488 = vmax.f32 %v1258, 0.0
      %v1489 = vmax.f32 %v1369, 0.0
      %v1490 = vmax.f32 %v1371, 0.0
      %v1491 = vmax.f32 %v1034, 0.0
      %v1492 = vmax.f32 %v1036, 0.0
      %v1493 = vmax.f32 %v1147, 0.0
      %v1494 = vmax.f32 %v1149, 0.0
      %v1495 = vmax.f32 %v1260, 0.0
      %v1496 = vmax.f32 %v1262, 0.0
      %v1497 = vmax.f32 %v1373, 0.0
      %v1498 = vmax.f32 %v1375, 0.0
      %v1499 = vmax.f32 %v1040, 0.0
      %v1500 = vmax.f32 %v1042, 0.0
      %v1501 = vmax.f32 %v1153, 0.0
      %v1502 = vmax.f32 %v1155, 0.0
      %v1503 = vmax.f32 %v1266, 0.0
      %v1504 = vmax.f32 %v1268, 0.0
      %v1505 = vmax.f32 %v1379, 0.0
      %v1506 = vmax.f32 %v1381, 0.0
      %v1507 = vmax.f32 %v1044, 0.0
      %v1508 = vmax.f32 %v1046, 0.0
      %v1509 = vmax.f32 %v1157, 0.0
      %v1510 = vmax.f32 %v1159, 0.0
      %v1511 = vmax.f32 %v1270, 0.0
      %v1512 = vmax.f32 %v1272, 0.0
      %v1513 = vmax.f32 %v1383, 0.0
      %v1514 = vmax.f32 %v1385, 0.0
      %v1515 = vpack.c.bf16 %v1395, %v1387
      %v1516 = vpack.c.bf16 %v1396, %v1388
      %v1517 = vpack.c.bf16 %v1397, %v1389
      %v1518 = vpack.c.bf16 %v1398, %v1390
      %v1519 = vpack.c.bf16 %v1399, %v1391
      %v1520 = vpack.c.bf16 %v1400, %v1392
      %v1521 = vpack.c.bf16 %v1401, %v1393
      %v1522 = vpack.c.bf16 %v1402, %v1394
      %v1523 = vpack.c.bf16 %v1411, %v1403
      %v1524 = vpack.c.bf16 %v1412, %v1404
      %v1525 = vpack.c.bf16 %v1413, %v1405
      %v1526 = vpack.c.bf16 %v1414, %v1406
      %v1527 = vpack.c.bf16 %v1415, %v1407
      %v1528 = vpack.c.bf16 %v1416, %v1408
      %v1529 = vpack.c.bf16 %v1417, %v1409
      %v1530 = vpack.c.bf16 %v1418, %v1410
      %v1531 = vpack.c.bf16 %v1427, %v1419
      %v1532 = vpack.c.bf16 %v1428, %v1420
      %v1533 = vpack.c.bf16 %v1429, %v1421
      %v1534 = vpack.c.bf16 %v1430, %v1422
      %v1535 = vpack.c.bf16 %v1431, %v1423
      %v1536 = vpack.c.bf16 %v1432, %v1424
      %v1537 = vpack.c.bf16 %v1433, %v1425
      %v1538 = vpack.c.bf16 %v1434, %v1426
      %v1539 = vpack.c.bf16 %v1443, %v1435
      %v1540 = vpack.c.bf16 %v1444, %v1436
      %v1541 = vpack.c.bf16 %v1445, %v1437
      %v1542 = vpack.c.bf16 %v1446, %v1438
      %v1543 = vpack.c.bf16 %v1447, %v1439
      %v1544 = vpack.c.bf16 %v1448, %v1440
      %v1545 = vpack.c.bf16 %v1449, %v1441
      %v1546 = vpack.c.bf16 %v1450, %v1442
      %v1547 = vpack.c.bf16 %v1459, %v1451
      %v1548 = vpack.c.bf16 %v1460, %v1452
      %v1549 = vpack.c.bf16 %v1461, %v1453
      %v1550 = vpack.c.bf16 %v1462, %v1454
      %v1551 = vpack.c.bf16 %v1463, %v1455
      %v1552 = vpack.c.bf16 %v1464, %v1456
      %v1553 = vpack.c.bf16 %v1465, %v1457
      %v1554 = vpack.c.bf16 %v1466, %v1458
      %v1555 = vpack.c.bf16 %v1475, %v1467
      %v1556 = vpack.c.bf16 %v1476, %v1468
      %v1557 = vpack.c.bf16 %v1477, %v1469
      %v1558 = vpack.c.bf16 %v1478, %v1470
      %v1559 = vpack.c.bf16 %v1479, %v1471
      %v1560 = vpack.c.bf16 %v1480, %v1472
      %v1561 = vpack.c.bf16 %v1481, %v1473
      %v1562 = vpack.c.bf16 %v1482, %v1474
      %v1563 = vpack.c.bf16 %v1491, %v1483
      %v1564 = vpack.c.bf16 %v1492, %v1484
      %v1565 = vpack.c.bf16 %v1493, %v1485
      %v1566 = vpack.c.bf16 %v1494, %v1486
      %v1567 = vpack.c.bf16 %v1495, %v1487
      %v1568 = vpack.c.bf16 %v1496, %v1488
      %v1569 = vpack.c.bf16 %v1497, %v1489
      %v1570 = vpack.c.bf16 %v1498, %v1490
      %v1571 = vpack.c.bf16 %v1507, %v1499
      %v1572 = vpack.c.bf16 %v1508, %v1500
      %v1573 = vpack.c.bf16 %v1509, %v1501
      %v1574 = vpack.c.bf16 %v1510, %v1502
      %v1575 = vpack.c.bf16 %v1511, %v1503
      %v1576 = vpack.c.bf16 %v1512, %v1504
      %v1577 = vpack.c.bf16 %v1513, %v1505
      %v1578 = vpack.c.bf16 %v1514, %v1506
      %v1579 = vld [vmem:[%s3] sm:$0xff]
      %v1580 = vld [vmem:[%s3 + $0x8] sm:$0xff]
      %v1581 = vld [vmem:[%s3 + $0x10] sm:$0xff]
      %v1582 = vld [vmem:[%s3 + $0x18] sm:$0xff]
      %v1583 = vld [vmem:[%s3 + $0x20] sm:$0xff]
      %v1584 = vld [vmem:[%s3 + $0x28] sm:$0xff]
      %v1585 = vld [vmem:[%s3 + $0x30] sm:$0xff]
      %v1586 = vld [vmem:[%s3 + $0x38] sm:$0xff]
      %v1587 = vld [vmem:[%s3 + $0x40] sm:$0xff]
      %v1588 = vld [vmem:[%s3 + $0x48] sm:$0xff]
      %v1589 = vld [vmem:[%s3 + $0x50] sm:$0xff]
      %v1590 = vld [vmem:[%s3 + $0x58] sm:$0xff]
      %v1591 = vld [vmem:[%s3 + $0x60] sm:$0xff]
      %v1592 = vld [vmem:[%s3 + $0x68] sm:$0xff]
      %v1593 = vld [vmem:[%s3 + $0x70] sm:$0xff]
      %v1594 = vld [vmem:[%s3 + $0x78] sm:$0xff]
      %v1595 = vld [vmem:[%s3 + $0x80] sm:$0xff]
      %v1596 = vld [vmem:[%s3 + $0x88] sm:$0xff]
      %v1597 = vld [vmem:[%s3 + $0x90] sm:$0xff]
      %v1598 = vld [vmem:[%s3 + $0x98] sm:$0xff]
      %v1599 = vld [vmem:[%s3 + $0xa0] sm:$0xff]
      %v1600 = vld [vmem:[%s3 + $0xa8] sm:$0xff]
      %v1601 = vld [vmem:[%s3 + $0xb0] sm:$0xff]
      %v1602 = vld [vmem:[%s3 + $0xb8] sm:$0xff]
      %v1603 = vld [vmem:[%s3 + $0xc0] sm:$0xff]
      %v1604 = vld [vmem:[%s3 + $0xc8] sm:$0xff]
      %v1605 = vld [vmem:[%s3 + $0xd0] sm:$0xff]
      %v1606 = vld [vmem:[%s3 + $0xd8] sm:$0xff]
      %v1607 = vld [vmem:[%s3 + $0xe0] sm:$0xff]
      %v1608 = vld [vmem:[%s3 + $0xe8] sm:$0xff]
      %v1609 = vld [vmem:[%s3 + $0xf0] sm:$0xff]
      %v1610 = vld [vmem:[%s3 + $0xf8] sm:$0xff]
      %v1611 = vld [vmem:[%s3 + $0x100] sm:$0xff]
      %v1612 = vld [vmem:[%s3 + $0x108] sm:$0xff]
      %v1613 = vld [vmem:[%s3 + $0x110] sm:$0xff]
      %v1614 = vld [vmem:[%s3 + $0x118] sm:$0xff]
      %v1615 = vld [vmem:[%s3 + $0x120] sm:$0xff]
      %v1616 = vld [vmem:[%s3 + $0x128] sm:$0xff]
      %v1617 = vld [vmem:[%s3 + $0x130] sm:$0xff]
      %v1618 = vld [vmem:[%s3 + $0x138] sm:$0xff]
      %v1619 = vld [vmem:[%s3 + $0x140] sm:$0xff]
      %v1620 = vld [vmem:[%s3 + $0x148] sm:$0xff]
      %v1621 = vld [vmem:[%s3 + $0x150] sm:$0xff]
      %v1622 = vld [vmem:[%s3 + $0x158] sm:$0xff]
      %v1623 = vld [vmem:[%s3 + $0x160] sm:$0xff]
      %v1624 = vld [vmem:[%s3 + $0x168] sm:$0xff]
      %v1625 = vld [vmem:[%s3 + $0x170] sm:$0xff]
      %v1626 = vld [vmem:[%s3 + $0x178] sm:$0xff]
      %v1627 = vld [vmem:[%s3 + $0x180] sm:$0xff]
      %v1628 = vld [vmem:[%s3 + $0x188] sm:$0xff]
      %v1629 = vld [vmem:[%s3 + $0x190] sm:$0xff]
      %v1630 = vld [vmem:[%s3 + $0x198] sm:$0xff]
      %v1631 = vld [vmem:[%s3 + $0x1a0] sm:$0xff]
      %v1632 = vld [vmem:[%s3 + $0x1a8] sm:$0xff]
      %v1633 = vld [vmem:[%s3 + $0x1b0] sm:$0xff]
      %v1634 = vld [vmem:[%s3 + $0x1b8] sm:$0xff]
      %v1635 = vld [vmem:[%s3 + $0x1c0] sm:$0xff]
      %v1636 = vld [vmem:[%s3 + $0x1c8] sm:$0xff]
      %v1637 = vld [vmem:[%s3 + $0x1d0] sm:$0xff]
      %v1638 = vld [vmem:[%s3 + $0x1d8] sm:$0xff]
      %v1639 = vld [vmem:[%s3 + $0x1e0] sm:$0xff]
      %v1640 = vld [vmem:[%s3 + $0x1e8] sm:$0xff]
      %v1641 = vld [vmem:[%s3 + $0x1f0] sm:$0xff]
      %v1642 = vld [vmem:[%s3 + $0x1f8] sm:$0xff]
      %v1643 = vld [vmem:[%s3 + $0x200] sm:$0xff]
      %v1644 = vld [vmem:[%s3 + $0x208] sm:$0xff]
      %v1645 = vld [vmem:[%s3 + $0x210] sm:$0xff]
      %v1646 = vld [vmem:[%s3 + $0x218] sm:$0xff]
      %v1647 = vld [vmem:[%s3 + $0x220] sm:$0xff]
      %v1648 = vld [vmem:[%s3 + $0x228] sm:$0xff]
      %v1649 = vld [vmem:[%s3 + $0x230] sm:$0xff]
      %v1650 = vld [vmem:[%s3 + $0x238] sm:$0xff]
      %v1651 = vld [vmem:[%s3 + $0x240] sm:$0xff]
      %v1652 = vld [vmem:[%s3 + $0x248] sm:$0xff]
      %v1653 = vld [vmem:[%s3 + $0x250] sm:$0xff]
      %v1654 = vld [vmem:[%s3 + $0x258] sm:$0xff]
      %v1655 = vld [vmem:[%s3 + $0x260] sm:$0xff]
      %v1656 = vld [vmem:[%s3 + $0x268] sm:$0xff]
      %v1657 = vld [vmem:[%s3 + $0x270] sm:$0xff]
      %v1658 = vld [vmem:[%s3 + $0x278] sm:$0xff]
      %v1659 = vld [vmem:[%s3 + $0x280] sm:$0xff]
      %v1660 = vld [vmem:[%s3 + $0x288] sm:$0xff]
      %v1661 = vld [vmem:[%s3 + $0x290] sm:$0xff]
      %v1662 = vld [vmem:[%s3 + $0x298] sm:$0xff]
      %v1663 = vld [vmem:[%s3 + $0x2a0] sm:$0xff]
      %v1664 = vld [vmem:[%s3 + $0x2a8] sm:$0xff]
      %v1665 = vld [vmem:[%s3 + $0x2b0] sm:$0xff]
      %v1666 = vld [vmem:[%s3 + $0x2b8] sm:$0xff]
      %v1667 = vld [vmem:[%s3 + $0x2c0] sm:$0xff]
      %v1668 = vld [vmem:[%s3 + $0x2c8] sm:$0xff]
      %v1669 = vld [vmem:[%s3 + $0x2d0] sm:$0xff]
      %v1670 = vld [vmem:[%s3 + $0x2d8] sm:$0xff]
      %v1671 = vld [vmem:[%s3 + $0x2e0] sm:$0xff]
      %v1672 = vld [vmem:[%s3 + $0x2e8] sm:$0xff]
      %v1673 = vld [vmem:[%s3 + $0x2f0] sm:$0xff]
      %v1674 = vld [vmem:[%s3 + $0x2f8] sm:$0xff]
      %v1675 = vld [vmem:[%s3 + $0x300] sm:$0xff]
      %v1676 = vld [vmem:[%s3 + $0x308] sm:$0xff]
      %v1677 = vld [vmem:[%s3 + $0x310] sm:$0xff]
      %v1678 = vld [vmem:[%s3 + $0x318] sm:$0xff]
      %v1679 = vld [vmem:[%s3 + $0x320] sm:$0xff]
      %v1680 = vld [vmem:[%s3 + $0x328] sm:$0xff]
      %v1681 = vld [vmem:[%s3 + $0x330] sm:$0xff]
      %v1682 = vld [vmem:[%s3 + $0x338] sm:$0xff]
      %v1683 = vld [vmem:[%s3 + $0x340] sm:$0xff]
      %v1684 = vld [vmem:[%s3 + $0x348] sm:$0xff]
      %v1685 = vld [vmem:[%s3 + $0x350] sm:$0xff]
      %v1686 = vld [vmem:[%s3 + $0x358] sm:$0xff]
      %v1687 = vld [vmem:[%s3 + $0x360] sm:$0xff]
      %v1688 = vld [vmem:[%s3 + $0x368] sm:$0xff]
      %v1689 = vld [vmem:[%s3 + $0x370] sm:$0xff]
      %v1690 = vld [vmem:[%s3 + $0x378] sm:$0xff]
      %v1691 = vld [vmem:[%s3 + $0x380] sm:$0xff]
      %v1692 = vld [vmem:[%s3 + $0x388] sm:$0xff]
      %v1693 = vld [vmem:[%s3 + $0x390] sm:$0xff]
      %v1694 = vld [vmem:[%s3 + $0x398] sm:$0xff]
      %v1695 = vld [vmem:[%s3 + $0x3a0] sm:$0xff]
      %v1696 = vld [vmem:[%s3 + $0x3a8] sm:$0xff]
      %v1697 = vld [vmem:[%s3 + $0x3b0] sm:$0xff]
      %v1698 = vld [vmem:[%s3 + $0x3b8] sm:$0xff]
      %v1699 = vld [vmem:[%s3 + $0x3c0] sm:$0xff]
      %v1700 = vld [vmem:[%s3 + $0x3c8] sm:$0xff]
      %v1701 = vld [vmem:[%s3 + $0x3d0] sm:$0xff]
      %v1702 = vld [vmem:[%s3 + $0x3d8] sm:$0xff]
      %v1703 = vld [vmem:[%s3 + $0x3e0] sm:$0xff]
      %v1704 = vld [vmem:[%s3 + $0x3e8] sm:$0xff]
      %v1705 = vld [vmem:[%s3 + $0x3f0] sm:$0xff]
      %v1706 = vld [vmem:[%s3 + $0x3f8] sm:$0xff]
      %v1707 = vld [vmem:[%s3 + $0x400] sm:$0xff]
      %v1708 = vld [vmem:[%s3 + $0x408] sm:$0xff]
      %v1709 = vld [vmem:[%s3 + $0x410] sm:$0xff]
      %v1710 = vld [vmem:[%s3 + $0x418] sm:$0xff]
      %v1711 = vld [vmem:[%s3 + $0x420] sm:$0xff]
      %v1712 = vld [vmem:[%s3 + $0x428] sm:$0xff]
      %v1713 = vld [vmem:[%s3 + $0x430] sm:$0xff]
      %v1714 = vld [vmem:[%s3 + $0x438] sm:$0xff]
      %v1715 = vld [vmem:[%s3 + $0x440] sm:$0xff]
      %v1716 = vld [vmem:[%s3 + $0x448] sm:$0xff]
      %v1717 = vld [vmem:[%s3 + $0x450] sm:$0xff]
      %v1718 = vld [vmem:[%s3 + $0x458] sm:$0xff]
      %v1719 = vld [vmem:[%s3 + $0x460] sm:$0xff]
      %v1720 = vld [vmem:[%s3 + $0x468] sm:$0xff]
      %v1721 = vld [vmem:[%s3 + $0x470] sm:$0xff]
      %v1722 = vld [vmem:[%s3 + $0x478] sm:$0xff]
      %v1723 = vld [vmem:[%s3 + $0x480] sm:$0xff]
      %v1724 = vld [vmem:[%s3 + $0x488] sm:$0xff]
      %v1725 = vld [vmem:[%s3 + $0x490] sm:$0xff]
      %v1726 = vld [vmem:[%s3 + $0x498] sm:$0xff]
      %v1727 = vld [vmem:[%s3 + $0x4a0] sm:$0xff]
      %v1728 = vld [vmem:[%s3 + $0x4a8] sm:$0xff]
      %v1729 = vld [vmem:[%s3 + $0x4b0] sm:$0xff]
      %v1730 = vld [vmem:[%s3 + $0x4b8] sm:$0xff]
      %v1731 = vld [vmem:[%s3 + $0x4c0] sm:$0xff]
      %v1732 = vld [vmem:[%s3 + $0x4c8] sm:$0xff]
      %v1733 = vld [vmem:[%s3 + $0x4d0] sm:$0xff]
      %v1734 = vld [vmem:[%s3 + $0x4d8] sm:$0xff]
      %v1735 = vld [vmem:[%s3 + $0x4e0] sm:$0xff]
      %v1736 = vld [vmem:[%s3 + $0x4e8] sm:$0xff]
      %v1737 = vld [vmem:[%s3 + $0x4f0] sm:$0xff]
      %v1738 = vld [vmem:[%s3 + $0x4f8] sm:$0xff]
      %v1739 = vld [vmem:[%s3 + $0x500] sm:$0xff]
      %v1740 = vld [vmem:[%s3 + $0x508] sm:$0xff]
      %v1741 = vld [vmem:[%s3 + $0x510] sm:$0xff]
      %v1742 = vld [vmem:[%s3 + $0x518] sm:$0xff]
      %v1743 = vld [vmem:[%s3 + $0x520] sm:$0xff]
      %v1744 = vld [vmem:[%s3 + $0x528] sm:$0xff]
      %v1745 = vld [vmem:[%s3 + $0x530] sm:$0xff]
      %v1746 = vld [vmem:[%s3 + $0x538] sm:$0xff]
      %v1747 = vld [vmem:[%s3 + $0x540] sm:$0xff]
      %v1748 = vld [vmem:[%s3 + $0x548] sm:$0xff]
      %v1749 = vld [vmem:[%s3 + $0x550] sm:$0xff]
      %v1750 = vld [vmem:[%s3 + $0x558] sm:$0xff]
      %v1751 = vld [vmem:[%s3 + $0x560] sm:$0xff]
      %v1752 = vld [vmem:[%s3 + $0x568] sm:$0xff]
      %v1753 = vld [vmem:[%s3 + $0x570] sm:$0xff]
      %v1754 = vld [vmem:[%s3 + $0x578] sm:$0xff]
      %v1755 = vld [vmem:[%s3 + $0x580] sm:$0xff]
      %v1756 = vld [vmem:[%s3 + $0x588] sm:$0xff]
      %v1757 = vld [vmem:[%s3 + $0x590] sm:$0xff]
      %v1758 = vld [vmem:[%s3 + $0x598] sm:$0xff]
      %v1759 = vld [vmem:[%s3 + $0x5a0] sm:$0xff]
      %v1760 = vld [vmem:[%s3 + $0x5a8] sm:$0xff]
      %v1761 = vld [vmem:[%s3 + $0x5b0] sm:$0xff]
      %v1762 = vld [vmem:[%s3 + $0x5b8] sm:$0xff]
      %v1763 = vld [vmem:[%s3 + $0x5c0] sm:$0xff]
      %v1764 = vld [vmem:[%s3 + $0x5c8] sm:$0xff]
      %v1765 = vld [vmem:[%s3 + $0x5d0] sm:$0xff]
      %v1766 = vld [vmem:[%s3 + $0x5d8] sm:$0xff]
      %v1767 = vld [vmem:[%s3 + $0x5e0] sm:$0xff]
      %v1768 = vld [vmem:[%s3 + $0x5e8] sm:$0xff]
      %v1769 = vld [vmem:[%s3 + $0x5f0] sm:$0xff]
      %v1770 = vld [vmem:[%s3 + $0x5f8] sm:$0xff]
      %v1771 = vld [vmem:[%s3 + $0x600] sm:$0xff]
      %v1772 = vld [vmem:[%s3 + $0x608] sm:$0xff]
      %v1773 = vld [vmem:[%s3 + $0x610] sm:$0xff]
      %v1774 = vld [vmem:[%s3 + $0x618] sm:$0xff]
      %v1775 = vld [vmem:[%s3 + $0x620] sm:$0xff]
      %v1776 = vld [vmem:[%s3 + $0x628] sm:$0xff]
      %v1777 = vld [vmem:[%s3 + $0x630] sm:$0xff]
      %v1778 = vld [vmem:[%s3 + $0x638] sm:$0xff]
      %v1779 = vld [vmem:[%s3 + $0x640] sm:$0xff]
      %v1780 = vld [vmem:[%s3 + $0x648] sm:$0xff]
      %v1781 = vld [vmem:[%s3 + $0x650] sm:$0xff]
      %v1782 = vld [vmem:[%s3 + $0x658] sm:$0xff]
      %v1783 = vld [vmem:[%s3 + $0x660] sm:$0xff]
      %v1784 = vld [vmem:[%s3 + $0x668] sm:$0xff]
      %v1785 = vld [vmem:[%s3 + $0x670] sm:$0xff]
      %v1786 = vld [vmem:[%s3 + $0x678] sm:$0xff]
      %v1787 = vld [vmem:[%s3 + $0x680] sm:$0xff]
      %v1788 = vld [vmem:[%s3 + $0x688] sm:$0xff]
      %v1789 = vld [vmem:[%s3 + $0x690] sm:$0xff]
      %v1790 = vld [vmem:[%s3 + $0x698] sm:$0xff]
      %v1791 = vld [vmem:[%s3 + $0x6a0] sm:$0xff]
      %v1792 = vld [vmem:[%s3 + $0x6a8] sm:$0xff]
      %v1793 = vld [vmem:[%s3 + $0x6b0] sm:$0xff]
      %v1794 = vld [vmem:[%s3 + $0x6b8] sm:$0xff]
      %v1795 = vld [vmem:[%s3 + $0x6c0] sm:$0xff]
      %v1796 = vld [vmem:[%s3 + $0x6c8] sm:$0xff]
      %v1797 = vld [vmem:[%s3 + $0x6d0] sm:$0xff]
      %v1798 = vld [vmem:[%s3 + $0x6d8] sm:$0xff]
      %v1799 = vld [vmem:[%s3 + $0x6e0] sm:$0xff]
      %v1800 = vld [vmem:[%s3 + $0x6e8] sm:$0xff]
      %v1801 = vld [vmem:[%s3 + $0x6f0] sm:$0xff]
      %v1802 = vld [vmem:[%s3 + $0x6f8] sm:$0xff]
      %v1803 = vld [vmem:[%s3 + $0x700] sm:$0xff]
      %v1804 = vld [vmem:[%s3 + $0x708] sm:$0xff]
      %v1805 = vld [vmem:[%s3 + $0x710] sm:$0xff]
      %v1806 = vld [vmem:[%s3 + $0x718] sm:$0xff]
      %v1807 = vld [vmem:[%s3 + $0x720] sm:$0xff]
      %v1808 = vld [vmem:[%s3 + $0x728] sm:$0xff]
      %v1809 = vld [vmem:[%s3 + $0x730] sm:$0xff]
      %v1810 = vld [vmem:[%s3 + $0x738] sm:$0xff]
      %v1811 = vld [vmem:[%s3 + $0x740] sm:$0xff]
      %v1812 = vld [vmem:[%s3 + $0x748] sm:$0xff]
      %v1813 = vld [vmem:[%s3 + $0x750] sm:$0xff]
      %v1814 = vld [vmem:[%s3 + $0x758] sm:$0xff]
      %v1815 = vld [vmem:[%s3 + $0x760] sm:$0xff]
      %v1816 = vld [vmem:[%s3 + $0x768] sm:$0xff]
      %v1817 = vld [vmem:[%s3 + $0x770] sm:$0xff]
      %v1818 = vld [vmem:[%s3 + $0x778] sm:$0xff]
      %v1819 = vld [vmem:[%s3 + $0x780] sm:$0xff]
      %v1820 = vld [vmem:[%s3 + $0x788] sm:$0xff]
      %v1821 = vld [vmem:[%s3 + $0x790] sm:$0xff]
      %v1822 = vld [vmem:[%s3 + $0x798] sm:$0xff]
      %v1823 = vld [vmem:[%s3 + $0x7a0] sm:$0xff]
      %v1824 = vld [vmem:[%s3 + $0x7a8] sm:$0xff]
      %v1825 = vld [vmem:[%s3 + $0x7b0] sm:$0xff]
      %v1826 = vld [vmem:[%s3 + $0x7b8] sm:$0xff]
      %v1827 = vld [vmem:[%s3 + $0x7c0] sm:$0xff]
      %v1828 = vld [vmem:[%s3 + $0x7c8] sm:$0xff]
      %v1829 = vld [vmem:[%s3 + $0x7d0] sm:$0xff]
      %v1830 = vld [vmem:[%s3 + $0x7d8] sm:$0xff]
      %v1831 = vld [vmem:[%s3 + $0x7e0] sm:$0xff]
      %v1832 = vld [vmem:[%s3 + $0x7e8] sm:$0xff]
      %v1833 = vld [vmem:[%s3 + $0x7f0] sm:$0xff]
      %v1834 = vld [vmem:[%s3 + $0x7f8] sm:$0xff]
      %v1835 = vld [vmem:[%s4] sm:$0xf]
      %v1837 = vlaneseq
      %v1838 = vshrl.u32 %v1837, 7
      %v1839 = vsub.s32 0, %v1838
      %v1840 = vrot.slane %v1835, %v1839
      %v1841 = vlaneseq
      %v1842 = vshrl.u32 %v1841, 7
      %v1843 = vsub.s32 1, %v1842
      %v1844 = vrot.slane %v1835, %v1843
      %v1845 = vlaneseq
      %v1846 = vshrl.u32 %v1845, 7
      %v1847 = vsub.s32 2, %v1846
      %v1848 = vrot.slane %v1835, %v1847
      %v1849 = vlaneseq
      %v1850 = vshrl.u32 %v1849, 7
      %v1851 = vsub.s32 3, %v1850
      %v1852 = vrot.slane %v1835, %v1851
      %v2113 = vunpack.c.l.b16 %v1579
      %v2114 = vunpack.c.h.b16 %v1579
      %v2115 = vunpack.c.l.b16 %v1580
      %v2116 = vunpack.c.h.b16 %v1580
      %v2117 = vunpack.c.l.b16 %v1581
      %v2118 = vunpack.c.h.b16 %v1581
      %v2119 = vunpack.c.l.b16 %v1582
      %v2120 = vunpack.c.h.b16 %v1582
      %v2121 = vunpack.c.l.b16 %v1583
      %v2122 = vunpack.c.h.b16 %v1583
      %v2123 = vunpack.c.l.b16 %v1584
      %v2124 = vunpack.c.h.b16 %v1584
      %v2125 = vunpack.c.l.b16 %v1585
      %v2126 = vunpack.c.h.b16 %v1585
      %v2127 = vunpack.c.l.b16 %v1586
      %v2128 = vunpack.c.h.b16 %v1586
      %v2129 = vunpack.c.l.b16 %v1587
      %v2130 = vunpack.c.h.b16 %v1587
      %v2131 = vunpack.c.l.b16 %v1588
      %v2132 = vunpack.c.h.b16 %v1588
      %v2133 = vunpack.c.l.b16 %v1589
      %v2134 = vunpack.c.h.b16 %v1589
      %v2135 = vunpack.c.l.b16 %v1590
      %v2136 = vunpack.c.h.b16 %v1590
      %v2137 = vunpack.c.l.b16 %v1591
      %v2138 = vunpack.c.h.b16 %v1591
      %v2139 = vunpack.c.l.b16 %v1592
      %v2140 = vunpack.c.h.b16 %v1592
      %v2141 = vunpack.c.l.b16 %v1593
      %v2142 = vunpack.c.h.b16 %v1593
      %v2143 = vunpack.c.l.b16 %v1594
      %v2144 = vunpack.c.h.b16 %v1594
      %v2145 = vunpack.c.l.b16 %v1595
      %v2146 = vunpack.c.h.b16 %v1595
      %v2147 = vunpack.c.l.b16 %v1596
      %v2148 = vunpack.c.h.b16 %v1596
      %v2149 = vunpack.c.l.b16 %v1597
      %v2150 = vunpack.c.h.b16 %v1597
      %v2151 = vunpack.c.l.b16 %v1598
      %v2152 = vunpack.c.h.b16 %v1598
      %v2153 = vunpack.c.l.b16 %v1599
      %v2154 = vunpack.c.h.b16 %v1599
      %v2155 = vunpack.c.l.b16 %v1600
      %v2156 = vunpack.c.h.b16 %v1600
      %v2157 = vunpack.c.l.b16 %v1601
      %v2158 = vunpack.c.h.b16 %v1601
      %v2159 = vunpack.c.l.b16 %v1602
      %v2160 = vunpack.c.h.b16 %v1602
      %v2161 = vunpack.c.l.b16 %v1603
      %v2162 = vunpack.c.h.b16 %v1603
      %v2163 = vunpack.c.l.b16 %v1604
      %v2164 = vunpack.c.h.b16 %v1604
      %v2165 = vunpack.c.l.b16 %v1605
      %v2166 = vunpack.c.h.b16 %v1605
      %v2167 = vunpack.c.l.b16 %v1606
      %v2168 = vunpack.c.h.b16 %v1606
      %v2169 = vunpack.c.l.b16 %v1607
      %v2170 = vunpack.c.h.b16 %v1607
      %v2171 = vunpack.c.l.b16 %v1608
      %v2172 = vunpack.c.h.b16 %v1608
      %v2173 = vunpack.c.l.b16 %v1609
      %v2174 = vunpack.c.h.b16 %v1609
      %v2175 = vunpack.c.l.b16 %v1610
      %v2176 = vunpack.c.h.b16 %v1610
      %v2177 = vunpack.c.l.b16 %v1611
      %v2178 = vunpack.c.h.b16 %v1611
      %v2179 = vunpack.c.l.b16 %v1612
      %v2180 = vunpack.c.h.b16 %v1612
      %v2181 = vunpack.c.l.b16 %v1613
      %v2182 = vunpack.c.h.b16 %v1613
      %v2183 = vunpack.c.l.b16 %v1614
      %v2184 = vunpack.c.h.b16 %v1614
      %v2185 = vunpack.c.l.b16 %v1615
      %v2186 = vunpack.c.h.b16 %v1615
      %v2187 = vunpack.c.l.b16 %v1616
      %v2188 = vunpack.c.h.b16 %v1616
      %v2189 = vunpack.c.l.b16 %v1617
      %v2190 = vunpack.c.h.b16 %v1617
      %v2191 = vunpack.c.l.b16 %v1618
      %v2192 = vunpack.c.h.b16 %v1618
      %v2193 = vunpack.c.l.b16 %v1619
      %v2194 = vunpack.c.h.b16 %v1619
      %v2195 = vunpack.c.l.b16 %v1620
      %v2196 = vunpack.c.h.b16 %v1620
      %v2197 = vunpack.c.l.b16 %v1621
      %v2198 = vunpack.c.h.b16 %v1621
      %v2199 = vunpack.c.l.b16 %v1622
      %v2200 = vunpack.c.h.b16 %v1622
      %v2201 = vunpack.c.l.b16 %v1623
      %v2202 = vunpack.c.h.b16 %v1623
      %v2203 = vunpack.c.l.b16 %v1624
      %v2204 = vunpack.c.h.b16 %v1624
      %v2205 = vunpack.c.l.b16 %v1625
      %v2206 = vunpack.c.h.b16 %v1625
      %v2207 = vunpack.c.l.b16 %v1626
      %v2208 = vunpack.c.h.b16 %v1626
      %v2209 = vunpack.c.l.b16 %v1627
      %v2210 = vunpack.c.h.b16 %v1627
      %v2211 = vunpack.c.l.b16 %v1628
      %v2212 = vunpack.c.h.b16 %v1628
      %v2213 = vunpack.c.l.b16 %v1629
      %v2214 = vunpack.c.h.b16 %v1629
      %v2215 = vunpack.c.l.b16 %v1630
      %v2216 = vunpack.c.h.b16 %v1630
      %v2217 = vunpack.c.l.b16 %v1631
      %v2218 = vunpack.c.h.b16 %v1631
      %v2219 = vunpack.c.l.b16 %v1632
      %v2220 = vunpack.c.h.b16 %v1632
      %v2221 = vunpack.c.l.b16 %v1633
      %v2222 = vunpack.c.h.b16 %v1633
      %v2223 = vunpack.c.l.b16 %v1634
      %v2224 = vunpack.c.h.b16 %v1634
      %v2225 = vunpack.c.l.b16 %v1635
      %v2226 = vunpack.c.h.b16 %v1635
      %v2227 = vunpack.c.l.b16 %v1636
      %v2228 = vunpack.c.h.b16 %v1636
      %v2229 = vunpack.c.l.b16 %v1637
      %v2230 = vunpack.c.h.b16 %v1637
      %v2231 = vunpack.c.l.b16 %v1638
      %v2232 = vunpack.c.h.b16 %v1638
      %v2233 = vunpack.c.l.b16 %v1639
      %v2234 = vunpack.c.h.b16 %v1639
      %v2235 = vunpack.c.l.b16 %v1640
      %v2236 = vunpack.c.h.b16 %v1640
      %v2237 = vunpack.c.l.b16 %v1641
      %v2238 = vunpack.c.h.b16 %v1641
      %v2239 = vunpack.c.l.b16 %v1642
      %v2240 = vunpack.c.h.b16 %v1642
      %v2241 = vunpack.c.l.b16 %v1643
      %v2242 = vunpack.c.h.b16 %v1643
      %v2243 = vunpack.c.l.b16 %v1644
      %v2244 = vunpack.c.h.b16 %v1644
      %v2245 = vunpack.c.l.b16 %v1645
      %v2246 = vunpack.c.h.b16 %v1645
      %v2247 = vunpack.c.l.b16 %v1646
      %v2248 = vunpack.c.h.b16 %v1646
      %v2249 = vunpack.c.l.b16 %v1647
      %v2250 = vunpack.c.h.b16 %v1647
      %v2251 = vunpack.c.l.b16 %v1648
      %v2252 = vunpack.c.h.b16 %v1648
      %v2253 = vunpack.c.l.b16 %v1649
      %v2254 = vunpack.c.h.b16 %v1649
      %v2255 = vunpack.c.l.b16 %v1650
      %v2256 = vunpack.c.h.b16 %v1650
      %v2257 = vunpack.c.l.b16 %v1651
      %v2258 = vunpack.c.h.b16 %v1651
      %v2259 = vunpack.c.l.b16 %v1652
      %v2260 = vunpack.c.h.b16 %v1652
      %v2261 = vunpack.c.l.b16 %v1653
      %v2262 = vunpack.c.h.b16 %v1653
      %v2263 = vunpack.c.l.b16 %v1654
      %v2264 = vunpack.c.h.b16 %v1654
      %v2265 = vunpack.c.l.b16 %v1655
      %v2266 = vunpack.c.h.b16 %v1655
      %v2267 = vunpack.c.l.b16 %v1656
      %v2268 = vunpack.c.h.b16 %v1656
      %v2269 = vunpack.c.l.b16 %v1657
      %v2270 = vunpack.c.h.b16 %v1657
      %v2271 = vunpack.c.l.b16 %v1658
      %v2272 = vunpack.c.h.b16 %v1658
      %v2273 = vunpack.c.l.b16 %v1659
      %v2274 = vunpack.c.h.b16 %v1659
      %v2275 = vunpack.c.l.b16 %v1660
      %v2276 = vunpack.c.h.b16 %v1660
      %v2277 = vunpack.c.l.b16 %v1661
      %v2278 = vunpack.c.h.b16 %v1661
      %v2279 = vunpack.c.l.b16 %v1662
      %v2280 = vunpack.c.h.b16 %v1662
      %v2281 = vunpack.c.l.b16 %v1663
      %v2282 = vunpack.c.h.b16 %v1663
      %v2283 = vunpack.c.l.b16 %v1664
      %v2284 = vunpack.c.h.b16 %v1664
      %v2285 = vunpack.c.l.b16 %v1665
      %v2286 = vunpack.c.h.b16 %v1665
      %v2287 = vunpack.c.l.b16 %v1666
      %v2288 = vunpack.c.h.b16 %v1666
      %v2289 = vunpack.c.l.b16 %v1667
      %v2290 = vunpack.c.h.b16 %v1667
      %v2291 = vunpack.c.l.b16 %v1668
      %v2292 = vunpack.c.h.b16 %v1668
      %v2293 = vunpack.c.l.b16 %v1669
      %v2294 = vunpack.c.h.b16 %v1669
      %v2295 = vunpack.c.l.b16 %v1670
      %v2296 = vunpack.c.h.b16 %v1670
      %v2297 = vunpack.c.l.b16 %v1671
      %v2298 = vunpack.c.h.b16 %v1671
      %v2299 = vunpack.c.l.b16 %v1672
      %v2300 = vunpack.c.h.b16 %v1672
      %v2301 = vunpack.c.l.b16 %v1673
      %v2302 = vunpack.c.h.b16 %v1673
      %v2303 = vunpack.c.l.b16 %v1674
      %v2304 = vunpack.c.h.b16 %v1674
      %v2305 = vunpack.c.l.b16 %v1675
      %v2306 = vunpack.c.h.b16 %v1675
      %v2307 = vunpack.c.l.b16 %v1676
      %v2308 = vunpack.c.h.b16 %v1676
      %v2309 = vunpack.c.l.b16 %v1677
      %v2310 = vunpack.c.h.b16 %v1677
      %v2311 = vunpack.c.l.b16 %v1678
      %v2312 = vunpack.c.h.b16 %v1678
      %v2313 = vunpack.c.l.b16 %v1679
      %v2314 = vunpack.c.h.b16 %v1679
      %v2315 = vunpack.c.l.b16 %v1680
      %v2316 = vunpack.c.h.b16 %v1680
      %v2317 = vunpack.c.l.b16 %v1681
      %v2318 = vunpack.c.h.b16 %v1681
      %v2319 = vunpack.c.l.b16 %v1682
      %v2320 = vunpack.c.h.b16 %v1682
      %v2321 = vunpack.c.l.b16 %v1683
      %v2322 = vunpack.c.h.b16 %v1683
      %v2323 = vunpack.c.l.b16 %v1684
      %v2324 = vunpack.c.h.b16 %v1684
      %v2325 = vunpack.c.l.b16 %v1685
      %v2326 = vunpack.c.h.b16 %v1685
      %v2327 = vunpack.c.l.b16 %v1686
      %v2328 = vunpack.c.h.b16 %v1686
      %v2329 = vunpack.c.l.b16 %v1687
      %v2330 = vunpack.c.h.b16 %v1687
      %v2331 = vunpack.c.l.b16 %v1688
      %v2332 = vunpack.c.h.b16 %v1688
      %v2333 = vunpack.c.l.b16 %v1689
      %v2334 = vunpack.c.h.b16 %v1689
      %v2335 = vunpack.c.l.b16 %v1690
      %v2336 = vunpack.c.h.b16 %v1690
      %v2337 = vunpack.c.l.b16 %v1691
      %v2338 = vunpack.c.h.b16 %v1691
      %v2339 = vunpack.c.l.b16 %v1692
      %v2340 = vunpack.c.h.b16 %v1692
      %v2341 = vunpack.c.l.b16 %v1693
      %v2342 = vunpack.c.h.b16 %v1693
      %v2343 = vunpack.c.l.b16 %v1694
      %v2344 = vunpack.c.h.b16 %v1694
      %v2345 = vunpack.c.l.b16 %v1695
      %v2346 = vunpack.c.h.b16 %v1695
      %v2347 = vunpack.c.l.b16 %v1696
      %v2348 = vunpack.c.h.b16 %v1696
      %v2349 = vunpack.c.l.b16 %v1697
      %v2350 = vunpack.c.h.b16 %v1697
      %v2351 = vunpack.c.l.b16 %v1698
      %v2352 = vunpack.c.h.b16 %v1698
      %v2353 = vunpack.c.l.b16 %v1699
      %v2354 = vunpack.c.h.b16 %v1699
      %v2355 = vunpack.c.l.b16 %v1700
      %v2356 = vunpack.c.h.b16 %v1700
      %v2357 = vunpack.c.l.b16 %v1701
      %v2358 = vunpack.c.h.b16 %v1701
      %v2359 = vunpack.c.l.b16 %v1702
      %v2360 = vunpack.c.h.b16 %v1702
      %v2361 = vunpack.c.l.b16 %v1703
      %v2362 = vunpack.c.h.b16 %v1703
      %v2363 = vunpack.c.l.b16 %v1704
      %v2364 = vunpack.c.h.b16 %v1704
      %v2365 = vunpack.c.l.b16 %v1705
      %v2366 = vunpack.c.h.b16 %v1705
      %v2367 = vunpack.c.l.b16 %v1706
      %v2368 = vunpack.c.h.b16 %v1706
      %v2369 = vunpack.c.l.b16 %v1707
      %v2370 = vunpack.c.h.b16 %v1707
      %v2371 = vunpack.c.l.b16 %v1708
      %v2372 = vunpack.c.h.b16 %v1708
      %v2373 = vunpack.c.l.b16 %v1709
      %v2374 = vunpack.c.h.b16 %v1709
      %v2375 = vunpack.c.l.b16 %v1710
      %v2376 = vunpack.c.h.b16 %v1710
      %v2377 = vunpack.c.l.b16 %v1711
      %v2378 = vunpack.c.h.b16 %v1711
      %v2379 = vunpack.c.l.b16 %v1712
      %v2380 = vunpack.c.h.b16 %v1712
      %v2381 = vunpack.c.l.b16 %v1713
      %v2382 = vunpack.c.h.b16 %v1713
      %v2383 = vunpack.c.l.b16 %v1714
      %v2384 = vunpack.c.h.b16 %v1714
      %v2385 = vunpack.c.l.b16 %v1715
      %v2386 = vunpack.c.h.b16 %v1715
      %v2387 = vunpack.c.l.b16 %v1716
      %v2388 = vunpack.c.h.b16 %v1716
      %v2389 = vunpack.c.l.b16 %v1717
      %v2390 = vunpack.c.h.b16 %v1717
      %v2391 = vunpack.c.l.b16 %v1718
      %v2392 = vunpack.c.h.b16 %v1718
      %v2393 = vunpack.c.l.b16 %v1719
      %v2394 = vunpack.c.h.b16 %v1719
      %v2395 = vunpack.c.l.b16 %v1720
      %v2396 = vunpack.c.h.b16 %v1720
      %v2397 = vunpack.c.l.b16 %v1721
      %v2398 = vunpack.c.h.b16 %v1721
      %v2399 = vunpack.c.l.b16 %v1722
      %v2400 = vunpack.c.h.b16 %v1722
      %v2401 = vunpack.c.l.b16 %v1723
      %v2402 = vunpack.c.h.b16 %v1723
      %v2403 = vunpack.c.l.b16 %v1724
      %v2404 = vunpack.c.h.b16 %v1724
      %v2405 = vunpack.c.l.b16 %v1725
      %v2406 = vunpack.c.h.b16 %v1725
      %v2407 = vunpack.c.l.b16 %v1726
      %v2408 = vunpack.c.h.b16 %v1726
      %v2409 = vunpack.c.l.b16 %v1727
      %v2410 = vunpack.c.h.b16 %v1727
      %v2411 = vunpack.c.l.b16 %v1728
      %v2412 = vunpack.c.h.b16 %v1728
      %v2413 = vunpack.c.l.b16 %v1729
      %v2414 = vunpack.c.h.b16 %v1729
      %v2415 = vunpack.c.l.b16 %v1730
      %v2416 = vunpack.c.h.b16 %v1730
      %v2417 = vunpack.c.l.b16 %v1731
      %v2418 = vunpack.c.h.b16 %v1731
      %v2419 = vunpack.c.l.b16 %v1732
      %v2420 = vunpack.c.h.b16 %v1732
      %v2421 = vunpack.c.l.b16 %v1733
      %v2422 = vunpack.c.h.b16 %v1733
      %v2423 = vunpack.c.l.b16 %v1734
      %v2424 = vunpack.c.h.b16 %v1734
      %v2425 = vunpack.c.l.b16 %v1735
      %v2426 = vunpack.c.h.b16 %v1735
      %v2427 = vunpack.c.l.b16 %v1736
      %v2428 = vunpack.c.h.b16 %v1736
      %v2429 = vunpack.c.l.b16 %v1737
      %v2430 = vunpack.c.h.b16 %v1737
      %v2431 = vunpack.c.l.b16 %v1738
      %v2432 = vunpack.c.h.b16 %v1738
      %v2433 = vunpack.c.l.b16 %v1739
      %v2434 = vunpack.c.h.b16 %v1739
      %v2435 = vunpack.c.l.b16 %v1740
      %v2436 = vunpack.c.h.b16 %v1740
      %v2437 = vunpack.c.l.b16 %v1741
      %v2438 = vunpack.c.h.b16 %v1741
      %v2439 = vunpack.c.l.b16 %v1742
      %v2440 = vunpack.c.h.b16 %v1742
      %v2441 = vunpack.c.l.b16 %v1743
      %v2442 = vunpack.c.h.b16 %v1743
      %v2443 = vunpack.c.l.b16 %v1744
      %v2444 = vunpack.c.h.b16 %v1744
      %v2445 = vunpack.c.l.b16 %v1745
      %v2446 = vunpack.c.h.b16 %v1745
      %v2447 = vunpack.c.l.b16 %v1746
      %v2448 = vunpack.c.h.b16 %v1746
      %v2449 = vunpack.c.l.b16 %v1747
      %v2450 = vunpack.c.h.b16 %v1747
      %v2451 = vunpack.c.l.b16 %v1748
      %v2452 = vunpack.c.h.b16 %v1748
      %v2453 = vunpack.c.l.b16 %v1749
      %v2454 = vunpack.c.h.b16 %v1749
      %v2455 = vunpack.c.l.b16 %v1750
      %v2456 = vunpack.c.h.b16 %v1750
      %v2457 = vunpack.c.l.b16 %v1751
      %v2458 = vunpack.c.h.b16 %v1751
      %v2459 = vunpack.c.l.b16 %v1752
      %v2460 = vunpack.c.h.b16 %v1752
      %v2461 = vunpack.c.l.b16 %v1753
      %v2462 = vunpack.c.h.b16 %v1753
      %v2463 = vunpack.c.l.b16 %v1754
      %v2464 = vunpack.c.h.b16 %v1754
      %v2465 = vunpack.c.l.b16 %v1755
      %v2466 = vunpack.c.h.b16 %v1755
      %v2467 = vunpack.c.l.b16 %v1756
      %v2468 = vunpack.c.h.b16 %v1756
      %v2469 = vunpack.c.l.b16 %v1757
      %v2470 = vunpack.c.h.b16 %v1757
      %v2471 = vunpack.c.l.b16 %v1758
      %v2472 = vunpack.c.h.b16 %v1758
      %v2473 = vunpack.c.l.b16 %v1759
      %v2474 = vunpack.c.h.b16 %v1759
      %v2475 = vunpack.c.l.b16 %v1760
      %v2476 = vunpack.c.h.b16 %v1760
      %v2477 = vunpack.c.l.b16 %v1761
      %v2478 = vunpack.c.h.b16 %v1761
      %v2479 = vunpack.c.l.b16 %v1762
      %v2480 = vunpack.c.h.b16 %v1762
      %v2481 = vunpack.c.l.b16 %v1763
      %v2482 = vunpack.c.h.b16 %v1763
      %v2483 = vunpack.c.l.b16 %v1764
      %v2484 = vunpack.c.h.b16 %v1764
      %v2485 = vunpack.c.l.b16 %v1765
      %v2486 = vunpack.c.h.b16 %v1765
      %v2487 = vunpack.c.l.b16 %v1766
      %v2488 = vunpack.c.h.b16 %v1766
      %v2489 = vunpack.c.l.b16 %v1767
      %v2490 = vunpack.c.h.b16 %v1767
      %v2491 = vunpack.c.l.b16 %v1768
      %v2492 = vunpack.c.h.b16 %v1768
      %v2493 = vunpack.c.l.b16 %v1769
      %v2494 = vunpack.c.h.b16 %v1769
      %v2495 = vunpack.c.l.b16 %v1770
      %v2496 = vunpack.c.h.b16 %v1770
      %v2497 = vunpack.c.l.b16 %v1771
      %v2498 = vunpack.c.h.b16 %v1771
      %v2499 = vunpack.c.l.b16 %v1772
      %v2500 = vunpack.c.h.b16 %v1772
      %v2501 = vunpack.c.l.b16 %v1773
      %v2502 = vunpack.c.h.b16 %v1773
      %v2503 = vunpack.c.l.b16 %v1774
      %v2504 = vunpack.c.h.b16 %v1774
      %v2505 = vunpack.c.l.b16 %v1775
      %v2506 = vunpack.c.h.b16 %v1775
      %v2507 = vunpack.c.l.b16 %v1776
      %v2508 = vunpack.c.h.b16 %v1776
      %v2509 = vunpack.c.l.b16 %v1777
      %v2510 = vunpack.c.h.b16 %v1777
      %v2511 = vunpack.c.l.b16 %v1778
      %v2512 = vunpack.c.h.b16 %v1778
      %v2513 = vunpack.c.l.b16 %v1779
      %v2514 = vunpack.c.h.b16 %v1779
      %v2515 = vunpack.c.l.b16 %v1780
      %v2516 = vunpack.c.h.b16 %v1780
      %v2517 = vunpack.c.l.b16 %v1781
      %v2518 = vunpack.c.h.b16 %v1781
      %v2519 = vunpack.c.l.b16 %v1782
      %v2520 = vunpack.c.h.b16 %v1782
      %v2521 = vunpack.c.l.b16 %v1783
      %v2522 = vunpack.c.h.b16 %v1783
      %v2523 = vunpack.c.l.b16 %v1784
      %v2524 = vunpack.c.h.b16 %v1784
      %v2525 = vunpack.c.l.b16 %v1785
      %v2526 = vunpack.c.h.b16 %v1785
      %v2527 = vunpack.c.l.b16 %v1786
      %v2528 = vunpack.c.h.b16 %v1786
      %v2529 = vunpack.c.l.b16 %v1787
      %v2530 = vunpack.c.h.b16 %v1787
      %v2531 = vunpack.c.l.b16 %v1788
      %v2532 = vunpack.c.h.b16 %v1788
      %v2533 = vunpack.c.l.b16 %v1789
      %v2534 = vunpack.c.h.b16 %v1789
      %v2535 = vunpack.c.l.b16 %v1790
      %v2536 = vunpack.c.h.b16 %v1790
      %v2537 = vunpack.c.l.b16 %v1791
      %v2538 = vunpack.c.h.b16 %v1791
      %v2539 = vunpack.c.l.b16 %v1792
      %v2540 = vunpack.c.h.b16 %v1792
      %v2541 = vunpack.c.l.b16 %v1793
      %v2542 = vunpack.c.h.b16 %v1793
      %v2543 = vunpack.c.l.b16 %v1794
      %v2544 = vunpack.c.h.b16 %v1794
      %v2545 = vunpack.c.l.b16 %v1795
      %v2546 = vunpack.c.h.b16 %v1795
      %v2547 = vunpack.c.l.b16 %v1796
      %v2548 = vunpack.c.h.b16 %v1796
      %v2549 = vunpack.c.l.b16 %v1797
      %v2550 = vunpack.c.h.b16 %v1797
      %v2551 = vunpack.c.l.b16 %v1798
      %v2552 = vunpack.c.h.b16 %v1798
      %v2553 = vunpack.c.l.b16 %v1799
      %v2554 = vunpack.c.h.b16 %v1799
      %v2555 = vunpack.c.l.b16 %v1800
      %v2556 = vunpack.c.h.b16 %v1800
      %v2557 = vunpack.c.l.b16 %v1801
      %v2558 = vunpack.c.h.b16 %v1801
      %v2559 = vunpack.c.l.b16 %v1802
      %v2560 = vunpack.c.h.b16 %v1802
      %v2561 = vunpack.c.l.b16 %v1803
      %v2562 = vunpack.c.h.b16 %v1803
      %v2563 = vunpack.c.l.b16 %v1804
      %v2564 = vunpack.c.h.b16 %v1804
      %v2565 = vunpack.c.l.b16 %v1805
      %v2566 = vunpack.c.h.b16 %v1805
      %v2567 = vunpack.c.l.b16 %v1806
      %v2568 = vunpack.c.h.b16 %v1806
      %v2569 = vunpack.c.l.b16 %v1807
      %v2570 = vunpack.c.h.b16 %v1807
      %v2571 = vunpack.c.l.b16 %v1808
      %v2572 = vunpack.c.h.b16 %v1808
      %v2573 = vunpack.c.l.b16 %v1809
      %v2574 = vunpack.c.h.b16 %v1809
      %v2575 = vunpack.c.l.b16 %v1810
      %v2576 = vunpack.c.h.b16 %v1810
      %v2577 = vunpack.c.l.b16 %v1811
      %v2578 = vunpack.c.h.b16 %v1811
      %v2579 = vunpack.c.l.b16 %v1812
      %v2580 = vunpack.c.h.b16 %v1812
      %v2581 = vunpack.c.l.b16 %v1813
      %v2582 = vunpack.c.h.b16 %v1813
      %v2583 = vunpack.c.l.b16 %v1814
      %v2584 = vunpack.c.h.b16 %v1814
      %v2585 = vunpack.c.l.b16 %v1815
      %v2586 = vunpack.c.h.b16 %v1815
      %v2587 = vunpack.c.l.b16 %v1816
      %v2588 = vunpack.c.h.b16 %v1816
      %v2589 = vunpack.c.l.b16 %v1817
      %v2590 = vunpack.c.h.b16 %v1817
      %v2591 = vunpack.c.l.b16 %v1818
      %v2592 = vunpack.c.h.b16 %v1818
      %v2593 = vunpack.c.l.b16 %v1819
      %v2594 = vunpack.c.h.b16 %v1819
      %v2595 = vunpack.c.l.b16 %v1820
      %v2596 = vunpack.c.h.b16 %v1820
      %v2597 = vunpack.c.l.b16 %v1821
      %v2598 = vunpack.c.h.b16 %v1821
      %v2599 = vunpack.c.l.b16 %v1822
      %v2600 = vunpack.c.h.b16 %v1822
      %v2601 = vunpack.c.l.b16 %v1823
      %v2602 = vunpack.c.h.b16 %v1823
      %v2603 = vunpack.c.l.b16 %v1824
      %v2604 = vunpack.c.h.b16 %v1824
      %v2605 = vunpack.c.l.b16 %v1825
      %v2606 = vunpack.c.h.b16 %v1825
      %v2607 = vunpack.c.l.b16 %v1826
      %v2608 = vunpack.c.h.b16 %v1826
      %v2609 = vunpack.c.l.b16 %v1827
      %v2610 = vunpack.c.h.b16 %v1827
      %v2611 = vunpack.c.l.b16 %v1828
      %v2612 = vunpack.c.h.b16 %v1828
      %v2613 = vunpack.c.l.b16 %v1829
      %v2614 = vunpack.c.h.b16 %v1829
      %v2615 = vunpack.c.l.b16 %v1830
      %v2616 = vunpack.c.h.b16 %v1830
      %v2617 = vunpack.c.l.b16 %v1831
      %v2618 = vunpack.c.h.b16 %v1831
      %v2619 = vunpack.c.l.b16 %v1832
      %v2620 = vunpack.c.h.b16 %v1832
      %v2621 = vunpack.c.l.b16 %v1833
      %v2622 = vunpack.c.h.b16 %v1833
      %v2623 = vunpack.c.l.b16 %v1834
      %v2624 = vunpack.c.h.b16 %v1834
      %v2625 = vpack.c.b16 %v2117, %v2113
      %v2626 = vpack.c.b16 %v2118, %v2114
      %v2627 = vpack.c.b16 %v2119, %v2115
      %v2628 = vpack.c.b16 %v2120, %v2116
      %v2629 = vpack.c.b16 %v2125, %v2121
      %v2630 = vpack.c.b16 %v2126, %v2122
      %v2631 = vpack.c.b16 %v2127, %v2123
      %v2632 = vpack.c.b16 %v2128, %v2124
      %v2633 = vpack.c.b16 %v2133, %v2129
      %v2634 = vpack.c.b16 %v2134, %v2130
      %v2635 = vpack.c.b16 %v2135, %v2131
      %v2636 = vpack.c.b16 %v2136, %v2132
      %v2637 = vpack.c.b16 %v2141, %v2137
      %v2638 = vpack.c.b16 %v2142, %v2138
      %v2639 = vpack.c.b16 %v2143, %v2139
      %v2640 = vpack.c.b16 %v2144, %v2140
      %v2641 = vpack.c.b16 %v2149, %v2145
      %v2642 = vpack.c.b16 %v2150, %v2146
      %v2643 = vpack.c.b16 %v2151, %v2147
      %v2644 = vpack.c.b16 %v2152, %v2148
      %v2645 = vpack.c.b16 %v2157, %v2153
      %v2646 = vpack.c.b16 %v2158, %v2154
      %v2647 = vpack.c.b16 %v2159, %v2155
      %v2648 = vpack.c.b16 %v2160, %v2156
      %v2649 = vpack.c.b16 %v2165, %v2161
      %v2650 = vpack.c.b16 %v2166, %v2162
      %v2651 = vpack.c.b16 %v2167, %v2163
      %v2652 = vpack.c.b16 %v2168, %v2164
      %v2653 = vpack.c.b16 %v2173, %v2169
      %v2654 = vpack.c.b16 %v2174, %v2170
      %v2655 = vpack.c.b16 %v2175, %v2171
      %v2656 = vpack.c.b16 %v2176, %v2172
      %v2657 = vpack.c.b16 %v2181, %v2177
      %v2658 = vpack.c.b16 %v2182, %v2178
      %v2659 = vpack.c.b16 %v2183, %v2179
      %v2660 = vpack.c.b16 %v2184, %v2180
      %v2661 = vpack.c.b16 %v2189, %v2185
      %v2662 = vpack.c.b16 %v2190, %v2186
      %v2663 = vpack.c.b16 %v2191, %v2187
      %v2664 = vpack.c.b16 %v2192, %v2188
      %v2665 = vpack.c.b16 %v2197, %v2193
      %v2666 = vpack.c.b16 %v2198, %v2194
      %v2667 = vpack.c.b16 %v2199, %v2195
      %v2668 = vpack.c.b16 %v2200, %v2196
      %v2669 = vpack.c.b16 %v2205, %v2201
      %v2670 = vpack.c.b16 %v2206, %v2202
      %v2671 = vpack.c.b16 %v2207, %v2203
      %v2672 = vpack.c.b16 %v2208, %v2204
      %v2673 = vpack.c.b16 %v2213, %v2209
      %v2674 = vpack.c.b16 %v2214, %v2210
      %v2675 = vpack.c.b16 %v2215, %v2211
      %v2676 = vpack.c.b16 %v2216, %v2212
      %v2677 = vpack.c.b16 %v2221, %v2217
      %v2678 = vpack.c.b16 %v2222, %v2218
      %v2679 = vpack.c.b16 %v2223, %v2219
      %v2680 = vpack.c.b16 %v2224, %v2220
      %v2681 = vpack.c.b16 %v2229, %v2225
      %v2682 = vpack.c.b16 %v2230, %v2226
      %v2683 = vpack.c.b16 %v2231, %v2227
      %v2684 = vpack.c.b16 %v2232, %v2228
      %v2685 = vpack.c.b16 %v2237, %v2233
      %v2686 = vpack.c.b16 %v2238, %v2234
      %v2687 = vpack.c.b16 %v2239, %v2235
      %v2688 = vpack.c.b16 %v2240, %v2236
      %v2689 = vpack.c.b16 %v2245, %v2241
      %v2690 = vpack.c.b16 %v2246, %v2242
      %v2691 = vpack.c.b16 %v2247, %v2243
      %v2692 = vpack.c.b16 %v2248, %v2244
      %v2693 = vpack.c.b16 %v2253, %v2249
      %v2694 = vpack.c.b16 %v2254, %v2250
      %v2695 = vpack.c.b16 %v2255, %v2251
      %v2696 = vpack.c.b16 %v2256, %v2252
      %v2697 = vpack.c.b16 %v2261, %v2257
      %v2698 = vpack.c.b16 %v2262, %v2258
      %v2699 = vpack.c.b16 %v2263, %v2259
      %v2700 = vpack.c.b16 %v2264, %v2260
      %v2701 = vpack.c.b16 %v2269, %v2265
      %v2702 = vpack.c.b16 %v2270, %v2266
      %v2703 = vpack.c.b16 %v2271, %v2267
      %v2704 = vpack.c.b16 %v2272, %v2268
      %v2705 = vpack.c.b16 %v2277, %v2273
      %v2706 = vpack.c.b16 %v2278, %v2274
      %v2707 = vpack.c.b16 %v2279, %v2275
      %v2708 = vpack.c.b16 %v2280, %v2276
      %v2709 = vpack.c.b16 %v2285, %v2281
      %v2710 = vpack.c.b16 %v2286, %v2282
      %v2711 = vpack.c.b16 %v2287, %v2283
      %v2712 = vpack.c.b16 %v2288, %v2284
      %v2713 = vpack.c.b16 %v2293, %v2289
      %v2714 = vpack.c.b16 %v2294, %v2290
      %v2715 = vpack.c.b16 %v2295, %v2291
      %v2716 = vpack.c.b16 %v2296, %v2292
      %v2717 = vpack.c.b16 %v2301, %v2297
      %v2718 = vpack.c.b16 %v2302, %v2298
      %v2719 = vpack.c.b16 %v2303, %v2299
      %v2720 = vpack.c.b16 %v2304, %v2300
      %v2721 = vpack.c.b16 %v2309, %v2305
      %v2722 = vpack.c.b16 %v2310, %v2306
      %v2723 = vpack.c.b16 %v2311, %v2307
      %v2724 = vpack.c.b16 %v2312, %v2308
      %v2725 = vpack.c.b16 %v2317, %v2313
      %v2726 = vpack.c.b16 %v2318, %v2314
      %v2727 = vpack.c.b16 %v2319, %v2315
      %v2728 = vpack.c.b16 %v2320, %v2316
      %v2729 = vpack.c.b16 %v2325, %v2321
      %v2730 = vpack.c.b16 %v2326, %v2322
      %v2731 = vpack.c.b16 %v2327, %v2323
      %v2732 = vpack.c.b16 %v2328, %v2324
      %v2733 = vpack.c.b16 %v2333, %v2329
      %v2734 = vpack.c.b16 %v2334, %v2330
      %v2735 = vpack.c.b16 %v2335, %v2331
      %v2736 = vpack.c.b16 %v2336, %v2332
      %v2737 = vpack.c.b16 %v2341, %v2337
      %v2738 = vpack.c.b16 %v2342, %v2338
      %v2739 = vpack.c.b16 %v2343, %v2339
      %v2740 = vpack.c.b16 %v2344, %v2340
      %v2741 = vpack.c.b16 %v2349, %v2345
      %v2742 = vpack.c.b16 %v2350, %v2346
      %v2743 = vpack.c.b16 %v2351, %v2347
      %v2744 = vpack.c.b16 %v2352, %v2348
      %v2745 = vpack.c.b16 %v2357, %v2353
      %v2746 = vpack.c.b16 %v2358, %v2354
      %v2747 = vpack.c.b16 %v2359, %v2355
      %v2748 = vpack.c.b16 %v2360, %v2356
      %v2749 = vpack.c.b16 %v2365, %v2361
      %v2750 = vpack.c.b16 %v2366, %v2362
      %v2751 = vpack.c.b16 %v2367, %v2363
      %v2752 = vpack.c.b16 %v2368, %v2364
      %v2753 = vpack.c.b16 %v2373, %v2369
      %v2754 = vpack.c.b16 %v2374, %v2370
      %v2755 = vpack.c.b16 %v2375, %v2371
      %v2756 = vpack.c.b16 %v2376, %v2372
      %v2757 = vpack.c.b16 %v2381, %v2377
      %v2758 = vpack.c.b16 %v2382, %v2378
      %v2759 = vpack.c.b16 %v2383, %v2379
      %v2760 = vpack.c.b16 %v2384, %v2380
      %v2761 = vpack.c.b16 %v2389, %v2385
      %v2762 = vpack.c.b16 %v2390, %v2386
      %v2763 = vpack.c.b16 %v2391, %v2387
      %v2764 = vpack.c.b16 %v2392, %v2388
      %v2765 = vpack.c.b16 %v2397, %v2393
      %v2766 = vpack.c.b16 %v2398, %v2394
      %v2767 = vpack.c.b16 %v2399, %v2395
      %v2768 = vpack.c.b16 %v2400, %v2396
      %v2769 = vpack.c.b16 %v2405, %v2401
      %v2770 = vpack.c.b16 %v2406, %v2402
      %v2771 = vpack.c.b16 %v2407, %v2403
      %v2772 = vpack.c.b16 %v2408, %v2404
      %v2773 = vpack.c.b16 %v2413, %v2409
      %v2774 = vpack.c.b16 %v2414, %v2410
      %v2775 = vpack.c.b16 %v2415, %v2411
      %v2776 = vpack.c.b16 %v2416, %v2412
      %v2777 = vpack.c.b16 %v2421, %v2417
      %v2778 = vpack.c.b16 %v2422, %v2418
      %v2779 = vpack.c.b16 %v2423, %v2419
      %v2780 = vpack.c.b16 %v2424, %v2420
      %v2781 = vpack.c.b16 %v2429, %v2425
      %v2782 = vpack.c.b16 %v2430, %v2426
      %v2783 = vpack.c.b16 %v2431, %v2427
      %v2784 = vpack.c.b16 %v2432, %v2428
      %v2785 = vpack.c.b16 %v2437, %v2433
      %v2786 = vpack.c.b16 %v2438, %v2434
      %v2787 = vpack.c.b16 %v2439, %v2435
      %v2788 = vpack.c.b16 %v2440, %v2436
      %v2789 = vpack.c.b16 %v2445, %v2441
      %v2790 = vpack.c.b16 %v2446, %v2442
      %v2791 = vpack.c.b16 %v2447, %v2443
      %v2792 = vpack.c.b16 %v2448, %v2444
      %v2793 = vpack.c.b16 %v2453, %v2449
      %v2794 = vpack.c.b16 %v2454, %v2450
      %v2795 = vpack.c.b16 %v2455, %v2451
      %v2796 = vpack.c.b16 %v2456, %v2452
      %v2797 = vpack.c.b16 %v2461, %v2457
      %v2798 = vpack.c.b16 %v2462, %v2458
      %v2799 = vpack.c.b16 %v2463, %v2459
      %v2800 = vpack.c.b16 %v2464, %v2460
      %v2801 = vpack.c.b16 %v2469, %v2465
      %v2802 = vpack.c.b16 %v2470, %v2466
      %v2803 = vpack.c.b16 %v2471, %v2467
      %v2804 = vpack.c.b16 %v2472, %v2468
      %v2805 = vpack.c.b16 %v2477, %v2473
      %v2806 = vpack.c.b16 %v2478, %v2474
      %v2807 = vpack.c.b16 %v2479, %v2475
      %v2808 = vpack.c.b16 %v2480, %v2476
      %v2809 = vpack.c.b16 %v2485, %v2481
      %v2810 = vpack.c.b16 %v2486, %v2482
      %v2811 = vpack.c.b16 %v2487, %v2483
      %v2812 = vpack.c.b16 %v2488, %v2484
      %v2813 = vpack.c.b16 %v2493, %v2489
      %v2814 = vpack.c.b16 %v2494, %v2490
      %v2815 = vpack.c.b16 %v2495, %v2491
      %v2816 = vpack.c.b16 %v2496, %v2492
      %v2817 = vpack.c.b16 %v2501, %v2497
      %v2818 = vpack.c.b16 %v2502, %v2498
      %v2819 = vpack.c.b16 %v2503, %v2499
      %v2820 = vpack.c.b16 %v2504, %v2500
      %v2821 = vpack.c.b16 %v2509, %v2505
      %v2822 = vpack.c.b16 %v2510, %v2506
      %v2823 = vpack.c.b16 %v2511, %v2507
      %v2824 = vpack.c.b16 %v2512, %v2508
      %v2825 = vpack.c.b16 %v2517, %v2513
      %v2826 = vpack.c.b16 %v2518, %v2514
      %v2827 = vpack.c.b16 %v2519, %v2515
      %v2828 = vpack.c.b16 %v2520, %v2516
      %v2829 = vpack.c.b16 %v2525, %v2521
      %v2830 = vpack.c.b16 %v2526, %v2522
      %v2831 = vpack.c.b16 %v2527, %v2523
      %v2832 = vpack.c.b16 %v2528, %v2524
      %v2833 = vpack.c.b16 %v2533, %v2529
      %v2834 = vpack.c.b16 %v2534, %v2530
      %v2835 = vpack.c.b16 %v2535, %v2531
      %v2836 = vpack.c.b16 %v2536, %v2532
      %v2837 = vpack.c.b16 %v2541, %v2537
      %v2838 = vpack.c.b16 %v2542, %v2538
      %v2839 = vpack.c.b16 %v2543, %v2539
      %v2840 = vpack.c.b16 %v2544, %v2540
      %v2841 = vpack.c.b16 %v2549, %v2545
      %v2842 = vpack.c.b16 %v2550, %v2546
      %v2843 = vpack.c.b16 %v2551, %v2547
      %v2844 = vpack.c.b16 %v2552, %v2548
      %v2845 = vpack.c.b16 %v2557, %v2553
      %v2846 = vpack.c.b16 %v2558, %v2554
      %v2847 = vpack.c.b16 %v2559, %v2555
      %v2848 = vpack.c.b16 %v2560, %v2556
      %v2849 = vpack.c.b16 %v2565, %v2561
      %v2850 = vpack.c.b16 %v2566, %v2562
      %v2851 = vpack.c.b16 %v2567, %v2563
      %v2852 = vpack.c.b16 %v2568, %v2564
      %v2853 = vpack.c.b16 %v2573, %v2569
      %v2854 = vpack.c.b16 %v2574, %v2570
      %v2855 = vpack.c.b16 %v2575, %v2571
      %v2856 = vpack.c.b16 %v2576, %v2572
      %v2857 = vpack.c.b16 %v2581, %v2577
      %v2858 = vpack.c.b16 %v2582, %v2578
      %v2859 = vpack.c.b16 %v2583, %v2579
      %v2860 = vpack.c.b16 %v2584, %v2580
      %v2861 = vpack.c.b16 %v2589, %v2585
      %v2862 = vpack.c.b16 %v2590, %v2586
      %v2863 = vpack.c.b16 %v2591, %v2587
      %v2864 = vpack.c.b16 %v2592, %v2588
      %v2865 = vpack.c.b16 %v2597, %v2593
      %v2866 = vpack.c.b16 %v2598, %v2594
      %v2867 = vpack.c.b16 %v2599, %v2595
      %v2868 = vpack.c.b16 %v2600, %v2596
      %v2869 = vpack.c.b16 %v2605, %v2601
      %v2870 = vpack.c.b16 %v2606, %v2602
      %v2871 = vpack.c.b16 %v2607, %v2603
      %v2872 = vpack.c.b16 %v2608, %v2604
      %v2873 = vpack.c.b16 %v2613, %v2609
      %v2874 = vpack.c.b16 %v2614, %v2610
      %v2875 = vpack.c.b16 %v2615, %v2611
      %v2876 = vpack.c.b16 %v2616, %v2612
      %v2877 = vpack.c.b16 %v2621, %v2617
      %v2878 = vpack.c.b16 %v2622, %v2618
      %v2879 = vpack.c.b16 %v2623, %v2619
      %v2880 = vpack.c.b16 %v2624, %v2620
      %3137 = vmatprep.subr.bf16.mxu0 %v2626
      %3138 = vmatpush1.bf16.msra.mxu0 %v2625
      %3139 = vmatprep.subr.bf16.mxu0 %v2630
      %3140 = vmatpush1.bf16.msra.mxu0 %v2629
      %3141 = vmatprep.subr.bf16.mxu0 %v2634
      %3142 = vmatpush1.bf16.msra.mxu0 %v2633
      %3143 = vmatprep.subr.bf16.mxu0 %v2638
      %3144 = vmatpush1.bf16.msra.mxu0 %v2637
      %3145 = vmatprep.subr.bf16.mxu0 %v2642
      %3146 = vmatpush1.bf16.msra.mxu0 %v2641
      %3147 = vmatprep.subr.bf16.mxu0 %v2646
      %3148 = vmatpush1.bf16.msra.mxu0 %v2645
      %3149 = vmatprep.subr.bf16.mxu0 %v2650
      %3150 = vmatpush1.bf16.msra.mxu0 %v2649
      %3151 = vmatprep.subr.bf16.mxu0 %v2654
      %3152 = vmatpush1.bf16.msra.mxu0 %v2653
      %3153 = vmatprep.subr.bf16.mxu0 %v2658
      %3154 = vmatpush1.bf16.msra.mxu0 %v2657
      %3155 = vmatprep.subr.bf16.mxu0 %v2662
      %3156 = vmatpush1.bf16.msra.mxu0 %v2661
      %3157 = vmatprep.subr.bf16.mxu0 %v2666
      %3158 = vmatpush1.bf16.msra.mxu0 %v2665
      %3159 = vmatprep.subr.bf16.mxu0 %v2670
      %3160 = vmatpush1.bf16.msra.mxu0 %v2669
      %3161 = vmatprep.subr.bf16.mxu0 %v2674
      %3162 = vmatpush1.bf16.msra.mxu0 %v2673
      %3163 = vmatprep.subr.bf16.mxu0 %v2678
      %3164 = vmatpush1.bf16.msra.mxu0 %v2677
      %3165 = vmatprep.subr.bf16.mxu0 %v2682
      %3166 = vmatpush1.bf16.msra.mxu0 %v2681
      %3167 = vmatprep.subr.bf16.mxu0 %v2686
      %3168 = vmatpush1.bf16.msra.mxu0 %v2685
      %3169 = vmatprep.mubr.bf16.mxu0 %v1516
      %3170 = vmatmul.mubr.bf16.gmra.mrb[0].mxu0 %v1515
      %v3171 = vpop.f32.mrb[0].mxu0
      %v3172 = vadd.f32 %v1840, %v3171
      %v3173 = vpop.f32.mrb[0].mxu0
      %v3174 = vadd.f32 %v1844, %v3173
      %v3175 = vpop.f32.mrb[0].mxu0
      %v3176 = vadd.f32 %v1840, %v3175
      %v3177 = vpop.f32.mrb[0].mxu0
      %v3178 = vadd.f32 %v1844, %v3177
      %3179 = vmatprep.mubr.bf16.mxu0 %v1524
      %3180 = vmatmul.mubr.bf16.gmra.mrb[0].mxu0 %v1523
      %v3181 = vpop.f32.mrb[0].mxu0
      %v3182 = vadd.f32 %v1840, %v3181
      %v3183 = vpop.f32.mrb[0].mxu0
      %v3184 = vadd.f32 %v1844, %v3183
      %v3185 = vpop.f32.mrb[0].mxu0
      %v3186 = vadd.f32 %v1840, %v3185
      %v3187 = vpop.f32.mrb[0].mxu0
      %v3188 = vadd.f32 %v1844, %v3187
      %3189 = vmatprep.mubr.bf16.mxu0 %v1532
      %3190 = vmatmul.mubr.bf16.gmra.mrb[0].mxu0 %v1531
      %v3191 = vpop.f32.mrb[0].mxu0
      %v3192 = vadd.f32 %v1840, %v3191
      %v3193 = vpop.f32.mrb[0].mxu0
      %v3194 = vadd.f32 %v1844, %v3193
      %v3195 = vpop.f32.mrb[0].mxu0
      %v3196 = vadd.f32 %v1840, %v3195
      %v3197 = vpop.f32.mrb[0].mxu0
      %v3198 = vadd.f32 %v1844, %v3197
      %3199 = vmatprep.mubr.bf16.mxu0 %v1540
      %3200 = vmatmul.mubr.bf16.gmra.mrb[0].mxu0 %v1539
      %v3201 = vpop.f32.mrb[0].mxu0
      %v3202 = vadd.f32 %v1840, %v3201
      %v3203 = vpop.f32.mrb[0].mxu0
      %v3204 = vadd.f32 %v1844, %v3203
      %v3205 = vpop.f32.mrb[0].mxu0
      %v3206 = vadd.f32 %v1840, %v3205
      %v3207 = vpop.f32.mrb[0].mxu0
      %v3208 = vadd.f32 %v1844, %v3207
      %3209 = vmatprep.mubr.bf16.mxu0 %v1548
      %3210 = vmatmul.mubr.bf16.gmra.mrb[0].mxu0 %v1547
      %v3211 = vpop.f32.mrb[0].mxu0
      %v3212 = vadd.f32 %v1840, %v3211
      %v3213 = vpop.f32.mrb[0].mxu0
      %v3214 = vadd.f32 %v1844, %v3213
      %v3215 = vpop.f32.mrb[0].mxu0
      %v3216 = vadd.f32 %v1840, %v3215
      %v3217 = vpop.f32.mrb[0].mxu0
      %v3218 = vadd.f32 %v1844, %v3217
      %3219 = vmatprep.mubr.bf16.mxu0 %v1556
      %3220 = vmatmul.mubr.bf16.gmra.mrb[0].mxu0 %v1555
      %v3221 = vpop.f32.mrb[0].mxu0
      %v3222 = vadd.f32 %v1840, %v3221
      %v3223 = vpop.f32.mrb[0].mxu0
      %v3224 = vadd.f32 %v1844, %v3223
      %v3225 = vpop.f32.mrb[0].mxu0
      %v3226 = vadd.f32 %v1840, %v3225
      %v3227 = vpop.f32.mrb[0].mxu0
      %v3228 = vadd.f32 %v1844, %v3227
      %3229 = vmatprep.mubr.bf16.mxu0 %v1564
      %3230 = vmatmul.mubr.bf16.gmra.mrb[0].mxu0 %v1563
      %v3231 = vpop.f32.mrb[0].mxu0
      %v3232 = vadd.f32 %v1840, %v3231
      %v3233 = vpop.f32.mrb[0].mxu0
      %v3234 = vadd.f32 %v1844, %v3233
      %v3235 = vpop.f32.mrb[0].mxu0
      %v3236 = vadd.f32 %v1840, %v3235
      %v3237 = vpop.f32.mrb[0].mxu0
      %v3238 = vadd.f32 %v1844, %v3237
      %3239 = vmatprep.mubr.bf16.mxu0 %v1572
      %3240 = vmatmul.mubr.bf16.gmra.mrb[0].mxu0 %v1571
      %v3241 = vpop.f32.mrb[0].mxu0
      %v3242 = vadd.f32 %v1840, %v3241
      %v3243 = vpop.f32.mrb[0].mxu0
      %v3244 = vadd.f32 %v1844, %v3243
      %v3245 = vpop.f32.mrb[0].mxu0
      %v3246 = vadd.f32 %v1840, %v3245
      %v3247 = vpop.f32.mrb[0].mxu0
      %v3248 = vadd.f32 %v1844, %v3247
      %3249 = vdwg.mxu0
      %3250 = vmatprep.subr.bf16.mxu0 %v2690
      %3251 = vmatpush1.bf16.msra.mxu0 %v2689
      %3252 = vmatprep.subr.bf16.mxu0 %v2694
      %3253 = vmatpush1.bf16.msra.mxu0 %v2693
      %3254 = vmatprep.subr.bf16.mxu0 %v2698
      %3255 = vmatpush1.bf16.msra.mxu0 %v2697
      %3256 = vmatprep.subr.bf16.mxu0 %v2702
      %3257 = vmatpush1.bf16.msra.mxu0 %v2701
      %3258 = vmatprep.subr.bf16.mxu0 %v2706
      %3259 = vmatpush1.bf16.msra.mxu0 %v2705
      %3260 = vmatprep.subr.bf16.mxu0 %v2710
      %3261 = vmatpush1.bf16.msra.mxu0 %v2709
      %3262 = vmatprep.subr.bf16.mxu0 %v2714
      %3263 = vmatpush1.bf16.msra.mxu0 %v2713
      %3264 = vmatprep.subr.bf16.mxu0 %v2718
      %3265 = vmatpush1.bf16.msra.mxu0 %v2717
      %3266 = vmatprep.subr.bf16.mxu0 %v2722
      %3267 = vmatpush1.bf16.msra.mxu0 %v2721
      %3268 = vmatprep.subr.bf16.mxu0 %v2726
      %3269 = vmatpush1.bf16.msra.mxu0 %v2725
      %3270 = vmatprep.subr.bf16.mxu0 %v2730
      %3271 = vmatpush1.bf16.msra.mxu0 %v2729
      %3272 = vmatprep.subr.bf16.mxu0 %v2734
      %3273 = vmatpush1.bf16.msra.mxu0 %v2733
      %3274 = vmatprep.subr.bf16.mxu0 %v2738
      %3275 = vmatpush1.bf16.msra.mxu0 %v2737
      %3276 = vmatprep.subr.bf16.mxu0 %v2742
      %3277 = vmatpush1.bf16.msra.mxu0 %v2741
      %3278 = vmatprep.subr.bf16.mxu0 %v2746
      %3279 = vmatpush1.bf16.msra.mxu0 %v2745
      %3280 = vmatprep.subr.bf16.mxu0 %v2750
      %3281 = vmatpush1.bf16.msra.mxu0 %v2749
      %3282 = vmatprep.mubr.bf16.mxu0 %v1518
      %3283 = vmatmul.mubr.bf16.gmra.mrb[0].mxu0 %v1517
      %v3284 = vpop.f32.mrb[0].mxu0
      %v3285 = vadd.f32 %v3172, %v3284
      %v3286 = vpop.f32.mrb[0].mxu0
      %v3287 = vadd.f32 %v3174, %v3286
      %v3288 = vpop.f32.mrb[0].mxu0
      %v3289 = vadd.f32 %v3176, %v3288
      %v3290 = vpop.f32.mrb[0].mxu0
      %v3291 = vadd.f32 %v3178, %v3290
      %3292 = vmatprep.mubr.bf16.mxu0 %v1526
      %3293 = vmatmul.mubr.bf16.gmra.mrb[0].mxu0 %v1525
      %v3294 = vpop.f32.mrb[0].mxu0
      %v3295 = vadd.f32 %v3182, %v3294
      %v3296 = vpop.f32.mrb[0].mxu0
      %v3297 = vadd.f32 %v3184, %v3296
      %v3298 = vpop.f32.mrb[0].mxu0
      %v3299 = vadd.f32 %v3186, %v3298
      %v3300 = vpop.f32.mrb[0].mxu0
      %v3301 = vadd.f32 %v3188, %v3300
      %3302 = vmatprep.mubr.bf16.mxu0 %v1534
      %3303 = vmatmul.mubr.bf16.gmra.mrb[0].mxu0 %v1533
      %v3304 = vpop.f32.mrb[0].mxu0
      %v3305 = vadd.f32 %v3192, %v3304
      %v3306 = vpop.f32.mrb[0].mxu0
      %v3307 = vadd.f32 %v3194, %v3306
      %v3308 = vpop.f32.mrb[0].mxu0
      %v3309 = vadd.f32 %v3196, %v3308
      %v3310 = vpop.f32.mrb[0].mxu0
      %v3311 = vadd.f32 %v3198, %v3310
      %3312 = vmatprep.mubr.bf16.mxu0 %v1542
      %3313 = vmatmul.mubr.bf16.gmra.mrb[0].mxu0 %v1541
      %v3314 = vpop.f32.mrb[0].mxu0
      %v3315 = vadd.f32 %v3202, %v3314
      %v3316 = vpop.f32.mrb[0].mxu0
      %v3317 = vadd.f32 %v3204, %v3316
      %v3318 = vpop.f32.mrb[0].mxu0
      %v3319 = vadd.f32 %v3206, %v3318
      %v3320 = vpop.f32.mrb[0].mxu0
      %v3321 = vadd.f32 %v3208, %v3320
      %3322 = vmatprep.mubr.bf16.mxu0 %v1550
      %3323 = vmatmul.mubr.bf16.gmra.mrb[0].mxu0 %v1549
      %v3324 = vpop.f32.mrb[0].mxu0
      %v3325 = vadd.f32 %v3212, %v3324
      %v3326 = vpop.f32.mrb[0].mxu0
      %v3327 = vadd.f32 %v3214, %v3326
      %v3328 = vpop.f32.mrb[0].mxu0
      %v3329 = vadd.f32 %v3216, %v3328
      %v3330 = vpop.f32.mrb[0].mxu0
      %v3331 = vadd.f32 %v3218, %v3330
      %3332 = vmatprep.mubr.bf16.mxu0 %v1558
      %3333 = vmatmul.mubr.bf16.gmra.mrb[0].mxu0 %v1557
      %v3334 = vpop.f32.mrb[0].mxu0
      %v3335 = vadd.f32 %v3222, %v3334
      %v3336 = vpop.f32.mrb[0].mxu0
      %v3337 = vadd.f32 %v3224, %v3336
      %v3338 = vpop.f32.mrb[0].mxu0
      %v3339 = vadd.f32 %v3226, %v3338
      %v3340 = vpop.f32.mrb[0].mxu0
      %v3341 = vadd.f32 %v3228, %v3340
      %3342 = vmatprep.mubr.bf16.mxu0 %v1566
      %3343 = vmatmul.mubr.bf16.gmra.mrb[0].mxu0 %v1565
      %v3344 = vpop.f32.mrb[0].mxu0
      %v3345 = vadd.f32 %v3232, %v3344
      %v3346 = vpop.f32.mrb[0].mxu0
      %v3347 = vadd.f32 %v3234, %v3346
      %v3348 = vpop.f32.mrb[0].mxu0
      %v3349 = vadd.f32 %v3236, %v3348
      %v3350 = vpop.f32.mrb[0].mxu0
      %v3351 = vadd.f32 %v3238, %v3350
      %3352 = vmatprep.mubr.bf16.mxu0 %v1574
      %3353 = vmatmul.mubr.bf16.gmra.mrb[0].mxu0 %v1573
      %v3354 = vpop.f32.mrb[0].mxu0
      %v3355 = vadd.f32 %v3242, %v3354
      %v3356 = vpop.f32.mrb[0].mxu0
      %v3357 = vadd.f32 %v3244, %v3356
      %v3358 = vpop.f32.mrb[0].mxu0
      %v3359 = vadd.f32 %v3246, %v3358
      %v3360 = vpop.f32.mrb[0].mxu0
      %v3361 = vadd.f32 %v3248, %v3360
      %3362 = vdwg.mxu0
      %3363 = vmatprep.subr.bf16.mxu0 %v2754
      %3364 = vmatpush1.bf16.msra.mxu0 %v2753
      %3365 = vmatprep.subr.bf16.mxu0 %v2758
      %3366 = vmatpush1.bf16.msra.mxu0 %v2757
      %3367 = vmatprep.subr.bf16.mxu0 %v2762
      %3368 = vmatpush1.bf16.msra.mxu0 %v2761
      %3369 = vmatprep.subr.bf16.mxu0 %v2766
      %3370 = vmatpush1.bf16.msra.mxu0 %v2765
      %3371 = vmatprep.subr.bf16.mxu0 %v2770
      %3372 = vmatpush1.bf16.msra.mxu0 %v2769
      %3373 = vmatprep.subr.bf16.mxu0 %v2774
      %3374 = vmatpush1.bf16.msra.mxu0 %v2773
      %3375 = vmatprep.subr.bf16.mxu0 %v2778
      %3376 = vmatpush1.bf16.msra.mxu0 %v2777
      %3377 = vmatprep.subr.bf16.mxu0 %v2782
      %3378 = vmatpush1.bf16.msra.mxu0 %v2781
      %3379 = vmatprep.subr.bf16.mxu0 %v2786
      %3380 = vmatpush1.bf16.msra.mxu0 %v2785
      %3381 = vmatprep.subr.bf16.mxu0 %v2790
      %3382 = vmatpush1.bf16.msra.mxu0 %v2789
      %3383 = vmatprep.subr.bf16.mxu0 %v2794
      %3384 = vmatpush1.bf16.msra.mxu0 %v2793
      %3385 = vmatprep.subr.bf16.mxu0 %v2798
      %3386 = vmatpush1.bf16.msra.mxu0 %v2797
      %3387 = vmatprep.subr.bf16.mxu0 %v2802
      %3388 = vmatpush1.bf16.msra.mxu0 %v2801
      %3389 = vmatprep.subr.bf16.mxu0 %v2806
      %3390 = vmatpush1.bf16.msra.mxu0 %v2805
      %3391 = vmatprep.subr.bf16.mxu0 %v2810
      %3392 = vmatpush1.bf16.msra.mxu0 %v2809
      %3393 = vmatprep.subr.bf16.mxu0 %v2814
      %3394 = vmatpush1.bf16.msra.mxu0 %v2813
      %3395 = vmatprep.mubr.bf16.mxu0 %v1520
      %3396 = vmatmul.mubr.bf16.gmra.mrb[0].mxu0 %v1519
      %v3397 = vpop.f32.mrb[0].mxu0
      %v3398 = vadd.f32 %v3285, %v3397
      %v3399 = vpop.f32.mrb[0].mxu0
      %v3400 = vadd.f32 %v3287, %v3399
      %v3401 = vpop.f32.mrb[0].mxu0
      %v3402 = vadd.f32 %v3289, %v3401
      %v3403 = vpop.f32.mrb[0].mxu0
      %v3404 = vadd.f32 %v3291, %v3403
      %3405 = vmatprep.mubr.bf16.mxu0 %v1528
      %3406 = vmatmul.mubr.bf16.gmra.mrb[0].mxu0 %v1527
      %v3407 = vpop.f32.mrb[0].mxu0
      %v3408 = vadd.f32 %v3295, %v3407
      %v3409 = vpop.f32.mrb[0].mxu0
      %v3410 = vadd.f32 %v3297, %v3409
      %v3411 = vpop.f32.mrb[0].mxu0
      %v3412 = vadd.f32 %v3299, %v3411
      %v3413 = vpop.f32.mrb[0].mxu0
      %v3414 = vadd.f32 %v3301, %v3413
      %3415 = vmatprep.mubr.bf16.mxu0 %v1536
      %3416 = vmatmul.mubr.bf16.gmra.mrb[0].mxu0 %v1535
      %v3417 = vpop.f32.mrb[0].mxu0
      %v3418 = vadd.f32 %v3305, %v3417
      %v3419 = vpop.f32.mrb[0].mxu0
      %v3420 = vadd.f32 %v3307, %v3419
      %v3421 = vpop.f32.mrb[0].mxu0
      %v3422 = vadd.f32 %v3309, %v3421
      %v3423 = vpop.f32.mrb[0].mxu0
      %v3424 = vadd.f32 %v3311, %v3423
      %3425 = vmatprep.mubr.bf16.mxu0 %v1544
      %3426 = vmatmul.mubr.bf16.gmra.mrb[0].mxu0 %v1543
      %v3427 = vpop.f32.mrb[0].mxu0
      %v3428 = vadd.f32 %v3315, %v3427
      %v3429 = vpop.f32.mrb[0].mxu0
      %v3430 = vadd.f32 %v3317, %v3429
      %v3431 = vpop.f32.mrb[0].mxu0
      %v3432 = vadd.f32 %v3319, %v3431
      %v3433 = vpop.f32.mrb[0].mxu0
      %v3434 = vadd.f32 %v3321, %v3433
      %3435 = vmatprep.mubr.bf16.mxu0 %v1552
      %3436 = vmatmul.mubr.bf16.gmra.mrb[0].mxu0 %v1551
      %v3437 = vpop.f32.mrb[0].mxu0
      %v3438 = vadd.f32 %v3325, %v3437
      %v3439 = vpop.f32.mrb[0].mxu0
      %v3440 = vadd.f32 %v3327, %v3439
      %v3441 = vpop.f32.mrb[0].mxu0
      %v3442 = vadd.f32 %v3329, %v3441
      %v3443 = vpop.f32.mrb[0].mxu0
      %v3444 = vadd.f32 %v3331, %v3443
      %3445 = vmatprep.mubr.bf16.mxu0 %v1560
      %3446 = vmatmul.mubr.bf16.gmra.mrb[0].mxu0 %v1559
      %v3447 = vpop.f32.mrb[0].mxu0
      %v3448 = vadd.f32 %v3335, %v3447
      %v3449 = vpop.f32.mrb[0].mxu0
      %v3450 = vadd.f32 %v3337, %v3449
      %v3451 = vpop.f32.mrb[0].mxu0
      %v3452 = vadd.f32 %v3339, %v3451
      %v3453 = vpop.f32.mrb[0].mxu0
      %v3454 = vadd.f32 %v3341, %v3453
      %3455 = vmatprep.mubr.bf16.mxu0 %v1568
      %3456 = vmatmul.mubr.bf16.gmra.mrb[0].mxu0 %v1567
      %v3457 = vpop.f32.mrb[0].mxu0
      %v3458 = vadd.f32 %v3345, %v3457
      %v3459 = vpop.f32.mrb[0].mxu0
      %v3460 = vadd.f32 %v3347, %v3459
      %v3461 = vpop.f32.mrb[0].mxu0
      %v3462 = vadd.f32 %v3349, %v3461
      %v3463 = vpop.f32.mrb[0].mxu0
      %v3464 = vadd.f32 %v3351, %v3463
      %3465 = vmatprep.mubr.bf16.mxu0 %v1576
      %3466 = vmatmul.mubr.bf16.gmra.mrb[0].mxu0 %v1575
      %v3467 = vpop.f32.mrb[0].mxu0
      %v3468 = vadd.f32 %v3355, %v3467
      %v3469 = vpop.f32.mrb[0].mxu0
      %v3470 = vadd.f32 %v3357, %v3469
      %v3471 = vpop.f32.mrb[0].mxu0
      %v3472 = vadd.f32 %v3359, %v3471
      %v3473 = vpop.f32.mrb[0].mxu0
      %v3474 = vadd.f32 %v3361, %v3473
      %3475 = vdwg.mxu0
      %3476 = vmatprep.subr.bf16.mxu0 %v2818
      %3477 = vmatpush1.bf16.msra.mxu0 %v2817
      %3478 = vmatprep.subr.bf16.mxu0 %v2822
      %3479 = vmatpush1.bf16.msra.mxu0 %v2821
      %3480 = vmatprep.subr.bf16.mxu0 %v2826
      %3481 = vmatpush1.bf16.msra.mxu0 %v2825
      %3482 = vmatprep.subr.bf16.mxu0 %v2830
      %3483 = vmatpush1.bf16.msra.mxu0 %v2829
      %3484 = vmatprep.subr.bf16.mxu0 %v2834
      %3485 = vmatpush1.bf16.msra.mxu0 %v2833
      %3486 = vmatprep.subr.bf16.mxu0 %v2838
      %3487 = vmatpush1.bf16.msra.mxu0 %v2837
      %3488 = vmatprep.subr.bf16.mxu0 %v2842
      %3489 = vmatpush1.bf16.msra.mxu0 %v2841
      %3490 = vmatprep.subr.bf16.mxu0 %v2846
      %3491 = vmatpush1.bf16.msra.mxu0 %v2845
      %3492 = vmatprep.subr.bf16.mxu0 %v2850
      %3493 = vmatpush1.bf16.msra.mxu0 %v2849
      %3494 = vmatprep.subr.bf16.mxu0 %v2854
      %3495 = vmatpush1.bf16.msra.mxu0 %v2853
      %3496 = vmatprep.subr.bf16.mxu0 %v2858
      %3497 = vmatpush1.bf16.msra.mxu0 %v2857
      %3498 = vmatprep.subr.bf16.mxu0 %v2862
      %3499 = vmatpush1.bf16.msra.mxu0 %v2861
      %3500 = vmatprep.subr.bf16.mxu0 %v2866
      %3501 = vmatpush1.bf16.msra.mxu0 %v2865
      %3502 = vmatprep.subr.bf16.mxu0 %v2870
      %3503 = vmatpush1.bf16.msra.mxu0 %v2869
      %3504 = vmatprep.subr.bf16.mxu0 %v2874
      %3505 = vmatpush1.bf16.msra.mxu0 %v2873
      %3506 = vmatprep.subr.bf16.mxu0 %v2878
      %3507 = vmatpush1.bf16.msra.mxu0 %v2877
      %3508 = vmatprep.mubr.bf16.mxu0 %v1522
      %3509 = vmatmul.mubr.bf16.gmra.mrb[0].mxu0 %v1521
      %v3510 = vpop.f32.mrb[0].mxu0
      %v3511 = vadd.f32 %v3398, %v3510
      %v3512 = vpop.f32.mrb[0].mxu0
      %v3513 = vadd.f32 %v3400, %v3512
      %v3514 = vpop.f32.mrb[0].mxu0
      %v3515 = vadd.f32 %v3402, %v3514
      %v3516 = vpop.f32.mrb[0].mxu0
      %v3517 = vadd.f32 %v3404, %v3516
      %3518 = vmatprep.mubr.bf16.mxu0 %v1530
      %3519 = vmatmul.mubr.bf16.gmra.mrb[0].mxu0 %v1529
      %v3520 = vpop.f32.mrb[0].mxu0
      %v3521 = vadd.f32 %v3408, %v3520
      %v3522 = vpop.f32.mrb[0].mxu0
      %v3523 = vadd.f32 %v3410, %v3522
      %v3524 = vpop.f32.mrb[0].mxu0
      %v3525 = vadd.f32 %v3412, %v3524
      %v3526 = vpop.f32.mrb[0].mxu0
      %v3527 = vadd.f32 %v3414, %v3526
      %3528 = vmatprep.mubr.bf16.mxu0 %v1538
      %3529 = vmatmul.mubr.bf16.gmra.mrb[0].mxu0 %v1537
      %v3530 = vpop.f32.mrb[0].mxu0
      %v3531 = vadd.f32 %v3418, %v3530
      %v3532 = vpop.f32.mrb[0].mxu0
      %v3533 = vadd.f32 %v3420, %v3532
      %v3534 = vpop.f32.mrb[0].mxu0
      %v3535 = vadd.f32 %v3422, %v3534
      %v3536 = vpop.f32.mrb[0].mxu0
      %v3537 = vadd.f32 %v3424, %v3536
      %3538 = vmatprep.mubr.bf16.mxu0 %v1546
      %3539 = vmatmul.mubr.bf16.gmra.mrb[0].mxu0 %v1545
      %v3540 = vpop.f32.mrb[0].mxu0
      %v3541 = vadd.f32 %v3428, %v3540
      %v3542 = vpop.f32.mrb[0].mxu0
      %v3543 = vadd.f32 %v3430, %v3542
      %v3544 = vpop.f32.mrb[0].mxu0
      %v3545 = vadd.f32 %v3432, %v3544
      %v3546 = vpop.f32.mrb[0].mxu0
      %v3547 = vadd.f32 %v3434, %v3546
      %3548 = vmatprep.mubr.bf16.mxu0 %v1554
      %3549 = vmatmul.mubr.bf16.gmra.mrb[0].mxu0 %v1553
      %v3550 = vpop.f32.mrb[0].mxu0
      %v3551 = vadd.f32 %v3438, %v3550
      %v3552 = vpop.f32.mrb[0].mxu0
      %v3553 = vadd.f32 %v3440, %v3552
      %v3554 = vpop.f32.mrb[0].mxu0
      %v3555 = vadd.f32 %v3442, %v3554
      %v3556 = vpop.f32.mrb[0].mxu0
      %v3557 = vadd.f32 %v3444, %v3556
      %3558 = vmatprep.mubr.bf16.mxu0 %v1562
      %3559 = vmatmul.mubr.bf16.gmra.mrb[0].mxu0 %v1561
      %v3560 = vpop.f32.mrb[0].mxu0
      %v3561 = vadd.f32 %v3448, %v3560
      %v3562 = vpop.f32.mrb[0].mxu0
      %v3563 = vadd.f32 %v3450, %v3562
      %v3564 = vpop.f32.mrb[0].mxu0
      %v3565 = vadd.f32 %v3452, %v3564
      %v3566 = vpop.f32.mrb[0].mxu0
      %v3567 = vadd.f32 %v3454, %v3566
      %3568 = vmatprep.mubr.bf16.mxu0 %v1570
      %3569 = vmatmul.mubr.bf16.gmra.mrb[0].mxu0 %v1569
      %v3570 = vpop.f32.mrb[0].mxu0
      %v3571 = vadd.f32 %v3458, %v3570
      %v3572 = vpop.f32.mrb[0].mxu0
      %v3573 = vadd.f32 %v3460, %v3572
      %v3574 = vpop.f32.mrb[0].mxu0
      %v3575 = vadd.f32 %v3462, %v3574
      %v3576 = vpop.f32.mrb[0].mxu0
      %v3577 = vadd.f32 %v3464, %v3576
      %3578 = vmatprep.mubr.bf16.mxu0 %v1578
      %3579 = vmatmul.mubr.bf16.gmra.mrb[0].mxu0 %v1577
      %v3580 = vpop.f32.mrb[0].mxu0
      %v3581 = vadd.f32 %v3468, %v3580
      %v3582 = vpop.f32.mrb[0].mxu0
      %v3583 = vadd.f32 %v3470, %v3582
      %v3584 = vpop.f32.mrb[0].mxu0
      %v3585 = vadd.f32 %v3472, %v3584
      %v3586 = vpop.f32.mrb[0].mxu0
      %v3587 = vadd.f32 %v3474, %v3586
      %3588 = vdwg.mxu0
      %3589 = vmatprep.subr.bf16.mxu0 %v2628
      %3590 = vmatpush1.bf16.msra.mxu0 %v2627
      %3591 = vmatprep.subr.bf16.mxu0 %v2632
      %3592 = vmatpush1.bf16.msra.mxu0 %v2631
      %3593 = vmatprep.subr.bf16.mxu0 %v2636
      %3594 = vmatpush1.bf16.msra.mxu0 %v2635
      %3595 = vmatprep.subr.bf16.mxu0 %v2640
      %3596 = vmatpush1.bf16.msra.mxu0 %v2639
      %3597 = vmatprep.subr.bf16.mxu0 %v2644
      %3598 = vmatpush1.bf16.msra.mxu0 %v2643
      %3599 = vmatprep.subr.bf16.mxu0 %v2648
      %3600 = vmatpush1.bf16.msra.mxu0 %v2647
      %3601 = vmatprep.subr.bf16.mxu0 %v2652
      %3602 = vmatpush1.bf16.msra.mxu0 %v2651
      %3603 = vmatprep.subr.bf16.mxu0 %v2656
      %3604 = vmatpush1.bf16.msra.mxu0 %v2655
      %3605 = vmatprep.subr.bf16.mxu0 %v2660
      %3606 = vmatpush1.bf16.msra.mxu0 %v2659
      %3607 = vmatprep.subr.bf16.mxu0 %v2664
      %3608 = vmatpush1.bf16.msra.mxu0 %v2663
      %3609 = vmatprep.subr.bf16.mxu0 %v2668
      %3610 = vmatpush1.bf16.msra.mxu0 %v2667
      %3611 = vmatprep.subr.bf16.mxu0 %v2672
      %3612 = vmatpush1.bf16.msra.mxu0 %v2671
      %3613 = vmatprep.subr.bf16.mxu0 %v2676
      %3614 = vmatpush1.bf16.msra.mxu0 %v2675
      %3615 = vmatprep.subr.bf16.mxu0 %v2680
      %3616 = vmatpush1.bf16.msra.mxu0 %v2679
      %3617 = vmatprep.subr.bf16.mxu0 %v2684
      %3618 = vmatpush1.bf16.msra.mxu0 %v2683
      %3619 = vmatprep.subr.bf16.mxu0 %v2688
      %3620 = vmatpush1.bf16.msra.mxu0 %v2687
      %3621 = vmatprep.mubr.bf16.mxu0 %v1516
      %3622 = vmatmul.mubr.bf16.gmra.mrb[0].mxu0 %v1515
      %v3623 = vpop.f32.mrb[0].mxu0
      %v3624 = vadd.f32 %v1848, %v3623
      %v3625 = vpop.f32.mrb[0].mxu0
      %v3626 = vadd.f32 %v1852, %v3625
      %v3627 = vpop.f32.mrb[0].mxu0
      %v3628 = vadd.f32 %v1848, %v3627
      %v3629 = vpop.f32.mrb[0].mxu0
      %v3630 = vadd.f32 %v1852, %v3629
      %3631 = vmatprep.mubr.bf16.mxu0 %v1524
      %3632 = vmatmul.mubr.bf16.gmra.mrb[0].mxu0 %v1523
      %v3633 = vpop.f32.mrb[0].mxu0
      %v3634 = vadd.f32 %v1848, %v3633
      %v3635 = vpop.f32.mrb[0].mxu0
      %v3636 = vadd.f32 %v1852, %v3635
      %v3637 = vpop.f32.mrb[0].mxu0
      %v3638 = vadd.f32 %v1848, %v3637
      %v3639 = vpop.f32.mrb[0].mxu0
      %v3640 = vadd.f32 %v1852, %v3639
      %3641 = vmatprep.mubr.bf16.mxu0 %v1532
      %3642 = vmatmul.mubr.bf16.gmra.mrb[0].mxu0 %v1531
      %v3643 = vpop.f32.mrb[0].mxu0
      %v3644 = vadd.f32 %v1848, %v3643
      %v3645 = vpop.f32.mrb[0].mxu0
      %v3646 = vadd.f32 %v1852, %v3645
      %v3647 = vpop.f32.mrb[0].mxu0
      %v3648 = vadd.f32 %v1848, %v3647
      %v3649 = vpop.f32.mrb[0].mxu0
      %v3650 = vadd.f32 %v1852, %v3649
      %3651 = vmatprep.mubr.bf16.mxu0 %v1540
      %3652 = vmatmul.mubr.bf16.gmra.mrb[0].mxu0 %v1539
      %v3653 = vpop.f32.mrb[0].mxu0
      %v3654 = vadd.f32 %v1848, %v3653
      %v3655 = vpop.f32.mrb[0].mxu0
      %v3656 = vadd.f32 %v1852, %v3655
      %v3657 = vpop.f32.mrb[0].mxu0
      %v3658 = vadd.f32 %v1848, %v3657
      %v3659 = vpop.f32.mrb[0].mxu0
      %v3660 = vadd.f32 %v1852, %v3659
      %3661 = vmatprep.mubr.bf16.mxu0 %v1548
      %3662 = vmatmul.mubr.bf16.gmra.mrb[0].mxu0 %v1547
      %v3663 = vpop.f32.mrb[0].mxu0
      %v3664 = vadd.f32 %v1848, %v3663
      %v3665 = vpop.f32.mrb[0].mxu0
      %v3666 = vadd.f32 %v1852, %v3665
      %v3667 = vpop.f32.mrb[0].mxu0
      %v3668 = vadd.f32 %v1848, %v3667
      %v3669 = vpop.f32.mrb[0].mxu0
      %v3670 = vadd.f32 %v1852, %v3669
      %3671 = vmatprep.mubr.bf16.mxu0 %v1556
      %3672 = vmatmul.mubr.bf16.gmra.mrb[0].mxu0 %v1555
      %v3673 = vpop.f32.mrb[0].mxu0
      %v3674 = vadd.f32 %v1848, %v3673
      %v3675 = vpop.f32.mrb[0].mxu0
      %v3676 = vadd.f32 %v1852, %v3675
      %v3677 = vpop.f32.mrb[0].mxu0
      %v3678 = vadd.f32 %v1848, %v3677
      %v3679 = vpop.f32.mrb[0].mxu0
      %v3680 = vadd.f32 %v1852, %v3679
      %3681 = vmatprep.mubr.bf16.mxu0 %v1564
      %3682 = vmatmul.mubr.bf16.gmra.mrb[0].mxu0 %v1563
      %v3683 = vpop.f32.mrb[0].mxu0
      %v3684 = vadd.f32 %v1848, %v3683
      %v3685 = vpop.f32.mrb[0].mxu0
      %v3686 = vadd.f32 %v1852, %v3685
      %v3687 = vpop.f32.mrb[0].mxu0
      %v3688 = vadd.f32 %v1848, %v3687
      %v3689 = vpop.f32.mrb[0].mxu0
      %v3690 = vadd.f32 %v1852, %v3689
      %3691 = vmatprep.mubr.bf16.mxu0 %v1572
      %3692 = vmatmul.mubr.bf16.gmra.mrb[0].mxu0 %v1571
      %v3693 = vpop.f32.mrb[0].mxu0
      %v3694 = vadd.f32 %v1848, %v3693
      %v3695 = vpop.f32.mrb[0].mxu0
      %v3696 = vadd.f32 %v1852, %v3695
      %v3697 = vpop.f32.mrb[0].mxu0
      %v3698 = vadd.f32 %v1848, %v3697
      %v3699 = vpop.f32.mrb[0].mxu0
      %v3700 = vadd.f32 %v1852, %v3699
      %3701 = vdwg.mxu0
      %3702 = vmatprep.subr.bf16.mxu0 %v2692
      %3703 = vmatpush1.bf16.msra.mxu0 %v2691
      %3704 = vmatprep.subr.bf16.mxu0 %v2696
      %3705 = vmatpush1.bf16.msra.mxu0 %v2695
      %3706 = vmatprep.subr.bf16.mxu0 %v2700
      %3707 = vmatpush1.bf16.msra.mxu0 %v2699
      %3708 = vmatprep.subr.bf16.mxu0 %v2704
      %3709 = vmatpush1.bf16.msra.mxu0 %v2703
      %3710 = vmatprep.subr.bf16.mxu0 %v2708
      %3711 = vmatpush1.bf16.msra.mxu0 %v2707
      %3712 = vmatprep.subr.bf16.mxu0 %v2712
      %3713 = vmatpush1.bf16.msra.mxu0 %v2711
      %3714 = vmatprep.subr.bf16.mxu0 %v2716
      %3715 = vmatpush1.bf16.msra.mxu0 %v2715
      %3716 = vmatprep.subr.bf16.mxu0 %v2720
      %3717 = vmatpush1.bf16.msra.mxu0 %v2719
      %3718 = vmatprep.subr.bf16.mxu0 %v2724
      %3719 = vmatpush1.bf16.msra.mxu0 %v2723
      %3720 = vmatprep.subr.bf16.mxu0 %v2728
      %3721 = vmatpush1.bf16.msra.mxu0 %v2727
      %3722 = vmatprep.subr.bf16.mxu0 %v2732
      %3723 = vmatpush1.bf16.msra.mxu0 %v2731
      %3724 = vmatprep.subr.bf16.mxu0 %v2736
      %3725 = vmatpush1.bf16.msra.mxu0 %v2735
      %3726 = vmatprep.subr.bf16.mxu0 %v2740
      %3727 = vmatpush1.bf16.msra.mxu0 %v2739
      %3728 = vmatprep.subr.bf16.mxu0 %v2744
      %3729 = vmatpush1.bf16.msra.mxu0 %v2743
      %3730 = vmatprep.subr.bf16.mxu0 %v2748
      %3731 = vmatpush1.bf16.msra.mxu0 %v2747
      %3732 = vmatprep.subr.bf16.mxu0 %v2752
      %3733 = vmatpush1.bf16.msra.mxu0 %v2751
      %3734 = vmatprep.mubr.bf16.mxu0 %v1518
      %3735 = vmatmul.mubr.bf16.gmra.mrb[0].mxu0 %v1517
      %v3736 = vpop.f32.mrb[0].mxu0
      %v3737 = vadd.f32 %v3624, %v3736
      %v3738 = vpop.f32.mrb[0].mxu0
      %v3739 = vadd.f32 %v3626, %v3738
      %v3740 = vpop.f32.mrb[0].mxu0
      %v3741 = vadd.f32 %v3628, %v3740
      %v3742 = vpop.f32.mrb[0].mxu0
      %v3743 = vadd.f32 %v3630, %v3742
      %3744 = vmatprep.mubr.bf16.mxu0 %v1526
      %3745 = vmatmul.mubr.bf16.gmra.mrb[0].mxu0 %v1525
      %v3746 = vpop.f32.mrb[0].mxu0
      %v3747 = vadd.f32 %v3634, %v3746
      %v3748 = vpop.f32.mrb[0].mxu0
      %v3749 = vadd.f32 %v3636, %v3748
      %v3750 = vpop.f32.mrb[0].mxu0
      %v3751 = vadd.f32 %v3638, %v3750
      %v3752 = vpop.f32.mrb[0].mxu0
      %v3753 = vadd.f32 %v3640, %v3752
      %3754 = vmatprep.mubr.bf16.mxu0 %v1534
      %3755 = vmatmul.mubr.bf16.gmra.mrb[0].mxu0 %v1533
      %v3756 = vpop.f32.mrb[0].mxu0
      %v3757 = vadd.f32 %v3644, %v3756
      %v3758 = vpop.f32.mrb[0].mxu0
      %v3759 = vadd.f32 %v3646, %v3758
      %v3760 = vpop.f32.mrb[0].mxu0
      %v3761 = vadd.f32 %v3648, %v3760
      %v3762 = vpop.f32.mrb[0].mxu0
      %v3763 = vadd.f32 %v3650, %v3762
      %3764 = vmatprep.mubr.bf16.mxu0 %v1542
      %3765 = vmatmul.mubr.bf16.gmra.mrb[0].mxu0 %v1541
      %v3766 = vpop.f32.mrb[0].mxu0
      %v3767 = vadd.f32 %v3654, %v3766
      %v3768 = vpop.f32.mrb[0].mxu0
      %v3769 = vadd.f32 %v3656, %v3768
      %v3770 = vpop.f32.mrb[0].mxu0
      %v3771 = vadd.f32 %v3658, %v3770
      %v3772 = vpop.f32.mrb[0].mxu0
      %v3773 = vadd.f32 %v3660, %v3772
      %3774 = vmatprep.mubr.bf16.mxu0 %v1550
      %3775 = vmatmul.mubr.bf16.gmra.mrb[0].mxu0 %v1549
      %v3776 = vpop.f32.mrb[0].mxu0
      %v3777 = vadd.f32 %v3664, %v3776
      %v3778 = vpop.f32.mrb[0].mxu0
      %v3779 = vadd.f32 %v3666, %v3778
      %v3780 = vpop.f32.mrb[0].mxu0
      %v3781 = vadd.f32 %v3668, %v3780
      %v3782 = vpop.f32.mrb[0].mxu0
      %v3783 = vadd.f32 %v3670, %v3782
      %3784 = vmatprep.mubr.bf16.mxu0 %v1558
      %3785 = vmatmul.mubr.bf16.gmra.mrb[0].mxu0 %v1557
      %v3786 = vpop.f32.mrb[0].mxu0
      %v3787 = vadd.f32 %v3674, %v3786
      %v3788 = vpop.f32.mrb[0].mxu0
      %v3789 = vadd.f32 %v3676, %v3788
      %v3790 = vpop.f32.mrb[0].mxu0
      %v3791 = vadd.f32 %v3678, %v3790
      %v3792 = vpop.f32.mrb[0].mxu0
      %v3793 = vadd.f32 %v3680, %v3792
      %3794 = vmatprep.mubr.bf16.mxu0 %v1566
      %3795 = vmatmul.mubr.bf16.gmra.mrb[0].mxu0 %v1565
      %v3796 = vpop.f32.mrb[0].mxu0
      %v3797 = vadd.f32 %v3684, %v3796
      %v3798 = vpop.f32.mrb[0].mxu0
      %v3799 = vadd.f32 %v3686, %v3798
      %v3800 = vpop.f32.mrb[0].mxu0
      %v3801 = vadd.f32 %v3688, %v3800
      %v3802 = vpop.f32.mrb[0].mxu0
      %v3803 = vadd.f32 %v3690, %v3802
      %3804 = vmatprep.mubr.bf16.mxu0 %v1574
      %3805 = vmatmul.mubr.bf16.gmra.mrb[0].mxu0 %v1573
      %v3806 = vpop.f32.mrb[0].mxu0
      %v3807 = vadd.f32 %v3694, %v3806
      %v3808 = vpop.f32.mrb[0].mxu0
      %v3809 = vadd.f32 %v3696, %v3808
      %v3810 = vpop.f32.mrb[0].mxu0
      %v3811 = vadd.f32 %v3698, %v3810
      %v3812 = vpop.f32.mrb[0].mxu0
      %v3813 = vadd.f32 %v3700, %v3812
      %3814 = vdwg.mxu0
      %3815 = vmatprep.subr.bf16.mxu0 %v2756
      %3816 = vmatpush1.bf16.msra.mxu0 %v2755
      %3817 = vmatprep.subr.bf16.mxu0 %v2760
      %3818 = vmatpush1.bf16.msra.mxu0 %v2759
      %3819 = vmatprep.subr.bf16.mxu0 %v2764
      %3820 = vmatpush1.bf16.msra.mxu0 %v2763
      %3821 = vmatprep.subr.bf16.mxu0 %v2768
      %3822 = vmatpush1.bf16.msra.mxu0 %v2767
      %3823 = vmatprep.subr.bf16.mxu0 %v2772
      %3824 = vmatpush1.bf16.msra.mxu0 %v2771
      %3825 = vmatprep.subr.bf16.mxu0 %v2776
      %3826 = vmatpush1.bf16.msra.mxu0 %v2775
      %3827 = vmatprep.subr.bf16.mxu0 %v2780
      %3828 = vmatpush1.bf16.msra.mxu0 %v2779
      %3829 = vmatprep.subr.bf16.mxu0 %v2784
      %3830 = vmatpush1.bf16.msra.mxu0 %v2783
      %3831 = vmatprep.subr.bf16.mxu0 %v2788
      %3832 = vmatpush1.bf16.msra.mxu0 %v2787
      %3833 = vmatprep.subr.bf16.mxu0 %v2792
      %3834 = vmatpush1.bf16.msra.mxu0 %v2791
      %3835 = vmatprep.subr.bf16.mxu0 %v2796
      %3836 = vmatpush1.bf16.msra.mxu0 %v2795
      %3837 = vmatprep.subr.bf16.mxu0 %v2800
      %3838 = vmatpush1.bf16.msra.mxu0 %v2799
      %3839 = vmatprep.subr.bf16.mxu0 %v2804
      %3840 = vmatpush1.bf16.msra.mxu0 %v2803
      %3841 = vmatprep.subr.bf16.mxu0 %v2808
      %3842 = vmatpush1.bf16.msra.mxu0 %v2807
      %3843 = vmatprep.subr.bf16.mxu0 %v2812
      %3844 = vmatpush1.bf16.msra.mxu0 %v2811
      %3845 = vmatprep.subr.bf16.mxu0 %v2816
      %3846 = vmatpush1.bf16.msra.mxu0 %v2815
      %3847 = vmatprep.mubr.bf16.mxu0 %v1520
      %3848 = vmatmul.mubr.bf16.gmra.mrb[0].mxu0 %v1519
      %v3849 = vpop.f32.mrb[0].mxu0
      %v3850 = vadd.f32 %v3737, %v3849
      %v3851 = vpop.f32.mrb[0].mxu0
      %v3852 = vadd.f32 %v3739, %v3851
      %v3853 = vpop.f32.mrb[0].mxu0
      %v3854 = vadd.f32 %v3741, %v3853
      %v3855 = vpop.f32.mrb[0].mxu0
      %v3856 = vadd.f32 %v3743, %v3855
      %3857 = vmatprep.mubr.bf16.mxu0 %v1528
      %3858 = vmatmul.mubr.bf16.gmra.mrb[0].mxu0 %v1527
      %v3859 = vpop.f32.mrb[0].mxu0
      %v3860 = vadd.f32 %v3747, %v3859
      %v3861 = vpop.f32.mrb[0].mxu0
      %v3862 = vadd.f32 %v3749, %v3861
      %v3863 = vpop.f32.mrb[0].mxu0
      %v3864 = vadd.f32 %v3751, %v3863
      %v3865 = vpop.f32.mrb[0].mxu0
      %v3866 = vadd.f32 %v3753, %v3865
      %3867 = vmatprep.mubr.bf16.mxu0 %v1536
      %3868 = vmatmul.mubr.bf16.gmra.mrb[0].mxu0 %v1535
      %v3869 = vpop.f32.mrb[0].mxu0
      %v3870 = vadd.f32 %v3757, %v3869
      %v3871 = vpop.f32.mrb[0].mxu0
      %v3872 = vadd.f32 %v3759, %v3871
      %v3873 = vpop.f32.mrb[0].mxu0
      %v3874 = vadd.f32 %v3761, %v3873
      %v3875 = vpop.f32.mrb[0].mxu0
      %v3876 = vadd.f32 %v3763, %v3875
      %3877 = vmatprep.mubr.bf16.mxu0 %v1544
      %3878 = vmatmul.mubr.bf16.gmra.mrb[0].mxu0 %v1543
      %v3879 = vpop.f32.mrb[0].mxu0
      %v3880 = vadd.f32 %v3767, %v3879
      %v3881 = vpop.f32.mrb[0].mxu0
      %v3882 = vadd.f32 %v3769, %v3881
      %v3883 = vpop.f32.mrb[0].mxu0
      %v3884 = vadd.f32 %v3771, %v3883
      %v3885 = vpop.f32.mrb[0].mxu0
      %v3886 = vadd.f32 %v3773, %v3885
      %3887 = vmatprep.mubr.bf16.mxu0 %v1552
      %3888 = vmatmul.mubr.bf16.gmra.mrb[0].mxu0 %v1551
      %v3889 = vpop.f32.mrb[0].mxu0
      %v3890 = vadd.f32 %v3777, %v3889
      %v3891 = vpop.f32.mrb[0].mxu0
      %v3892 = vadd.f32 %v3779, %v3891
      %v3893 = vpop.f32.mrb[0].mxu0
      %v3894 = vadd.f32 %v3781, %v3893
      %v3895 = vpop.f32.mrb[0].mxu0
      %v3896 = vadd.f32 %v3783, %v3895
      %3897 = vmatprep.mubr.bf16.mxu0 %v1560
      %3898 = vmatmul.mubr.bf16.gmra.mrb[0].mxu0 %v1559
      %v3899 = vpop.f32.mrb[0].mxu0
      %v3900 = vadd.f32 %v3787, %v3899
      %v3901 = vpop.f32.mrb[0].mxu0
      %v3902 = vadd.f32 %v3789, %v3901
      %v3903 = vpop.f32.mrb[0].mxu0
      %v3904 = vadd.f32 %v3791, %v3903
      %v3905 = vpop.f32.mrb[0].mxu0
      %v3906 = vadd.f32 %v3793, %v3905
      %3907 = vmatprep.mubr.bf16.mxu0 %v1568
      %3908 = vmatmul.mubr.bf16.gmra.mrb[0].mxu0 %v1567
      %v3909 = vpop.f32.mrb[0].mxu0
      %v3910 = vadd.f32 %v3797, %v3909
      %v3911 = vpop.f32.mrb[0].mxu0
      %v3912 = vadd.f32 %v3799, %v3911
      %v3913 = vpop.f32.mrb[0].mxu0
      %v3914 = vadd.f32 %v3801, %v3913
      %v3915 = vpop.f32.mrb[0].mxu0
      %v3916 = vadd.f32 %v3803, %v3915
      %3917 = vmatprep.mubr.bf16.mxu0 %v1576
      %3918 = vmatmul.mubr.bf16.gmra.mrb[0].mxu0 %v1575
      %v3919 = vpop.f32.mrb[0].mxu0
      %v3920 = vadd.f32 %v3807, %v3919
      %v3921 = vpop.f32.mrb[0].mxu0
      %v3922 = vadd.f32 %v3809, %v3921
      %v3923 = vpop.f32.mrb[0].mxu0
      %v3924 = vadd.f32 %v3811, %v3923
      %v3925 = vpop.f32.mrb[0].mxu0
      %v3926 = vadd.f32 %v3813, %v3925
      %3927 = vdwg.mxu0
      %3928 = vmatprep.subr.bf16.mxu0 %v2820
      %3929 = vmatpush1.bf16.msra.mxu0 %v2819
      %3930 = vmatprep.subr.bf16.mxu0 %v2824
      %3931 = vmatpush1.bf16.msra.mxu0 %v2823
      %3932 = vmatprep.subr.bf16.mxu0 %v2828
      %3933 = vmatpush1.bf16.msra.mxu0 %v2827
      %3934 = vmatprep.subr.bf16.mxu0 %v2832
      %3935 = vmatpush1.bf16.msra.mxu0 %v2831
      %3936 = vmatprep.subr.bf16.mxu0 %v2836
      %3937 = vmatpush1.bf16.msra.mxu0 %v2835
      %3938 = vmatprep.subr.bf16.mxu0 %v2840
      %3939 = vmatpush1.bf16.msra.mxu0 %v2839
      %3940 = vmatprep.subr.bf16.mxu0 %v2844
      %3941 = vmatpush1.bf16.msra.mxu0 %v2843
      %3942 = vmatprep.subr.bf16.mxu0 %v2848
      %3943 = vmatpush1.bf16.msra.mxu0 %v2847
      %3944 = vmatprep.subr.bf16.mxu0 %v2852
      %3945 = vmatpush1.bf16.msra.mxu0 %v2851
      %3946 = vmatprep.subr.bf16.mxu0 %v2856
      %3947 = vmatpush1.bf16.msra.mxu0 %v2855
      %3948 = vmatprep.subr.bf16.mxu0 %v2860
      %3949 = vmatpush1.bf16.msra.mxu0 %v2859
      %3950 = vmatprep.subr.bf16.mxu0 %v2864
      %3951 = vmatpush1.bf16.msra.mxu0 %v2863
      %3952 = vmatprep.subr.bf16.mxu0 %v2868
      %3953 = vmatpush1.bf16.msra.mxu0 %v2867
      %3954 = vmatprep.subr.bf16.mxu0 %v2872
      %3955 = vmatpush1.bf16.msra.mxu0 %v2871
      %3956 = vmatprep.subr.bf16.mxu0 %v2876
      %3957 = vmatpush1.bf16.msra.mxu0 %v2875
      %3958 = vmatprep.subr.bf16.mxu0 %v2880
      %3959 = vmatpush1.bf16.msra.mxu0 %v2879
      %3960 = vmatprep.mubr.bf16.mxu0 %v1522
      %3961 = vmatmul.mubr.bf16.gmra.mrb[0].mxu0 %v1521
      %v3962 = vpop.f32.mrb[0].mxu0
      %v3963 = vadd.f32 %v3850, %v3962
      %v3964 = vpop.f32.mrb[0].mxu0
      %v3965 = vadd.f32 %v3852, %v3964
      %v3966 = vpop.f32.mrb[0].mxu0
      %v3967 = vadd.f32 %v3854, %v3966
      %v3968 = vpop.f32.mrb[0].mxu0
      %v3969 = vadd.f32 %v3856, %v3968
      %3970 = vmatprep.mubr.bf16.mxu0 %v1530
      %3971 = vmatmul.mubr.bf16.gmra.mrb[0].mxu0 %v1529
      %v3972 = vpop.f32.mrb[0].mxu0
      %v3973 = vadd.f32 %v3860, %v3972
      %v3974 = vpop.f32.mrb[0].mxu0
      %v3975 = vadd.f32 %v3862, %v3974
      %v3976 = vpop.f32.mrb[0].mxu0
      %v3977 = vadd.f32 %v3864, %v3976
      %v3978 = vpop.f32.mrb[0].mxu0
      %v3979 = vadd.f32 %v3866, %v3978
      %3980 = vmatprep.mubr.bf16.mxu0 %v1538
      %3981 = vmatmul.mubr.bf16.gmra.mrb[0].mxu0 %v1537
      %v3982 = vpop.f32.mrb[0].mxu0
      %v3983 = vadd.f32 %v3870, %v3982
      %v3984 = vpop.f32.mrb[0].mxu0
      %v3985 = vadd.f32 %v3872, %v3984
      %v3986 = vpop.f32.mrb[0].mxu0
      %v3987 = vadd.f32 %v3874, %v3986
      %v3988 = vpop.f32.mrb[0].mxu0
      %v3989 = vadd.f32 %v3876, %v3988
      %3990 = vmatprep.mubr.bf16.mxu0 %v1546
      %3991 = vmatmul.mubr.bf16.gmra.mrb[0].mxu0 %v1545
      %v3992 = vpop.f32.mrb[0].mxu0
      %v3993 = vadd.f32 %v3880, %v3992
      %v3994 = vpop.f32.mrb[0].mxu0
      %v3995 = vadd.f32 %v3882, %v3994
      %v3996 = vpop.f32.mrb[0].mxu0
      %v3997 = vadd.f32 %v3884, %v3996
      %v3998 = vpop.f32.mrb[0].mxu0
      %v3999 = vadd.f32 %v3886, %v3998
      %4000 = vmatprep.mubr.bf16.mxu0 %v1554
      %4001 = vmatmul.mubr.bf16.gmra.mrb[0].mxu0 %v1553
      %v4002 = vpop.f32.mrb[0].mxu0
      %v4003 = vadd.f32 %v3890, %v4002
      %v4004 = vpop.f32.mrb[0].mxu0
      %v4005 = vadd.f32 %v3892, %v4004
      %v4006 = vpop.f32.mrb[0].mxu0
      %v4007 = vadd.f32 %v3894, %v4006
      %v4008 = vpop.f32.mrb[0].mxu0
      %v4009 = vadd.f32 %v3896, %v4008
      %4010 = vmatprep.mubr.bf16.mxu0 %v1562
      %4011 = vmatmul.mubr.bf16.gmra.mrb[0].mxu0 %v1561
      %v4012 = vpop.f32.mrb[0].mxu0
      %v4013 = vadd.f32 %v3900, %v4012
      %v4014 = vpop.f32.mrb[0].mxu0
      %v4015 = vadd.f32 %v3902, %v4014
      %v4016 = vpop.f32.mrb[0].mxu0
      %v4017 = vadd.f32 %v3904, %v4016
      %v4018 = vpop.f32.mrb[0].mxu0
      %v4019 = vadd.f32 %v3906, %v4018
      %4020 = vmatprep.mubr.bf16.mxu0 %v1570
      %4021 = vmatmul.mubr.bf16.gmra.mrb[0].mxu0 %v1569
      %v4022 = vpop.f32.mrb[0].mxu0
      %v4023 = vadd.f32 %v3910, %v4022
      %v4024 = vpop.f32.mrb[0].mxu0
      %v4025 = vadd.f32 %v3912, %v4024
      %v4026 = vpop.f32.mrb[0].mxu0
      %v4027 = vadd.f32 %v3914, %v4026
      %v4028 = vpop.f32.mrb[0].mxu0
      %v4029 = vadd.f32 %v3916, %v4028
      %4030 = vmatprep.mubr.bf16.mxu0 %v1578
      %4031 = vmatmul.mubr.bf16.gmra.mrb[0].mxu0 %v1577
      %v4032 = vpop.f32.mrb[0].mxu0
      %v4033 = vadd.f32 %v3920, %v4032
      %v4034 = vpop.f32.mrb[0].mxu0
      %v4035 = vadd.f32 %v3922, %v4034
      %v4036 = vpop.f32.mrb[0].mxu0
      %v4037 = vadd.f32 %v3924, %v4036
      %v4038 = vpop.f32.mrb[0].mxu0
      %v4039 = vadd.f32 %v3926, %v4038
      %4040 = vdwg.mxu0
      %v4041 = vmax.f32 %v3511, 0.0
      %v4042 = vmax.f32 %v3513, 0.0
      %v4043 = vmax.f32 %v3963, 0.0
      %v4044 = vmax.f32 %v3965, 0.0
      %v4045 = vmax.f32 %v3515, 0.0
      %v4046 = vmax.f32 %v3517, 0.0
      %v4047 = vmax.f32 %v3967, 0.0
      %v4048 = vmax.f32 %v3969, 0.0
      %v4049 = vmax.f32 %v3521, 0.0
      %v4050 = vmax.f32 %v3523, 0.0
      %v4051 = vmax.f32 %v3973, 0.0
      %v4052 = vmax.f32 %v3975, 0.0
      %v4053 = vmax.f32 %v3525, 0.0
      %v4054 = vmax.f32 %v3527, 0.0
      %v4055 = vmax.f32 %v3977, 0.0
      %v4056 = vmax.f32 %v3979, 0.0
      %v4057 = vmax.f32 %v3531, 0.0
      %v4058 = vmax.f32 %v3533, 0.0
      %v4059 = vmax.f32 %v3983, 0.0
      %v4060 = vmax.f32 %v3985, 0.0
      %v4061 = vmax.f32 %v3535, 0.0
      %v4062 = vmax.f32 %v3537, 0.0
      %v4063 = vmax.f32 %v3987, 0.0
      %v4064 = vmax.f32 %v3989, 0.0
      %v4065 = vmax.f32 %v3541, 0.0
      %v4066 = vmax.f32 %v3543, 0.0
      %v4067 = vmax.f32 %v3993, 0.0
      %v4068 = vmax.f32 %v3995, 0.0
      %v4069 = vmax.f32 %v3545, 0.0
      %v4070 = vmax.f32 %v3547, 0.0
      %v4071 = vmax.f32 %v3997, 0.0
      %v4072 = vmax.f32 %v3999, 0.0
      %v4073 = vmax.f32 %v3551, 0.0
      %v4074 = vmax.f32 %v3553, 0.0
      %v4075 = vmax.f32 %v4003, 0.0
      %v4076 = vmax.f32 %v4005, 0.0
      %v4077 = vmax.f32 %v3555, 0.0
      %v4078 = vmax.f32 %v3557, 0.0
      %v4079 = vmax.f32 %v4007, 0.0
      %v4080 = vmax.f32 %v4009, 0.0
      %v4081 = vmax.f32 %v3561, 0.0
      %v4082 = vmax.f32 %v3563, 0.0
      %v4083 = vmax.f32 %v4013, 0.0
      %v4084 = vmax.f32 %v4015, 0.0
      %v4085 = vmax.f32 %v3565, 0.0
      %v4086 = vmax.f32 %v3567, 0.0
      %v4087 = vmax.f32 %v4017, 0.0
      %v4088 = vmax.f32 %v4019, 0.0
      %v4089 = vmax.f32 %v3571, 0.0
      %v4090 = vmax.f32 %v3573, 0.0
      %v4091 = vmax.f32 %v4023, 0.0
      %v4092 = vmax.f32 %v4025, 0.0
      %v4093 = vmax.f32 %v3575, 0.0
      %v4094 = vmax.f32 %v3577, 0.0
      %v4095 = vmax.f32 %v4027, 0.0
      %v4096 = vmax.f32 %v4029, 0.0
      %v4097 = vmax.f32 %v3581, 0.0
      %v4098 = vmax.f32 %v3583, 0.0
      %v4099 = vmax.f32 %v4033, 0.0
      %v4100 = vmax.f32 %v4035, 0.0
      %v4101 = vmax.f32 %v3585, 0.0
      %v4102 = vmax.f32 %v3587, 0.0
      %v4103 = vmax.f32 %v4037, 0.0
      %v4104 = vmax.f32 %v4039, 0.0
      %v4105 = vpack.c.bf16 %v4045, %v4041
      %v4106 = vpack.c.bf16 %v4046, %v4042
      %v4107 = vpack.c.bf16 %v4047, %v4043
      %v4108 = vpack.c.bf16 %v4048, %v4044
      %v4109 = vpack.c.bf16 %v4053, %v4049
      %v4110 = vpack.c.bf16 %v4054, %v4050
      %v4111 = vpack.c.bf16 %v4055, %v4051
      %v4112 = vpack.c.bf16 %v4056, %v4052
      %v4113 = vpack.c.bf16 %v4061, %v4057
      %v4114 = vpack.c.bf16 %v4062, %v4058
      %v4115 = vpack.c.bf16 %v4063, %v4059
      %v4116 = vpack.c.bf16 %v4064, %v4060
      %v4117 = vpack.c.bf16 %v4069, %v4065
      %v4118 = vpack.c.bf16 %v4070, %v4066
      %v4119 = vpack.c.bf16 %v4071, %v4067
      %v4120 = vpack.c.bf16 %v4072, %v4068
      %v4121 = vpack.c.bf16 %v4077, %v4073
      %v4122 = vpack.c.bf16 %v4078, %v4074
      %v4123 = vpack.c.bf16 %v4079, %v4075
      %v4124 = vpack.c.bf16 %v4080, %v4076
      %v4125 = vpack.c.bf16 %v4085, %v4081
      %v4126 = vpack.c.bf16 %v4086, %v4082
      %v4127 = vpack.c.bf16 %v4087, %v4083
      %v4128 = vpack.c.bf16 %v4088, %v4084
      %v4129 = vpack.c.bf16 %v4093, %v4089
      %v4130 = vpack.c.bf16 %v4094, %v4090
      %v4131 = vpack.c.bf16 %v4095, %v4091
      %v4132 = vpack.c.bf16 %v4096, %v4092
      %v4133 = vpack.c.bf16 %v4101, %v4097
      %v4134 = vpack.c.bf16 %v4102, %v4098
      %v4135 = vpack.c.bf16 %v4103, %v4099
      %v4136 = vpack.c.bf16 %v4104, %v4100
      %v4137 = vld [vmem:[%s5] sm:$0xff]
      %v4138 = vld [vmem:[%s5 + $0x8] sm:$0xff]
      %v4139 = vld [vmem:[%s5 + $0x10] sm:$0xff]
      %v4140 = vld [vmem:[%s5 + $0x18] sm:$0xff]
      %v4141 = vld [vmem:[%s5 + $0x20] sm:$0xff]
      %v4142 = vld [vmem:[%s5 + $0x28] sm:$0xff]
      %v4143 = vld [vmem:[%s5 + $0x30] sm:$0xff]
      %v4144 = vld [vmem:[%s5 + $0x38] sm:$0xff]
      %v4145 = vld [vmem:[%s5 + $0x40] sm:$0xff]
      %v4146 = vld [vmem:[%s5 + $0x48] sm:$0xff]
      %v4147 = vld [vmem:[%s5 + $0x50] sm:$0xff]
      %v4148 = vld [vmem:[%s5 + $0x58] sm:$0xff]
      %v4149 = vld [vmem:[%s5 + $0x60] sm:$0xff]
      %v4150 = vld [vmem:[%s5 + $0x68] sm:$0xff]
      %v4151 = vld [vmem:[%s5 + $0x70] sm:$0xff]
      %v4152 = vld [vmem:[%s5 + $0x78] sm:$0xff]
      %v4153 = vld [vmem:[%s5 + $0x80] sm:$0xff]
      %v4154 = vld [vmem:[%s5 + $0x88] sm:$0xff]
      %v4155 = vld [vmem:[%s5 + $0x90] sm:$0xff]
      %v4156 = vld [vmem:[%s5 + $0x98] sm:$0xff]
      %v4157 = vld [vmem:[%s5 + $0xa0] sm:$0xff]
      %v4158 = vld [vmem:[%s5 + $0xa8] sm:$0xff]
      %v4159 = vld [vmem:[%s5 + $0xb0] sm:$0xff]
      %v4160 = vld [vmem:[%s5 + $0xb8] sm:$0xff]
      %v4161 = vld [vmem:[%s5 + $0xc0] sm:$0xff]
      %v4162 = vld [vmem:[%s5 + $0xc8] sm:$0xff]
      %v4163 = vld [vmem:[%s5 + $0xd0] sm:$0xff]
      %v4164 = vld [vmem:[%s5 + $0xd8] sm:$0xff]
      %v4165 = vld [vmem:[%s5 + $0xe0] sm:$0xff]
      %v4166 = vld [vmem:[%s5 + $0xe8] sm:$0xff]
      %v4167 = vld [vmem:[%s5 + $0xf0] sm:$0xff]
      %v4168 = vld [vmem:[%s5 + $0xf8] sm:$0xff]
      %v4169 = vld [vmem:[%s5 + $0x100] sm:$0xff]
      %v4170 = vld [vmem:[%s5 + $0x108] sm:$0xff]
      %v4171 = vld [vmem:[%s5 + $0x110] sm:$0xff]
      %v4172 = vld [vmem:[%s5 + $0x118] sm:$0xff]
      %v4173 = vld [vmem:[%s5 + $0x120] sm:$0xff]
      %v4174 = vld [vmem:[%s5 + $0x128] sm:$0xff]
      %v4175 = vld [vmem:[%s5 + $0x130] sm:$0xff]
      %v4176 = vld [vmem:[%s5 + $0x138] sm:$0xff]
      %v4177 = vld [vmem:[%s5 + $0x140] sm:$0xff]
      %v4178 = vld [vmem:[%s5 + $0x148] sm:$0xff]
      %v4179 = vld [vmem:[%s5 + $0x150] sm:$0xff]
      %v4180 = vld [vmem:[%s5 + $0x158] sm:$0xff]
      %v4181 = vld [vmem:[%s5 + $0x160] sm:$0xff]
      %v4182 = vld [vmem:[%s5 + $0x168] sm:$0xff]
      %v4183 = vld [vmem:[%s5 + $0x170] sm:$0xff]
      %v4184 = vld [vmem:[%s5 + $0x178] sm:$0xff]
      %v4185 = vld [vmem:[%s5 + $0x180] sm:$0xff]
      %v4186 = vld [vmem:[%s5 + $0x188] sm:$0xff]
      %v4187 = vld [vmem:[%s5 + $0x190] sm:$0xff]
      %v4188 = vld [vmem:[%s5 + $0x198] sm:$0xff]
      %v4189 = vld [vmem:[%s5 + $0x1a0] sm:$0xff]
      %v4190 = vld [vmem:[%s5 + $0x1a8] sm:$0xff]
      %v4191 = vld [vmem:[%s5 + $0x1b0] sm:$0xff]
      %v4192 = vld [vmem:[%s5 + $0x1b8] sm:$0xff]
      %v4193 = vld [vmem:[%s5 + $0x1c0] sm:$0xff]
      %v4194 = vld [vmem:[%s5 + $0x1c8] sm:$0xff]
      %v4195 = vld [vmem:[%s5 + $0x1d0] sm:$0xff]
      %v4196 = vld [vmem:[%s5 + $0x1d8] sm:$0xff]
      %v4197 = vld [vmem:[%s5 + $0x1e0] sm:$0xff]
      %v4198 = vld [vmem:[%s5 + $0x1e8] sm:$0xff]
      %v4199 = vld [vmem:[%s5 + $0x1f0] sm:$0xff]
      %v4200 = vld [vmem:[%s5 + $0x1f8] sm:$0xff]
      %v4201 = vld [vmem:[%s6] sm:$0x3]
      %v4203 = vlaneseq
      %v4204 = vshrl.u32 %v4203, 7
      %v4205 = vsub.s32 0, %v4204
      %v4206 = vrot.slane %v4201, %v4205
      %v4207 = vlaneseq
      %v4208 = vshrl.u32 %v4207, 7
      %v4209 = vsub.s32 1, %v4208
      %v4210 = vrot.slane %v4201, %v4209
      %v4277 = vunpack.c.l.b16 %v4137
      %v4278 = vunpack.c.h.b16 %v4137
      %v4279 = vunpack.c.l.b16 %v4138
      %v4280 = vunpack.c.h.b16 %v4138
      %v4281 = vunpack.c.l.b16 %v4139
      %v4282 = vunpack.c.h.b16 %v4139
      %v4283 = vunpack.c.l.b16 %v4140
      %v4284 = vunpack.c.h.b16 %v4140
      %v4285 = vunpack.c.l.b16 %v4141
      %v4286 = vunpack.c.h.b16 %v4141
      %v4287 = vunpack.c.l.b16 %v4142
      %v4288 = vunpack.c.h.b16 %v4142
      %v4289 = vunpack.c.l.b16 %v4143
      %v4290 = vunpack.c.h.b16 %v4143
      %v4291 = vunpack.c.l.b16 %v4144
      %v4292 = vunpack.c.h.b16 %v4144
      %v4293 = vunpack.c.l.b16 %v4145
      %v4294 = vunpack.c.h.b16 %v4145
      %v4295 = vunpack.c.l.b16 %v4146
      %v4296 = vunpack.c.h.b16 %v4146
      %v4297 = vunpack.c.l.b16 %v4147
      %v4298 = vunpack.c.h.b16 %v4147
      %v4299 = vunpack.c.l.b16 %v4148
      %v4300 = vunpack.c.h.b16 %v4148
      %v4301 = vunpack.c.l.b16 %v4149
      %v4302 = vunpack.c.h.b16 %v4149
      %v4303 = vunpack.c.l.b16 %v4150
      %v4304 = vunpack.c.h.b16 %v4150
      %v4305 = vunpack.c.l.b16 %v4151
      %v4306 = vunpack.c.h.b16 %v4151
      %v4307 = vunpack.c.l.b16 %v4152
      %v4308 = vunpack.c.h.b16 %v4152
      %v4309 = vunpack.c.l.b16 %v4153
      %v4310 = vunpack.c.h.b16 %v4153
      %v4311 = vunpack.c.l.b16 %v4154
      %v4312 = vunpack.c.h.b16 %v4154
      %v4313 = vunpack.c.l.b16 %v4155
      %v4314 = vunpack.c.h.b16 %v4155
      %v4315 = vunpack.c.l.b16 %v4156
      %v4316 = vunpack.c.h.b16 %v4156
      %v4317 = vunpack.c.l.b16 %v4157
      %v4318 = vunpack.c.h.b16 %v4157
      %v4319 = vunpack.c.l.b16 %v4158
      %v4320 = vunpack.c.h.b16 %v4158
      %v4321 = vunpack.c.l.b16 %v4159
      %v4322 = vunpack.c.h.b16 %v4159
      %v4323 = vunpack.c.l.b16 %v4160
      %v4324 = vunpack.c.h.b16 %v4160
      %v4325 = vunpack.c.l.b16 %v4161
      %v4326 = vunpack.c.h.b16 %v4161
      %v4327 = vunpack.c.l.b16 %v4162
      %v4328 = vunpack.c.h.b16 %v4162
      %v4329 = vunpack.c.l.b16 %v4163
      %v4330 = vunpack.c.h.b16 %v4163
      %v4331 = vunpack.c.l.b16 %v4164
      %v4332 = vunpack.c.h.b16 %v4164
      %v4333 = vunpack.c.l.b16 %v4165
      %v4334 = vunpack.c.h.b16 %v4165
      %v4335 = vunpack.c.l.b16 %v4166
      %v4336 = vunpack.c.h.b16 %v4166
      %v4337 = vunpack.c.l.b16 %v4167
      %v4338 = vunpack.c.h.b16 %v4167
      %v4339 = vunpack.c.l.b16 %v4168
      %v4340 = vunpack.c.h.b16 %v4168
      %v4341 = vunpack.c.l.b16 %v4169
      %v4342 = vunpack.c.h.b16 %v4169
      %v4343 = vunpack.c.l.b16 %v4170
      %v4344 = vunpack.c.h.b16 %v4170
      %v4345 = vunpack.c.l.b16 %v4171
      %v4346 = vunpack.c.h.b16 %v4171
      %v4347 = vunpack.c.l.b16 %v4172
      %v4348 = vunpack.c.h.b16 %v4172
      %v4349 = vunpack.c.l.b16 %v4173
      %v4350 = vunpack.c.h.b16 %v4173
      %v4351 = vunpack.c.l.b16 %v4174
      %v4352 = vunpack.c.h.b16 %v4174
      %v4353 = vunpack.c.l.b16 %v4175
      %v4354 = vunpack.c.h.b16 %v4175
      %v4355 = vunpack.c.l.b16 %v4176
      %v4356 = vunpack.c.h.b16 %v4176
      %v4357 = vunpack.c.l.b16 %v4177
      %v4358 = vunpack.c.h.b16 %v4177
      %v4359 = vunpack.c.l.b16 %v4178
      %v4360 = vunpack.c.h.b16 %v4178
      %v4361 = vunpack.c.l.b16 %v4179
      %v4362 = vunpack.c.h.b16 %v4179
      %v4363 = vunpack.c.l.b16 %v4180
      %v4364 = vunpack.c.h.b16 %v4180
      %v4365 = vunpack.c.l.b16 %v4181
      %v4366 = vunpack.c.h.b16 %v4181
      %v4367 = vunpack.c.l.b16 %v4182
      %v4368 = vunpack.c.h.b16 %v4182
      %v4369 = vunpack.c.l.b16 %v4183
      %v4370 = vunpack.c.h.b16 %v4183
      %v4371 = vunpack.c.l.b16 %v4184
      %v4372 = vunpack.c.h.b16 %v4184
      %v4373 = vunpack.c.l.b16 %v4185
      %v4374 = vunpack.c.h.b16 %v4185
      %v4375 = vunpack.c.l.b16 %v4186
      %v4376 = vunpack.c.h.b16 %v4186
      %v4377 = vunpack.c.l.b16 %v4187
      %v4378 = vunpack.c.h.b16 %v4187
      %v4379 = vunpack.c.l.b16 %v4188
      %v4380 = vunpack.c.h.b16 %v4188
      %v4381 = vunpack.c.l.b16 %v4189
      %v4382 = vunpack.c.h.b16 %v4189
      %v4383 = vunpack.c.l.b16 %v4190
      %v4384 = vunpack.c.h.b16 %v4190
      %v4385 = vunpack.c.l.b16 %v4191
      %v4386 = vunpack.c.h.b16 %v4191
      %v4387 = vunpack.c.l.b16 %v4192
      %v4388 = vunpack.c.h.b16 %v4192
      %v4389 = vunpack.c.l.b16 %v4193
      %v4390 = vunpack.c.h.b16 %v4193
      %v4391 = vunpack.c.l.b16 %v4194
      %v4392 = vunpack.c.h.b16 %v4194
      %v4393 = vunpack.c.l.b16 %v4195
      %v4394 = vunpack.c.h.b16 %v4195
      %v4395 = vunpack.c.l.b16 %v4196
      %v4396 = vunpack.c.h.b16 %v4196
      %v4397 = vunpack.c.l.b16 %v4197
      %v4398 = vunpack.c.h.b16 %v4197
      %v4399 = vunpack.c.l.b16 %v4198
      %v4400 = vunpack.c.h.b16 %v4198
      %v4401 = vunpack.c.l.b16 %v4199
      %v4402 = vunpack.c.h.b16 %v4199
      %v4403 = vunpack.c.l.b16 %v4200
      %v4404 = vunpack.c.h.b16 %v4200
      %v4405 = vpack.c.b16 %v4279, %v4277
      %v4406 = vpack.c.b16 %v4280, %v4278
      %v4407 = vpack.c.b16 %v4283, %v4281
      %v4408 = vpack.c.b16 %v4284, %v4282
      %v4409 = vpack.c.b16 %v4287, %v4285
      %v4410 = vpack.c.b16 %v4288, %v4286
      %v4411 = vpack.c.b16 %v4291, %v4289
      %v4412 = vpack.c.b16 %v4292, %v4290
      %v4413 = vpack.c.b16 %v4295, %v4293
      %v4414 = vpack.c.b16 %v4296, %v4294
      %v4415 = vpack.c.b16 %v4299, %v4297
      %v4416 = vpack.c.b16 %v4300, %v4298
      %v4417 = vpack.c.b16 %v4303, %v4301
      %v4418 = vpack.c.b16 %v4304, %v4302
      %v4419 = vpack.c.b16 %v4307, %v4305
      %v4420 = vpack.c.b16 %v4308, %v4306
      %v4421 = vpack.c.b16 %v4311, %v4309
      %v4422 = vpack.c.b16 %v4312, %v4310
      %v4423 = vpack.c.b16 %v4315, %v4313
      %v4424 = vpack.c.b16 %v4316, %v4314
      %v4425 = vpack.c.b16 %v4319, %v4317
      %v4426 = vpack.c.b16 %v4320, %v4318
      %v4427 = vpack.c.b16 %v4323, %v4321
      %v4428 = vpack.c.b16 %v4324, %v4322
      %v4429 = vpack.c.b16 %v4327, %v4325
      %v4430 = vpack.c.b16 %v4328, %v4326
      %v4431 = vpack.c.b16 %v4331, %v4329
      %v4432 = vpack.c.b16 %v4332, %v4330
      %v4433 = vpack.c.b16 %v4335, %v4333
      %v4434 = vpack.c.b16 %v4336, %v4334
      %v4435 = vpack.c.b16 %v4339, %v4337
      %v4436 = vpack.c.b16 %v4340, %v4338
      %v4437 = vpack.c.b16 %v4343, %v4341
      %v4438 = vpack.c.b16 %v4344, %v4342
      %v4439 = vpack.c.b16 %v4347, %v4345
      %v4440 = vpack.c.b16 %v4348, %v4346
      %v4441 = vpack.c.b16 %v4351, %v4349
      %v4442 = vpack.c.b16 %v4352, %v4350
      %v4443 = vpack.c.b16 %v4355, %v4353
      %v4444 = vpack.c.b16 %v4356, %v4354
      %v4445 = vpack.c.b16 %v4359, %v4357
      %v4446 = vpack.c.b16 %v4360, %v4358
      %v4447 = vpack.c.b16 %v4363, %v4361
      %v4448 = vpack.c.b16 %v4364, %v4362
      %v4449 = vpack.c.b16 %v4367, %v4365
      %v4450 = vpack.c.b16 %v4368, %v4366
      %v4451 = vpack.c.b16 %v4371, %v4369
      %v4452 = vpack.c.b16 %v4372, %v4370
      %v4453 = vpack.c.b16 %v4375, %v4373
      %v4454 = vpack.c.b16 %v4376, %v4374
      %v4455 = vpack.c.b16 %v4379, %v4377
      %v4456 = vpack.c.b16 %v4380, %v4378
      %v4457 = vpack.c.b16 %v4383, %v4381
      %v4458 = vpack.c.b16 %v4384, %v4382
      %v4459 = vpack.c.b16 %v4387, %v4385
      %v4460 = vpack.c.b16 %v4388, %v4386
      %v4461 = vpack.c.b16 %v4391, %v4389
      %v4462 = vpack.c.b16 %v4392, %v4390
      %v4463 = vpack.c.b16 %v4395, %v4393
      %v4464 = vpack.c.b16 %v4396, %v4394
      %v4465 = vpack.c.b16 %v4399, %v4397
      %v4466 = vpack.c.b16 %v4400, %v4398
      %v4467 = vpack.c.b16 %v4403, %v4401
      %v4468 = vpack.c.b16 %v4404, %v4402
      %4533 = vmatprep.subr.bf16.mxu0 %v4406
      %4534 = vmatpush1.bf16.msra.mxu0 %v4405
      %4535 = vmatprep.subr.bf16.mxu0 %v4408
      %4536 = vmatpush1.bf16.msra.mxu0 %v4407
      %4537 = vmatprep.subr.bf16.mxu0 %v4410
      %4538 = vmatpush1.bf16.msra.mxu0 %v4409
      %4539 = vmatprep.subr.bf16.mxu0 %v4412
      %4540 = vmatpush1.bf16.msra.mxu0 %v4411
      %4541 = vmatprep.subr.bf16.mxu0 %v4414
      %4542 = vmatpush1.bf16.msra.mxu0 %v4413
      %4543 = vmatprep.subr.bf16.mxu0 %v4416
      %4544 = vmatpush1.bf16.msra.mxu0 %v4415
      %4545 = vmatprep.subr.bf16.mxu0 %v4418
      %4546 = vmatpush1.bf16.msra.mxu0 %v4417
      %4547 = vmatprep.subr.bf16.mxu0 %v4420
      %4548 = vmatpush1.bf16.msra.mxu0 %v4419
      %4549 = vmatprep.subr.bf16.mxu0 %v4422
      %4550 = vmatpush1.bf16.msra.mxu0 %v4421
      %4551 = vmatprep.subr.bf16.mxu0 %v4424
      %4552 = vmatpush1.bf16.msra.mxu0 %v4423
      %4553 = vmatprep.subr.bf16.mxu0 %v4426
      %4554 = vmatpush1.bf16.msra.mxu0 %v4425
      %4555 = vmatprep.subr.bf16.mxu0 %v4428
      %4556 = vmatpush1.bf16.msra.mxu0 %v4427
      %4557 = vmatprep.subr.bf16.mxu0 %v4430
      %4558 = vmatpush1.bf16.msra.mxu0 %v4429
      %4559 = vmatprep.subr.bf16.mxu0 %v4432
      %4560 = vmatpush1.bf16.msra.mxu0 %v4431
      %4561 = vmatprep.subr.bf16.mxu0 %v4434
      %4562 = vmatpush1.bf16.msra.mxu0 %v4433
      %4563 = vmatprep.subr.bf16.mxu0 %v4436
      %4564 = vmatpush1.bf16.msra.mxu0 %v4435
      %4565 = vmatprep.mubr.bf16.mxu0 %v4106
      %4566 = vmatmul.mubr.bf16.gmra.mrb[0].mxu0 %v4105
      %v4567 = vpop.f32.mrb[0].mxu0
      %v4568 = vadd.f32 %v4206, %v4567
      %v4569 = vpop.f32.mrb[0].mxu0
      %v4570 = vadd.f32 %v4210, %v4569
      %v4571 = vpop.f32.mrb[0].mxu0
      %v4572 = vadd.f32 %v4206, %v4571
      %v4573 = vpop.f32.mrb[0].mxu0
      %v4574 = vadd.f32 %v4210, %v4573
      %4575 = vmatprep.mubr.bf16.mxu0 %v4110
      %4576 = vmatmul.mubr.bf16.gmra.mrb[0].mxu0 %v4109
      %v4577 = vpop.f32.mrb[0].mxu0
      %v4578 = vadd.f32 %v4206, %v4577
      %v4579 = vpop.f32.mrb[0].mxu0
      %v4580 = vadd.f32 %v4210, %v4579
      %v4581 = vpop.f32.mrb[0].mxu0
      %v4582 = vadd.f32 %v4206, %v4581
      %v4583 = vpop.f32.mrb[0].mxu0
      %v4584 = vadd.f32 %v4210, %v4583
      %4585 = vmatprep.mubr.bf16.mxu0 %v4114
      %4586 = vmatmul.mubr.bf16.gmra.mrb[0].mxu0 %v4113
      %v4587 = vpop.f32.mrb[0].mxu0
      %v4588 = vadd.f32 %v4206, %v4587
      %v4589 = vpop.f32.mrb[0].mxu0
      %v4590 = vadd.f32 %v4210, %v4589
      %v4591 = vpop.f32.mrb[0].mxu0
      %v4592 = vadd.f32 %v4206, %v4591
      %v4593 = vpop.f32.mrb[0].mxu0
      %v4594 = vadd.f32 %v4210, %v4593
      %4595 = vmatprep.mubr.bf16.mxu0 %v4118
      %4596 = vmatmul.mubr.bf16.gmra.mrb[0].mxu0 %v4117
      %v4597 = vpop.f32.mrb[0].mxu0
      %v4598 = vadd.f32 %v4206, %v4597
      %v4599 = vpop.f32.mrb[0].mxu0
      %v4600 = vadd.f32 %v4210, %v4599
      %v4601 = vpop.f32.mrb[0].mxu0
      %v4602 = vadd.f32 %v4206, %v4601
      %v4603 = vpop.f32.mrb[0].mxu0
      %v4604 = vadd.f32 %v4210, %v4603
      %4605 = vmatprep.mubr.bf16.mxu0 %v4122
      %4606 = vmatmul.mubr.bf16.gmra.mrb[0].mxu0 %v4121
      %v4607 = vpop.f32.mrb[0].mxu0
      %v4608 = vadd.f32 %v4206, %v4607
      %v4609 = vpop.f32.mrb[0].mxu0
      %v4610 = vadd.f32 %v4210, %v4609
      %v4611 = vpop.f32.mrb[0].mxu0
      %v4612 = vadd.f32 %v4206, %v4611
      %v4613 = vpop.f32.mrb[0].mxu0
      %v4614 = vadd.f32 %v4210, %v4613
      %4615 = vmatprep.mubr.bf16.mxu0 %v4126
      %4616 = vmatmul.mubr.bf16.gmra.mrb[0].mxu0 %v4125
      %v4617 = vpop.f32.mrb[0].mxu0
      %v4618 = vadd.f32 %v4206, %v4617
      %v4619 = vpop.f32.mrb[0].mxu0
      %v4620 = vadd.f32 %v4210, %v4619
      %v4621 = vpop.f32.mrb[0].mxu0
      %v4622 = vadd.f32 %v4206, %v4621
      %v4623 = vpop.f32.mrb[0].mxu0
      %v4624 = vadd.f32 %v4210, %v4623
      %4625 = vmatprep.mubr.bf16.mxu0 %v4130
      %4626 = vmatmul.mubr.bf16.gmra.mrb[0].mxu0 %v4129
      %v4627 = vpop.f32.mrb[0].mxu0
      %v4628 = vadd.f32 %v4206, %v4627
      %v4629 = vpop.f32.mrb[0].mxu0
      %v4630 = vadd.f32 %v4210, %v4629
      %v4631 = vpop.f32.mrb[0].mxu0
      %v4632 = vadd.f32 %v4206, %v4631
      %v4633 = vpop.f32.mrb[0].mxu0
      %v4634 = vadd.f32 %v4210, %v4633
      %4635 = vmatprep.mubr.bf16.mxu0 %v4134
      %4636 = vmatmul.mubr.bf16.gmra.mrb[0].mxu0 %v4133
      %v4637 = vpop.f32.mrb[0].mxu0
      %v4638 = vadd.f32 %v4206, %v4637
      %v4639 = vpop.f32.mrb[0].mxu0
      %v4640 = vadd.f32 %v4210, %v4639
      %v4641 = vpop.f32.mrb[0].mxu0
      %v4642 = vadd.f32 %v4206, %v4641
      %v4643 = vpop.f32.mrb[0].mxu0
      %v4644 = vadd.f32 %v4210, %v4643
      %4645 = vdwg.mxu0
      %4646 = vmatprep.subr.bf16.mxu0 %v4438
      %4647 = vmatpush1.bf16.msra.mxu0 %v4437
      %4648 = vmatprep.subr.bf16.mxu0 %v4440
      %4649 = vmatpush1.bf16.msra.mxu0 %v4439
      %4650 = vmatprep.subr.bf16.mxu0 %v4442
      %4651 = vmatpush1.bf16.msra.mxu0 %v4441
      %4652 = vmatprep.subr.bf16.mxu0 %v4444
      %4653 = vmatpush1.bf16.msra.mxu0 %v4443
      %4654 = vmatprep.subr.bf16.mxu0 %v4446
      %4655 = vmatpush1.bf16.msra.mxu0 %v4445
      %4656 = vmatprep.subr.bf16.mxu0 %v4448
      %4657 = vmatpush1.bf16.msra.mxu0 %v4447
      %4658 = vmatprep.subr.bf16.mxu0 %v4450
      %4659 = vmatpush1.bf16.msra.mxu0 %v4449
      %4660 = vmatprep.subr.bf16.mxu0 %v4452
      %4661 = vmatpush1.bf16.msra.mxu0 %v4451
      %4662 = vmatprep.subr.bf16.mxu0 %v4454
      %4663 = vmatpush1.bf16.msra.mxu0 %v4453
      %4664 = vmatprep.subr.bf16.mxu0 %v4456
      %4665 = vmatpush1.bf16.msra.mxu0 %v4455
      %4666 = vmatprep.subr.bf16.mxu0 %v4458
      %4667 = vmatpush1.bf16.msra.mxu0 %v4457
      %4668 = vmatprep.subr.bf16.mxu0 %v4460
      %4669 = vmatpush1.bf16.msra.mxu0 %v4459
      %4670 = vmatprep.subr.bf16.mxu0 %v4462
      %4671 = vmatpush1.bf16.msra.mxu0 %v4461
      %4672 = vmatprep.subr.bf16.mxu0 %v4464
      %4673 = vmatpush1.bf16.msra.mxu0 %v4463
      %4674 = vmatprep.subr.bf16.mxu0 %v4466
      %4675 = vmatpush1.bf16.msra.mxu0 %v4465
      %4676 = vmatprep.subr.bf16.mxu0 %v4468
      %4677 = vmatpush1.bf16.msra.mxu0 %v4467
      %4678 = vmatprep.mubr.bf16.mxu0 %v4108
      %4679 = vmatmul.mubr.bf16.gmra.mrb[0].mxu0 %v4107
      %v4680 = vpop.f32.mrb[0].mxu0
      %v4681 = vadd.f32 %v4568, %v4680
      %v4682 = vpop.f32.mrb[0].mxu0
      %v4683 = vadd.f32 %v4570, %v4682
      %v4684 = vpop.f32.mrb[0].mxu0
      %v4685 = vadd.f32 %v4572, %v4684
      %v4686 = vpop.f32.mrb[0].mxu0
      %v4687 = vadd.f32 %v4574, %v4686
      %4688 = vmatprep.mubr.bf16.mxu0 %v4112
      %4689 = vmatmul.mubr.bf16.gmra.mrb[0].mxu0 %v4111
      %v4690 = vpop.f32.mrb[0].mxu0
      %v4691 = vadd.f32 %v4578, %v4690
      %v4692 = vpop.f32.mrb[0].mxu0
      %v4693 = vadd.f32 %v4580, %v4692
      %v4694 = vpop.f32.mrb[0].mxu0
      %v4695 = vadd.f32 %v4582, %v4694
      %v4696 = vpop.f32.mrb[0].mxu0
      %v4697 = vadd.f32 %v4584, %v4696
      %4698 = vmatprep.mubr.bf16.mxu0 %v4116
      %4699 = vmatmul.mubr.bf16.gmra.mrb[0].mxu0 %v4115
      %v4700 = vpop.f32.mrb[0].mxu0
      %v4701 = vadd.f32 %v4588, %v4700
      %v4702 = vpop.f32.mrb[0].mxu0
      %v4703 = vadd.f32 %v4590, %v4702
      %v4704 = vpop.f32.mrb[0].mxu0
      %v4705 = vadd.f32 %v4592, %v4704
      %v4706 = vpop.f32.mrb[0].mxu0
      %v4707 = vadd.f32 %v4594, %v4706
      %4708 = vmatprep.mubr.bf16.mxu0 %v4120
      %4709 = vmatmul.mubr.bf16.gmra.mrb[0].mxu0 %v4119
      %v4710 = vpop.f32.mrb[0].mxu0
      %v4711 = vadd.f32 %v4598, %v4710
      %v4712 = vpop.f32.mrb[0].mxu0
      %v4713 = vadd.f32 %v4600, %v4712
      %v4714 = vpop.f32.mrb[0].mxu0
      %v4715 = vadd.f32 %v4602, %v4714
      %v4716 = vpop.f32.mrb[0].mxu0
      %v4717 = vadd.f32 %v4604, %v4716
      %4718 = vmatprep.mubr.bf16.mxu0 %v4124
      %4719 = vmatmul.mubr.bf16.gmra.mrb[0].mxu0 %v4123
      %v4720 = vpop.f32.mrb[0].mxu0
      %v4721 = vadd.f32 %v4608, %v4720
      %v4722 = vpop.f32.mrb[0].mxu0
      %v4723 = vadd.f32 %v4610, %v4722
      %v4724 = vpop.f32.mrb[0].mxu0
      %v4725 = vadd.f32 %v4612, %v4724
      %v4726 = vpop.f32.mrb[0].mxu0
      %v4727 = vadd.f32 %v4614, %v4726
      %4728 = vmatprep.mubr.bf16.mxu0 %v4128
      %4729 = vmatmul.mubr.bf16.gmra.mrb[0].mxu0 %v4127
      %v4730 = vpop.f32.mrb[0].mxu0
      %v4731 = vadd.f32 %v4618, %v4730
      %v4732 = vpop.f32.mrb[0].mxu0
      %v4733 = vadd.f32 %v4620, %v4732
      %v4734 = vpop.f32.mrb[0].mxu0
      %v4735 = vadd.f32 %v4622, %v4734
      %v4736 = vpop.f32.mrb[0].mxu0
      %v4737 = vadd.f32 %v4624, %v4736
      %4738 = vmatprep.mubr.bf16.mxu0 %v4132
      %4739 = vmatmul.mubr.bf16.gmra.mrb[0].mxu0 %v4131
      %v4740 = vpop.f32.mrb[0].mxu0
      %v4741 = vadd.f32 %v4628, %v4740
      %v4742 = vpop.f32.mrb[0].mxu0
      %v4743 = vadd.f32 %v4630, %v4742
      %v4744 = vpop.f32.mrb[0].mxu0
      %v4745 = vadd.f32 %v4632, %v4744
      %v4746 = vpop.f32.mrb[0].mxu0
      %v4747 = vadd.f32 %v4634, %v4746
      %4748 = vmatprep.mubr.bf16.mxu0 %v4136
      %4749 = vmatmul.mubr.bf16.gmra.mrb[0].mxu0 %v4135
      %v4750 = vpop.f32.mrb[0].mxu0
      %v4751 = vadd.f32 %v4638, %v4750
      %v4752 = vpop.f32.mrb[0].mxu0
      %v4753 = vadd.f32 %v4640, %v4752
      %v4754 = vpop.f32.mrb[0].mxu0
      %v4755 = vadd.f32 %v4642, %v4754
      %v4756 = vpop.f32.mrb[0].mxu0
      %v4757 = vadd.f32 %v4644, %v4756
      %4758 = vdwg.mxu0
      %v4759 = vmax.f32 %v4681, 0.0
      %v4760 = vmax.f32 %v4683, 0.0
      %v4761 = vmax.f32 %v4685, 0.0
      %v4762 = vmax.f32 %v4687, 0.0
      %v4763 = vmax.f32 %v4691, 0.0
      %v4764 = vmax.f32 %v4693, 0.0
      %v4765 = vmax.f32 %v4695, 0.0
      %v4766 = vmax.f32 %v4697, 0.0
      %v4767 = vmax.f32 %v4701, 0.0
      %v4768 = vmax.f32 %v4703, 0.0
      %v4769 = vmax.f32 %v4705, 0.0
      %v4770 = vmax.f32 %v4707, 0.0
      %v4771 = vmax.f32 %v4711, 0.0
      %v4772 = vmax.f32 %v4713, 0.0
      %v4773 = vmax.f32 %v4715, 0.0
      %v4774 = vmax.f32 %v4717, 0.0
      %v4775 = vmax.f32 %v4721, 0.0
      %v4776 = vmax.f32 %v4723, 0.0
      %v4777 = vmax.f32 %v4725, 0.0
      %v4778 = vmax.f32 %v4727, 0.0
      %v4779 = vmax.f32 %v4731, 0.0
      %v4780 = vmax.f32 %v4733, 0.0
      %v4781 = vmax.f32 %v4735, 0.0
      %v4782 = vmax.f32 %v4737, 0.0
      %v4783 = vmax.f32 %v4741, 0.0
      %v4784 = vmax.f32 %v4743, 0.0
      %v4785 = vmax.f32 %v4745, 0.0
      %v4786 = vmax.f32 %v4747, 0.0
      %v4787 = vmax.f32 %v4751, 0.0
      %v4788 = vmax.f32 %v4753, 0.0
      %v4789 = vmax.f32 %v4755, 0.0
      %v4790 = vmax.f32 %v4757, 0.0
      %v4791 = vpack.c.bf16 %v4761, %v4759
      %v4792 = vpack.c.bf16 %v4762, %v4760
      %v4793 = vpack.c.bf16 %v4765, %v4763
      %v4794 = vpack.c.bf16 %v4766, %v4764
      %v4795 = vpack.c.bf16 %v4769, %v4767
      %v4796 = vpack.c.bf16 %v4770, %v4768
      %v4797 = vpack.c.bf16 %v4773, %v4771
      %v4798 = vpack.c.bf16 %v4774, %v4772
      %v4799 = vpack.c.bf16 %v4777, %v4775
      %v4800 = vpack.c.bf16 %v4778, %v4776
      %v4801 = vpack.c.bf16 %v4781, %v4779
      %v4802 = vpack.c.bf16 %v4782, %v4780
      %v4803 = vpack.c.bf16 %v4785, %v4783
      %v4804 = vpack.c.bf16 %v4786, %v4784
      %v4805 = vpack.c.bf16 %v4789, %v4787
      %v4806 = vpack.c.bf16 %v4790, %v4788
      %v4807 = vld [vmem:[%s7] sm:$0xf]
      %v4808 = vld [vmem:[%s7 + $0x4] sm:$0xf]
      %v4809 = vld [vmem:[%s7 + $0x8] sm:$0xf]
      %v4810 = vld [vmem:[%s7 + $0xc] sm:$0xf]
      %v4811 = vld [vmem:[%s7 + $0x10] sm:$0xf]
      %v4812 = vld [vmem:[%s7 + $0x14] sm:$0xf]
      %v4813 = vld [vmem:[%s7 + $0x18] sm:$0xf]
      %v4814 = vld [vmem:[%s7 + $0x1c] sm:$0xf]
      %v4815 = vld [vmem:[%s7 + $0x20] sm:$0xf]
      %v4816 = vld [vmem:[%s7 + $0x24] sm:$0xf]
      %v4817 = vld [vmem:[%s7 + $0x28] sm:$0xf]
      %v4818 = vld [vmem:[%s7 + $0x2c] sm:$0xf]
      %v4819 = vld [vmem:[%s7 + $0x30] sm:$0xf]
      %v4820 = vld [vmem:[%s7 + $0x34] sm:$0xf]
      %v4821 = vld [vmem:[%s7 + $0x38] sm:$0xf]
      %v4822 = vld [vmem:[%s7 + $0x3c] sm:$0xf]
      %v4823 = vld [vmem:[%s7 + $0x40] sm:$0xf]
      %v4824 = vld [vmem:[%s7 + $0x44] sm:$0xf]
      %v4825 = vld [vmem:[%s7 + $0x48] sm:$0xf]
      %v4826 = vld [vmem:[%s7 + $0x4c] sm:$0xf]
      %v4827 = vld [vmem:[%s7 + $0x50] sm:$0xf]
      %v4828 = vld [vmem:[%s7 + $0x54] sm:$0xf]
      %v4829 = vld [vmem:[%s7 + $0x58] sm:$0xf]
      %v4830 = vld [vmem:[%s7 + $0x5c] sm:$0xf]
      %v4831 = vld [vmem:[%s7 + $0x60] sm:$0xf]
      %v4832 = vld [vmem:[%s7 + $0x64] sm:$0xf]
      %v4833 = vld [vmem:[%s7 + $0x68] sm:$0xf]
      %v4834 = vld [vmem:[%s7 + $0x6c] sm:$0xf]
      %v4835 = vld [vmem:[%s7 + $0x70] sm:$0xf]
      %v4836 = vld [vmem:[%s7 + $0x74] sm:$0xf]
      %v4837 = vld [vmem:[%s7 + $0x78] sm:$0xf]
      %v4838 = vld [vmem:[%s7 + $0x7c] sm:$0xf]
      %v4839 = vld [vmem:[%s8] sm:$0x1]
      %v4841 = vlaneseq
      %v4842 = vshrl.u32 %v4841, 7
      %v4843 = vsub.s32 0, %v4842
      %v4844 = vrot.slane %v4839, %v4843
      %v4878 = vunpack.c.l.b16 %v4807
      %v4879 = vunpack.c.l.b16 %v4808
      %v4880 = vunpack.c.l.b16 %v4809
      %v4881 = vunpack.c.l.b16 %v4810
      %v4882 = vunpack.c.l.b16 %v4811
      %v4883 = vunpack.c.l.b16 %v4812
      %v4884 = vunpack.c.l.b16 %v4813
      %v4885 = vunpack.c.l.b16 %v4814
      %v4886 = vunpack.c.l.b16 %v4815
      %v4887 = vunpack.c.l.b16 %v4816
      %v4888 = vunpack.c.l.b16 %v4817
      %v4889 = vunpack.c.l.b16 %v4818
      %v4890 = vunpack.c.l.b16 %v4819
      %v4891 = vunpack.c.l.b16 %v4820
      %v4892 = vunpack.c.l.b16 %v4821
      %v4893 = vunpack.c.l.b16 %v4822
      %v4894 = vunpack.c.l.b16 %v4823
      %v4895 = vunpack.c.l.b16 %v4824
      %v4896 = vunpack.c.l.b16 %v4825
      %v4897 = vunpack.c.l.b16 %v4826
      %v4898 = vunpack.c.l.b16 %v4827
      %v4899 = vunpack.c.l.b16 %v4828
      %v4900 = vunpack.c.l.b16 %v4829
      %v4901 = vunpack.c.l.b16 %v4830
      %v4902 = vunpack.c.l.b16 %v4831
      %v4903 = vunpack.c.l.b16 %v4832
      %v4904 = vunpack.c.l.b16 %v4833
      %v4905 = vunpack.c.l.b16 %v4834
      %v4906 = vunpack.c.l.b16 %v4835
      %v4907 = vunpack.c.l.b16 %v4836
      %v4908 = vunpack.c.l.b16 %v4837
      %v4909 = vunpack.c.l.b16 %v4838
      %v4910 = vpack.c.b16 %v4879, %v4878
      %v4911 = vpack.c.b16 %v4881, %v4880
      %v4912 = vpack.c.b16 %v4883, %v4882
      %v4913 = vpack.c.b16 %v4885, %v4884
      %v4914 = vpack.c.b16 %v4887, %v4886
      %v4915 = vpack.c.b16 %v4889, %v4888
      %v4916 = vpack.c.b16 %v4891, %v4890
      %v4917 = vpack.c.b16 %v4893, %v4892
      %v4918 = vpack.c.b16 %v4895, %v4894
      %v4919 = vpack.c.b16 %v4897, %v4896
      %v4920 = vpack.c.b16 %v4899, %v4898
      %v4921 = vpack.c.b16 %v4901, %v4900
      %v4922 = vpack.c.b16 %v4903, %v4902
      %v4923 = vpack.c.b16 %v4905, %v4904
      %v4924 = vpack.c.b16 %v4907, %v4906
      %v4925 = vpack.c.b16 %v4909, %v4908
      %4942 = vmatprep.subr.bf16.mxu0 0
      %4943 = vmatpush1.bf16.msra.mxu0 %v4910
      %4944 = vmatprep.subr.bf16.mxu0 0
      %4945 = vmatpush1.bf16.msra.mxu0 %v4911
      %4946 = vmatprep.subr.bf16.mxu0 0
      %4947 = vmatpush1.bf16.msra.mxu0 %v4912
      %4948 = vmatprep.subr.bf16.mxu0 0
      %4949 = vmatpush1.bf16.msra.mxu0 %v4913
      %4950 = vmatprep.subr.bf16.mxu0 0
      %4951 = vmatpush1.bf16.msra.mxu0 %v4914
      %4952 = vmatprep.subr.bf16.mxu0 0
      %4953 = vmatpush1.bf16.msra.mxu0 %v4915
      %4954 = vmatprep.subr.bf16.mxu0 0
      %4955 = vmatpush1.bf16.msra.mxu0 %v4916
      %4956 = vmatprep.subr.bf16.mxu0 0
      %4957 = vmatpush1.bf16.msra.mxu0 %v4917
      %4958 = vmatprep.subr.bf16.mxu0 0
      %4959 = vmatpush1.bf16.msra.mxu0 %v4918
      %4960 = vmatprep.subr.bf16.mxu0 0
      %4961 = vmatpush1.bf16.msra.mxu0 %v4919
      %4962 = vmatprep.subr.bf16.mxu0 0
      %4963 = vmatpush1.bf16.msra.mxu0 %v4920
      %4964 = vmatprep.subr.bf16.mxu0 0
      %4965 = vmatpush1.bf16.msra.mxu0 %v4921
      %4966 = vmatprep.subr.bf16.mxu0 0
      %4967 = vmatpush1.bf16.msra.mxu0 %v4922
      %4968 = vmatprep.subr.bf16.mxu0 0
      %4969 = vmatpush1.bf16.msra.mxu0 %v4923
      %4970 = vmatprep.subr.bf16.mxu0 0
      %4971 = vmatpush1.bf16.msra.mxu0 %v4924
      %4972 = vmatprep.subr.bf16.mxu0 0
      %4973 = vmatpush1.bf16.msra.mxu0 %v4925
      %4974 = vmatprep.mubr.bf16.mxu0 %v4792
      %4975 = vmatmul.mubr.bf16.gmra.mrb[0].mxu0 %v4791
      %v4976 = vpop.f32.mrb[0].mxu0
      %v4977 = vadd.f32 %v4844, %v4976
      %v4978 = vpop.f32.mrb[0].mxu0
      %v4979 = vpop.f32.mrb[0].mxu0
      %v4980 = vadd.f32 %v4844, %v4979
      %v4981 = vpop.f32.mrb[0].mxu0
      %4982 = vmatprep.mubr.bf16.mxu0 %v4794
      %4983 = vmatmul.mubr.bf16.gmra.mrb[0].mxu0 %v4793
      %v4984 = vpop.f32.mrb[0].mxu0
      %v4985 = vadd.f32 %v4844, %v4984
      %v4986 = vpop.f32.mrb[0].mxu0
      %v4987 = vpop.f32.mrb[0].mxu0
      %v4988 = vadd.f32 %v4844, %v4987
      %v4989 = vpop.f32.mrb[0].mxu0
      %4990 = vmatprep.mubr.bf16.mxu0 %v4796
      %4991 = vmatmul.mubr.bf16.gmra.mrb[0].mxu0 %v4795
      %v4992 = vpop.f32.mrb[0].mxu0
      %v4993 = vadd.f32 %v4844, %v4992
      %v4994 = vpop.f32.mrb[0].mxu0
      %v4995 = vpop.f32.mrb[0].mxu0
      %v4996 = vadd.f32 %v4844, %v4995
      %v4997 = vpop.f32.mrb[0].mxu0
      %4998 = vmatprep.mubr.bf16.mxu0 %v4798
      %4999 = vmatmul.mubr.bf16.gmra.mrb[0].mxu0 %v4797
      %v5000 = vpop.f32.mrb[0].mxu0
      %v5001 = vadd.f32 %v4844, %v5000
      %v5002 = vpop.f32.mrb[0].mxu0
      %v5003 = vpop.f32.mrb[0].mxu0
      %v5004 = vadd.f32 %v4844, %v5003
      %v5005 = vpop.f32.mrb[0].mxu0
      %5006 = vmatprep.mubr.bf16.mxu0 %v4800
      %5007 = vmatmul.mubr.bf16.gmra.mrb[0].mxu0 %v4799
      %v5008 = vpop.f32.mrb[0].mxu0
      %v5009 = vadd.f32 %v4844, %v5008
      %v5010 = vpop.f32.mrb[0].mxu0
      %v5011 = vpop.f32.mrb[0].mxu0
      %v5012 = vadd.f32 %v4844, %v5011
      %v5013 = vpop.f32.mrb[0].mxu0
      %5014 = vmatprep.mubr.bf16.mxu0 %v4802
      %5015 = vmatmul.mubr.bf16.gmra.mrb[0].mxu0 %v4801
      %v5016 = vpop.f32.mrb[0].mxu0
      %v5017 = vadd.f32 %v4844, %v5016
      %v5018 = vpop.f32.mrb[0].mxu0
      %v5019 = vpop.f32.mrb[0].mxu0
      %v5020 = vadd.f32 %v4844, %v5019
      %v5021 = vpop.f32.mrb[0].mxu0
      %5022 = vmatprep.mubr.bf16.mxu0 %v4804
      %5023 = vmatmul.mubr.bf16.gmra.mrb[0].mxu0 %v4803
      %v5024 = vpop.f32.mrb[0].mxu0
      %v5025 = vadd.f32 %v4844, %v5024
      %v5026 = vpop.f32.mrb[0].mxu0
      %v5027 = vpop.f32.mrb[0].mxu0
      %v5028 = vadd.f32 %v4844, %v5027
      %v5029 = vpop.f32.mrb[0].mxu0
      %5030 = vmatprep.mubr.bf16.mxu0 %v4806
      %5031 = vmatmul.mubr.bf16.gmra.mrb[0].mxu0 %v4805
      %v5032 = vpop.f32.mrb[0].mxu0
      %v5033 = vadd.f32 %v4844, %v5032
      %v5034 = vpop.f32.mrb[0].mxu0
      %v5035 = vpop.f32.mrb[0].mxu0
      %v5036 = vadd.f32 %v4844, %v5035
      %v5037 = vpop.f32.mrb[0].mxu0
      %5038 = vdwg.mxu0
      %v5039 = vmax.f32 %v4977, 0.0
      %v5040 = vmax.f32 %v4980, 0.0
      %v5041 = vmax.f32 %v4985, 0.0
      %v5042 = vmax.f32 %v4988, 0.0
      %v5043 = vmax.f32 %v4993, 0.0
      %v5044 = vmax.f32 %v4996, 0.0
      %v5045 = vmax.f32 %v5001, 0.0
      %v5046 = vmax.f32 %v5004, 0.0
      %v5047 = vmax.f32 %v5009, 0.0
      %v5048 = vmax.f32 %v5012, 0.0
      %v5049 = vmax.f32 %v5017, 0.0
      %v5050 = vmax.f32 %v5020, 0.0
      %v5051 = vmax.f32 %v5025, 0.0
      %v5052 = vmax.f32 %v5028, 0.0
      %v5053 = vmax.f32 %v5033, 0.0
      %v5054 = vmax.f32 %v5036, 0.0
      %v5055 = vpack.c.bf16 %v5040, %v5039
      %v5056 = vpack.c.bf16 %v5042, %v5041
      %v5057 = vpack.c.bf16 %v5044, %v5043
      %v5058 = vpack.c.bf16 %v5046, %v5045
      %v5059 = vpack.c.bf16 %v5048, %v5047
      %v5060 = vpack.c.bf16 %v5050, %v5049
      %v5061 = vpack.c.bf16 %v5052, %v5051
      %v5062 = vpack.c.bf16 %v5054, %v5053
      %v5063 = vld [vmem:[%s9] sm:$0xf]
      %v5064 = vld [vmem:[%s9 + $0x4] sm:$0xf]
      %v5065 = vld [vmem:[%s9 + $0x8] sm:$0xf]
      %v5066 = vld [vmem:[%s9 + $0xc] sm:$0xf]
      %v5067 = vld [vmem:[%s9 + $0x10] sm:$0xf]
      %v5068 = vld [vmem:[%s9 + $0x14] sm:$0xf]
      %v5069 = vld [vmem:[%s9 + $0x18] sm:$0xf]
      %v5070 = vld [vmem:[%s9 + $0x1c] sm:$0xf]
      %v5071 = vld [vmem:[%s9 + $0x20] sm:$0xf]
      %v5072 = vld [vmem:[%s9 + $0x24] sm:$0xf]
      %v5073 = vld [vmem:[%s9 + $0x28] sm:$0xf]
      %v5074 = vld [vmem:[%s9 + $0x2c] sm:$0xf]
      %v5075 = vld [vmem:[%s9 + $0x30] sm:$0xf]
      %v5076 = vld [vmem:[%s9 + $0x34] sm:$0xf]
      %v5077 = vld [vmem:[%s9 + $0x38] sm:$0xf]
      %v5078 = vld [vmem:[%s9 + $0x3c] sm:$0xf]
      %v5079 = vld [vmem:[%s10] sm:$0x1]
      %v5081 = vlaneseq
      %v5082 = vshrl.u32 %v5081, 7
      %v5083 = vsub.s32 0, %v5082
      %v5084 = vrot.slane %v5079, %v5083
      %v5102 = vunpack.c.l.b16 %v5063
      %v5103 = vunpack.c.l.b16 %v5064
      %v5104 = vunpack.c.l.b16 %v5065
      %v5105 = vunpack.c.l.b16 %v5066
      %v5106 = vunpack.c.l.b16 %v5067
      %v5107 = vunpack.c.l.b16 %v5068
      %v5108 = vunpack.c.l.b16 %v5069
      %v5109 = vunpack.c.l.b16 %v5070
      %v5110 = vunpack.c.l.b16 %v5071
      %v5111 = vunpack.c.l.b16 %v5072
      %v5112 = vunpack.c.l.b16 %v5073
      %v5113 = vunpack.c.l.b16 %v5074
      %v5114 = vunpack.c.l.b16 %v5075
      %v5115 = vunpack.c.l.b16 %v5076
      %v5116 = vunpack.c.l.b16 %v5077
      %v5117 = vunpack.c.l.b16 %v5078
      %v5118 = vpack.c.b16 %v5103, %v5102
      %v5119 = vpack.c.b16 %v5105, %v5104
      %v5120 = vpack.c.b16 %v5107, %v5106
      %v5121 = vpack.c.b16 %v5109, %v5108
      %v5122 = vpack.c.b16 %v5111, %v5110
      %v5123 = vpack.c.b16 %v5113, %v5112
      %v5124 = vpack.c.b16 %v5115, %v5114
      %v5125 = vpack.c.b16 %v5117, %v5116
      %5134 = vmatprep.subr.bf16.mxu0 0
      %5135 = vmatpush1.bf16.msra.mxu0 %v5118
      %5136 = vmatprep.subr.bf16.mxu0 0
      %5137 = vmatpush1.bf16.msra.mxu0 %v5119
      %5138 = vmatprep.subr.bf16.mxu0 0
      %5139 = vmatpush1.bf16.msra.mxu0 %v5120
      %5140 = vmatprep.subr.bf16.mxu0 0
      %5141 = vmatpush1.bf16.msra.mxu0 %v5121
      %5142 = vmatprep.subr.bf16.mxu0 0
      %5143 = vmatpush1.bf16.msra.mxu0 %v5122
      %5144 = vmatprep.subr.bf16.mxu0 0
      %5145 = vmatpush1.bf16.msra.mxu0 %v5123
      %5146 = vmatprep.subr.bf16.mxu0 0
      %5147 = vmatpush1.bf16.msra.mxu0 %v5124
      %5148 = vmatprep.subr.bf16.mxu0 0
      %5149 = vmatpush1.bf16.msra.mxu0 %v5125
      %5150 = vmatprep.subr.bf16.mxu0 0
      %5151 = vmatpush1.bf16.msra.mxu0 0
      %5152 = vmatprep.subr.bf16.mxu0 0
      %5153 = vmatpush1.bf16.msra.mxu0 0
      %5154 = vmatprep.subr.bf16.mxu0 0
      %5155 = vmatpush1.bf16.msra.mxu0 0
      %5156 = vmatprep.subr.bf16.mxu0 0
      %5157 = vmatpush1.bf16.msra.mxu0 0
      %5158 = vmatprep.subr.bf16.mxu0 0
      %5159 = vmatpush1.bf16.msra.mxu0 0
      %5160 = vmatprep.subr.bf16.mxu0 0
      %5161 = vmatpush1.bf16.msra.mxu0 0
      %5162 = vmatprep.subr.bf16.mxu0 0
      %5163 = vmatpush1.bf16.msra.mxu0 0
      %5164 = vmatprep.subr.bf16.mxu0 0
      %5165 = vmatpush1.bf16.msra.mxu0 0
      %5166 = vmatprep.mubr.bf16.mxu0 0
      %5167 = vmatmul.mubr.bf16.gmra.mrb[0].mxu0 %v5055
      %v5168 = vpop.f32.mrb[0].mxu0
      %v5169 = vadd.f32 %v5084, %v5168
      %v5170 = vpop.f32.mrb[0].mxu0
      %v5171 = vpop.f32.mrb[0].mxu0
      %v5172 = vadd.f32 %v5084, %v5171
      %v5173 = vpop.f32.mrb[0].mxu0
      %5174 = vmatprep.mubr.bf16.mxu0 0
      %5175 = vmatmul.mubr.bf16.gmra.mrb[0].mxu0 %v5056
      %v5176 = vpop.f32.mrb[0].mxu0
      %v5177 = vadd.f32 %v5084, %v5176
      %v5178 = vpop.f32.mrb[0].mxu0
      %v5179 = vpop.f32.mrb[0].mxu0
      %v5180 = vadd.f32 %v5084, %v5179
      %v5181 = vpop.f32.mrb[0].mxu0
      %5182 = vmatprep.mubr.bf16.mxu0 0
      %5183 = vmatmul.mubr.bf16.gmra.mrb[0].mxu0 %v5057
      %v5184 = vpop.f32.mrb[0].mxu0
      %v5185 = vadd.f32 %v5084, %v5184
      %v5186 = vpop.f32.mrb[0].mxu0
      %v5187 = vpop.f32.mrb[0].mxu0
      %v5188 = vadd.f32 %v5084, %v5187
      %v5189 = vpop.f32.mrb[0].mxu0
      %5190 = vmatprep.mubr.bf16.mxu0 0
      %5191 = vmatmul.mubr.bf16.gmra.mrb[0].mxu0 %v5058
      %v5192 = vpop.f32.mrb[0].mxu0
      %v5193 = vadd.f32 %v5084, %v5192
      %v5194 = vpop.f32.mrb[0].mxu0
      %v5195 = vpop.f32.mrb[0].mxu0
      %v5196 = vadd.f32 %v5084, %v5195
      %v5197 = vpop.f32.mrb[0].mxu0
      %5198 = vmatprep.mubr.bf16.mxu0 0
      %5199 = vmatmul.mubr.bf16.gmra.mrb[0].mxu0 %v5059
      %v5200 = vpop.f32.mrb[0].mxu0
      %v5201 = vadd.f32 %v5084, %v5200
      %v5202 = vpop.f32.mrb[0].mxu0
      %v5203 = vpop.f32.mrb[0].mxu0
      %v5204 = vadd.f32 %v5084, %v5203
      %v5205 = vpop.f32.mrb[0].mxu0
      %5206 = vmatprep.mubr.bf16.mxu0 0
      %5207 = vmatmul.mubr.bf16.gmra.mrb[0].mxu0 %v5060
      %v5208 = vpop.f32.mrb[0].mxu0
      %v5209 = vadd.f32 %v5084, %v5208
      %v5210 = vpop.f32.mrb[0].mxu0
      %v5211 = vpop.f32.mrb[0].mxu0
      %v5212 = vadd.f32 %v5084, %v5211
      %v5213 = vpop.f32.mrb[0].mxu0
      %5214 = vmatprep.mubr.bf16.mxu0 0
      %5215 = vmatmul.mubr.bf16.gmra.mrb[0].mxu0 %v5061
      %v5216 = vpop.f32.mrb[0].mxu0
      %v5217 = vadd.f32 %v5084, %v5216
      %v5218 = vpop.f32.mrb[0].mxu0
      %v5219 = vpop.f32.mrb[0].mxu0
      %v5220 = vadd.f32 %v5084, %v5219
      %v5221 = vpop.f32.mrb[0].mxu0
      %5222 = vmatprep.mubr.bf16.mxu0 0
      %5223 = vmatmul.mubr.bf16.gmra.mrb[0].mxu0 %v5062
      %v5224 = vpop.f32.mrb[0].mxu0
      %v5225 = vadd.f32 %v5084, %v5224
      %v5226 = vpop.f32.mrb[0].mxu0
      %v5227 = vpop.f32.mrb[0].mxu0
      %v5228 = vadd.f32 %v5084, %v5227
      %v5229 = vpop.f32.mrb[0].mxu0
      %5230 = vdwg.mxu0
      %v5231 = vmax.f32 %v5169, 0.0
      %v5232 = vmax.f32 %v5172, 0.0
      %v5233 = vmax.f32 %v5177, 0.0
      %v5234 = vmax.f32 %v5180, 0.0
      %v5235 = vmax.f32 %v5185, 0.0
      %v5236 = vmax.f32 %v5188, 0.0
      %v5237 = vmax.f32 %v5193, 0.0
      %v5238 = vmax.f32 %v5196, 0.0
      %v5239 = vmax.f32 %v5201, 0.0
      %v5240 = vmax.f32 %v5204, 0.0
      %v5241 = vmax.f32 %v5209, 0.0
      %v5242 = vmax.f32 %v5212, 0.0
      %v5243 = vmax.f32 %v5217, 0.0
      %v5244 = vmax.f32 %v5220, 0.0
      %v5245 = vmax.f32 %v5225, 0.0
      %v5246 = vmax.f32 %v5228, 0.0
      %v5247 = vpack.c.bf16 %v5232, %v5231
      %v5248 = vpack.c.bf16 %v5234, %v5233
      %v5249 = vpack.c.bf16 %v5236, %v5235
      %v5250 = vpack.c.bf16 %v5238, %v5237
      %v5251 = vpack.c.bf16 %v5240, %v5239
      %v5252 = vpack.c.bf16 %v5242, %v5241
      %v5253 = vpack.c.bf16 %v5244, %v5243
      %v5254 = vpack.c.bf16 %v5246, %v5245
      %v5255 = vld [vmem:[%s11] sm:$0xf]
      %v5256 = vld [vmem:[%s11 + $0x4] sm:$0xf]
      %v5257 = vld [vmem:[%s11 + $0x8] sm:$0xf]
      %v5258 = vld [vmem:[%s11 + $0xc] sm:$0xf]
      %v5259 = vld [vmem:[%s11 + $0x10] sm:$0xf]
      %v5260 = vld [vmem:[%s11 + $0x14] sm:$0xf]
      %v5261 = vld [vmem:[%s11 + $0x18] sm:$0xf]
      %v5262 = vld [vmem:[%s11 + $0x1c] sm:$0xf]
      %v5263 = vld [vmem:[%s11 + $0x20] sm:$0xf]
      %v5264 = vld [vmem:[%s11 + $0x24] sm:$0xf]
      %v5265 = vld [vmem:[%s11 + $0x28] sm:$0xf]
      %v5266 = vld [vmem:[%s11 + $0x2c] sm:$0xf]
      %v5267 = vld [vmem:[%s11 + $0x30] sm:$0xf]
      %v5268 = vld [vmem:[%s11 + $0x34] sm:$0xf]
      %v5269 = vld [vmem:[%s11 + $0x38] sm:$0xf]
      %v5270 = vld [vmem:[%s11 + $0x3c] sm:$0xf]
      %v5271 = vld [vmem:[%s12] sm:$0x1]
      %v5273 = vlaneseq
      %v5274 = vshrl.u32 %v5273, 7
      %v5275 = vsub.s32 0, %v5274
      %v5276 = vrot.slane %v5271, %v5275
      %v5294 = vunpack.c.l.b16 %v5255
      %v5295 = vunpack.c.l.b16 %v5256
      %v5296 = vunpack.c.l.b16 %v5257
      %v5297 = vunpack.c.l.b16 %v5258
      %v5298 = vunpack.c.l.b16 %v5259
      %v5299 = vunpack.c.l.b16 %v5260
      %v5300 = vunpack.c.l.b16 %v5261
      %v5301 = vunpack.c.l.b16 %v5262
      %v5302 = vunpack.c.l.b16 %v5263
      %v5303 = vunpack.c.l.b16 %v5264
      %v5304 = vunpack.c.l.b16 %v5265
      %v5305 = vunpack.c.l.b16 %v5266
      %v5306 = vunpack.c.l.b16 %v5267
      %v5307 = vunpack.c.l.b16 %v5268
      %v5308 = vunpack.c.l.b16 %v5269
      %v5309 = vunpack.c.l.b16 %v5270
      %v5310 = vpack.c.b16 %v5295, %v5294
      %v5311 = vpack.c.b16 %v5297, %v5296
      %v5312 = vpack.c.b16 %v5299, %v5298
      %v5313 = vpack.c.b16 %v5301, %v5300
      %v5314 = vpack.c.b16 %v5303, %v5302
      %v5315 = vpack.c.b16 %v5305, %v5304
      %v5316 = vpack.c.b16 %v5307, %v5306
      %v5317 = vpack.c.b16 %v5309, %v5308
      %5326 = vmatprep.subr.bf16.mxu0 0
      %5327 = vmatpush1.bf16.msra.mxu0 %v5310
      %5328 = vmatprep.subr.bf16.mxu0 0
      %5329 = vmatpush1.bf16.msra.mxu0 %v5311
      %5330 = vmatprep.subr.bf16.mxu0 0
      %5331 = vmatpush1.bf16.msra.mxu0 %v5312
      %5332 = vmatprep.subr.bf16.mxu0 0
      %5333 = vmatpush1.bf16.msra.mxu0 %v5313
      %5334 = vmatprep.subr.bf16.mxu0 0
      %5335 = vmatpush1.bf16.msra.mxu0 %v5314
      %5336 = vmatprep.subr.bf16.mxu0 0
      %5337 = vmatpush1.bf16.msra.mxu0 %v5315
      %5338 = vmatprep.subr.bf16.mxu0 0
      %5339 = vmatpush1.bf16.msra.mxu0 %v5316
      %5340 = vmatprep.subr.bf16.mxu0 0
      %5341 = vmatpush1.bf16.msra.mxu0 %v5317
      %5342 = vmatprep.subr.bf16.mxu0 0
      %5343 = vmatpush1.bf16.msra.mxu0 0
      %5344 = vmatprep.subr.bf16.mxu0 0
      %5345 = vmatpush1.bf16.msra.mxu0 0
      %5346 = vmatprep.subr.bf16.mxu0 0
      %5347 = vmatpush1.bf16.msra.mxu0 0
      %5348 = vmatprep.subr.bf16.mxu0 0
      %5349 = vmatpush1.bf16.msra.mxu0 0
      %5350 = vmatprep.subr.bf16.mxu0 0
      %5351 = vmatpush1.bf16.msra.mxu0 0
      %5352 = vmatprep.subr.bf16.mxu0 0
      %5353 = vmatpush1.bf16.msra.mxu0 0
      %5354 = vmatprep.subr.bf16.mxu0 0
      %5355 = vmatpush1.bf16.msra.mxu0 0
      %5356 = vmatprep.subr.bf16.mxu0 0
      %5357 = vmatpush1.bf16.msra.mxu0 0
      %5358 = vmatprep.mubr.bf16.mxu0 0
      %5359 = vmatmul.mubr.bf16.gmra.mrb[0].mxu0 %v5247
      %v5360 = vpop.f32.mrb[0].mxu0
      %v5361 = vadd.f32 %v5276, %v5360
      %v5362 = vpop.f32.mrb[0].mxu0
      %v5363 = vpop.f32.mrb[0].mxu0
      %v5364 = vadd.f32 %v5276, %v5363
      %v5365 = vpop.f32.mrb[0].mxu0
      %5366 = vmatprep.mubr.bf16.mxu0 0
      %5367 = vmatmul.mubr.bf16.gmra.mrb[0].mxu0 %v5248
      %v5368 = vpop.f32.mrb[0].mxu0
      %v5369 = vadd.f32 %v5276, %v5368
      %v5370 = vpop.f32.mrb[0].mxu0
      %v5371 = vpop.f32.mrb[0].mxu0
      %v5372 = vadd.f32 %v5276, %v5371
      %v5373 = vpop.f32.mrb[0].mxu0
      %5374 = vmatprep.mubr.bf16.mxu0 0
      %5375 = vmatmul.mubr.bf16.gmra.mrb[0].mxu0 %v5249
      %v5376 = vpop.f32.mrb[0].mxu0
      %v5377 = vadd.f32 %v5276, %v5376
      %v5378 = vpop.f32.mrb[0].mxu0
      %v5379 = vpop.f32.mrb[0].mxu0
      %v5380 = vadd.f32 %v5276, %v5379
      %v5381 = vpop.f32.mrb[0].mxu0
      %5382 = vmatprep.mubr.bf16.mxu0 0
      %5383 = vmatmul.mubr.bf16.gmra.mrb[0].mxu0 %v5250
      %v5384 = vpop.f32.mrb[0].mxu0
      %v5385 = vadd.f32 %v5276, %v5384
      %v5386 = vpop.f32.mrb[0].mxu0
      %v5387 = vpop.f32.mrb[0].mxu0
      %v5388 = vadd.f32 %v5276, %v5387
      %v5389 = vpop.f32.mrb[0].mxu0
      %5390 = vmatprep.mubr.bf16.mxu0 0
      %5391 = vmatmul.mubr.bf16.gmra.mrb[0].mxu0 %v5251
      %v5392 = vpop.f32.mrb[0].mxu0
      %v5393 = vadd.f32 %v5276, %v5392
      %v5394 = vpop.f32.mrb[0].mxu0
      %v5395 = vpop.f32.mrb[0].mxu0
      %v5396 = vadd.f32 %v5276, %v5395
      %v5397 = vpop.f32.mrb[0].mxu0
      %5398 = vmatprep.mubr.bf16.mxu0 0
      %5399 = vmatmul.mubr.bf16.gmra.mrb[0].mxu0 %v5252
      %v5400 = vpop.f32.mrb[0].mxu0
      %v5401 = vadd.f32 %v5276, %v5400
      %v5402 = vpop.f32.mrb[0].mxu0
      %v5403 = vpop.f32.mrb[0].mxu0
      %v5404 = vadd.f32 %v5276, %v5403
      %v5405 = vpop.f32.mrb[0].mxu0
      %5406 = vmatprep.mubr.bf16.mxu0 0
      %5407 = vmatmul.mubr.bf16.gmra.mrb[0].mxu0 %v5253
      %v5408 = vpop.f32.mrb[0].mxu0
      %v5409 = vadd.f32 %v5276, %v5408
      %v5410 = vpop.f32.mrb[0].mxu0
      %v5411 = vpop.f32.mrb[0].mxu0
      %v5412 = vadd.f32 %v5276, %v5411
      %v5413 = vpop.f32.mrb[0].mxu0
      %5414 = vmatprep.mubr.bf16.mxu0 0
      %5415 = vmatmul.mubr.bf16.gmra.mrb[0].mxu0 %v5254
      %v5416 = vpop.f32.mrb[0].mxu0
      %v5417 = vadd.f32 %v5276, %v5416
      %v5418 = vpop.f32.mrb[0].mxu0
      %v5419 = vpop.f32.mrb[0].mxu0
      %v5420 = vadd.f32 %v5276, %v5419
      %v5421 = vpop.f32.mrb[0].mxu0
      %5422 = vdwg.mxu0
      %5423 = vst [vmem:[%s442] sm:$0xff] %v5361
      %5424 = vst [vmem:[%s442 + $0x8] sm:$0xff] %v5364
      %5425 = vst [vmem:[%s442 + $0x10] sm:$0xff] %v5369
      %5426 = vst [vmem:[%s442 + $0x18] sm:$0xff] %v5372
      %5427 = vst [vmem:[%s442 + $0x20] sm:$0xff] %v5377
      %5428 = vst [vmem:[%s442 + $0x28] sm:$0xff] %v5380
      %5429 = vst [vmem:[%s442 + $0x30] sm:$0xff] %v5385
      %5430 = vst [vmem:[%s442 + $0x38] sm:$0xff] %v5388
      %5431 = vst [vmem:[%s442 + $0x40] sm:$0xff] %v5393
      %5432 = vst [vmem:[%s442 + $0x48] sm:$0xff] %v5396
      %5433 = vst [vmem:[%s442 + $0x50] sm:$0xff] %v5401
      %5434 = vst [vmem:[%s442 + $0x58] sm:$0xff] %v5404
      %5435 = vst [vmem:[%s442 + $0x60] sm:$0xff] %v5409
      %5436 = vst [vmem:[%s442 + $0x68] sm:$0xff] %v5412
      %5437 = vst [vmem:[%s442 + $0x70] sm:$0xff] %v5417
      %5438 = vst [vmem:[%s442 + $0x78] sm:$0xff] %v5420
      %s5439 = smul.u32 16, %s24
      %p5440 = scmp.lt.s32.totalorder %s5439, 31
      %s5441 = scalar_select %p5440, %s5439, 31
      %s5442 = smul.addr %s5441, 8
      %s5443 = scalar_lea.vmem %s13, %s5442
      // Predicated region
      $region73: #{ffnn_forward.1} parent=71 // pred_check
        %p5444 = pneg %p320
      $region74: #{ffnn_forward.1} parent=71 // pred_check_branch
        %5446 = sbr.rel (%p5444) target = $region76
      $region75: #{ffnn_forward.1} parent=71 // pred_region
        %s5447 = smul.u32 16, %s24
      $region76: #{ffnn_forward.1} parent=71 // pred_fallthru
        _
    $region72: #{ffnn_forward.1} parent=5 // pred_fallthru
      _
    %p5448 = scmp.le.s32.totalorder 2, %s19
    // Predicated region
    $region77: #{ffnn_forward.1} parent=5 // pred_check
      %p5449 = pneg %p5448
    $region78: #{ffnn_forward.1} parent=5 // pred_check_branch
      %5451 = sbr.rel (%p5449) target = $region80
    $region79: #{ffnn_forward.1} parent=5 // pred_region
      %s5452 = ssub.s32 %s19, 2
      // Predicated region
      $region81: #{ffnn_forward.1} parent=79 // pred_check
        %p5453 = pneg %p326
      $region82: #{ffnn_forward.1} parent=79 // pred_check_branch
        %5455 = sbr.rel (%p5453) target = $region84
      $region83: #{ffnn_forward.1} parent=79 // pred_region
        %s5456 = smul.u32 16, %s25
        %p5457 = scmp.lt.s32.totalorder %s5456, 31
        %s5458 = scalar_select %p5457, %s5456, 31
        %s5459 = smul.addr %s5458, 8
        %s5460 = scalar_lea.vmem %s13, %s5459
      $region84: #{ffnn_forward.1} parent=79 // pred_fallthru
        _
    $region80: #{ffnn_forward.1} parent=5 // pred_fallthru
      _
  $region6: #{ffnn_forward.1} parent=0 // loop_footer
    %s23 = sadd.s32 1, %s19
  $region7: #{ffnn_forward.1} parent=0 // loop_footer_branch
    %18 = sbr.rel target = $region3
  $region8: #{ffnn_forward.1} parent=0 // loop_exit
    _

</llo_original>
